<compile_context>
chip_gen: v7x
topology: tpu7x:2x2x1
jax: 0.10.0
libtpu: 0.0.40
codegen_flags: <defaults>
</compile_context>

<pallas_src>
import functools
import math

import jax
import jax.numpy as jnp
from jax.experimental import pallas as pl
from jax.experimental.pallas import tpu as pltpu


# ------------------------------ fused kernel ------------------------------

def _pose_block_kernel(x_ref, embw_ref, embmisc_ref, wqkv_ref, wo_ref,
                       w1_ref, w2_ref, vd_ref, vff_ref, o_ref,
                       *, n_layers, n_head, eps):
    """One grid step = one token-position block of S rows through the whole
    encoder (embedding -> n_layers x [block MHA + FFN] -> write block)."""
    n = pl.program_id(0)
    S = x_ref.shape[1]
    D = embw_ref.shape[1]
    Dh = D // n_head
    scale = 1.0 / math.sqrt(Dh)

    def layernorm(a, g, b):
        mu = jnp.mean(a, axis=-1, keepdims=True)
        c = a - mu
        var = jnp.mean(c * c, axis=-1, keepdims=True)
        return c * jax.lax.rsqrt(var + eps) * g + b

    # --- pose embedding for this block; block 0 is the learned pose token ---
    emb = jnp.dot(x_ref[0], embw_ref[...],
                  preferred_element_type=jnp.float32) + embmisc_ref[0:1, :]
    tok = jnp.broadcast_to(embmisc_ref[1:2, :], (S, D))
    flag = (n == 0).astype(jnp.float32)           # scalar splat, no vector mask
    h = tok * flag + emb * (1.0 - flag)

    for li in range(n_layers):
        vd = vd_ref[li]                           # (9, D) biases / LN params
        bq, bk, bv = vd[0:1], vd[1:2], vd[2:3]
        bo, b2 = vd[3:4], vd[4:5]
        g1, be1, g2, be2 = vd[5:6], vd[6:7], vd[7:8], vd[8:9]
        b1 = vff_ref[li]                          # (1, d_ff)

        # --- multi-head self-attention over the S rows of this block ---
        qkv = jnp.dot(h, wqkv_ref[li], preferred_element_type=jnp.float32)
        q = qkv[:, 0:D] + bq
        k = qkv[:, D:2 * D] + bk
        v = qkv[:, 2 * D:3 * D] + bv

        heads = []
        for hh in range(n_head):
            sl = slice(hh * Dh, (hh + 1) * Dh)
            qh, kh, vh = q[:, sl], k[:, sl], v[:, sl]
            s = jax.lax.dot_general(qh, kh, (((1,), (1,)), ((), ())),
                                    preferred_element_type=jnp.float32) * scale
            p = jnp.exp(s - jnp.max(s, axis=-1, keepdims=True))
            p = p / jnp.sum(p, axis=-1, keepdims=True)
            heads.append(jnp.dot(p, vh, preferred_element_type=jnp.float32))
        attn = jnp.concatenate(heads, axis=-1)    # (S, D)

        a = jnp.dot(attn, wo_ref[li], preferred_element_type=jnp.float32) + bo
        h = layernorm(h + a, g1, be1)

        # --- feed-forward (ReLU) ---
        f = jnp.maximum(jnp.dot(h, w1_ref[li],
                                preferred_element_type=jnp.float32) + b1, 0.0)
        f = jnp.dot(f, w2_ref[li], preferred_element_type=jnp.float32) + b2
        h = layernorm(h + f, g2, be2)

    o_ref[0] = h.astype(o_ref.dtype)


# --------------------------- one-time param packing ---------------------------

def pack_params(params):
    """One-time repack (outside jit / per-forward path):
    weights pre-transposed to (in, out); per-layer tensors stacked on a
    leading layer axis; all D-wide vectors in one (L, 9, D) slab."""
    D = params["emb_w"].shape[0]
    L = params["layers"]
    return {
        "emb_w_t": params["emb_w"].T,                                        # (P, D)
        "emb_misc": jnp.stack([params["emb_b"],
                               params["pose_token"].reshape(-1)], axis=0),   # (2, D)
        "w_qkv": jnp.stack([p["in_proj_w"].T for p in L], axis=0),           # (L, D, 3D)
        "w_o":   jnp.stack([p["out_proj_w"].T for p in L], axis=0),          # (L, D, D)
        "w_ff1": jnp.stack([p["lin1_w"].T for p in L], axis=0),              # (L, D, F)
        "w_ff2": jnp.stack([p["lin2_w"].T for p in L], axis=0),              # (L, F, D)
        "vec_d": jnp.stack([jnp.stack([p["in_proj_b"][0:D],
                                       p["in_proj_b"][D:2 * D],
                                       p["in_proj_b"][2 * D:3 * D],
                                       p["out_proj_b"], p["lin2_b"],
                                       p["ln1_g"], p["ln1_b"],
                                       p["ln2_g"], p["ln2_b"]], axis=0)
                            for p in L], axis=0),                            # (L, 9, D)
        "vec_ff": jnp.stack([p["lin1_b"].reshape(1, -1) for p in L], axis=0),  # (L, 1, F)
    }


# ------------------------------ JAX wrapper ------------------------------

def pose_encoder_forward(x, packed, n_head):
    """x: (B, N, pose_dim) -> (B, 1, d_model). One pallas_call, grid over the
    N+1 token positions (the blocks of the block-diagonal attention)."""
    B, N, P = x.shape
    D = packed["emb_w_t"].shape[1]
    n_layers = packed["w_qkv"].shape[0]
    S = B                                     # attention length (batch_first=False)

    # (token_position, original_batch, pose_dim); block 0 is a placeholder
    # that the kernel replaces with the pose token.
    xt = jnp.transpose(x, (1, 0, 2))
    xp = jnp.concatenate([jnp.zeros((1, S, P), x.dtype), xt], axis=0)       # (N+1,S,P)

    inputs = [xp, packed["emb_w_t"], packed["emb_misc"], packed["w_qkv"],
              packed["w_o"], packed["w_ff1"], packed["w_ff2"],
              packed["vec_d"], packed["vec_ff"]]

    def resident(a):  # loaded once; block index constant across the grid
        return pl.BlockSpec(a.shape, lambda n, nd=a.ndim: (0,) * nd)

    out = pl.pallas_call(
        functools.partial(_pose_block_kernel, n_layers=n_layers,
                          n_head=n_head, eps=1e-5),
        out_shape=jax.ShapeDtypeStruct((N + 1, S, D), jnp.float32),
        grid=(N + 1,),
        in_specs=[pl.BlockSpec((1, S, P), lambda n: (n, 0, 0))] +
                 [resident(a) for a in inputs[1:]],
        out_specs=pl.BlockSpec((1, S, D), lambda n: (n, 0, 0)),
        compiler_params=pltpu.CompilerParams(
            dimension_semantics=("parallel",)),
    )(*inputs)
    # encoder(x)[:, :1] == token-position block 0 across the original batch
    return out[0].reshape(B, 1, D)


# --------------------------- deterministic params ---------------------------

def init_params(key, pose_dim, d_model, n_head, n_layers, d_ff):
    assert d_model % n_head == 0
    keys = jax.random.split(key, 2 + n_layers)
    s = 0.02
    params = {
        "emb_w": s * jax.random.normal(keys[0], (d_model, pose_dim), jnp.float32),
        "emb_b": jnp.zeros((d_model,), jnp.float32),
        "pose_token": jax.random.normal(keys[1], (1, 1, d_model), jnp.float32),
        "layers": [],
    }
    for i in range(n_layers):
        lk = jax.random.split(keys[2 + i], 4)
        params["layers"].append(dict(
            in_proj_w=s * jax.random.normal(lk[0], (3 * d_model, d_model), jnp.float32),
            in_proj_b=jnp.zeros((3 * d_model,), jnp.float32),
            out_proj_w=s * jax.random.normal(lk[1], (d_model, d_model), jnp.float32),
            out_proj_b=jnp.zeros((d_model,), jnp.float32),
            lin1_w=s * jax.random.normal(lk[2], (d_ff, d_model), jnp.float32),
            lin1_b=jnp.zeros((d_ff,), jnp.float32),
            lin2_w=s * jax.random.normal(lk[3], (d_model, d_ff), jnp.float32),
            lin2_b=jnp.zeros((d_model,), jnp.float32),
            ln1_g=jnp.ones((d_model,), jnp.float32),
            ln1_b=jnp.zeros((d_model,), jnp.float32),
            ln2_g=jnp.ones((d_model,), jnp.float32),
            ln2_b=jnp.zeros((d_model,), jnp.float32),
        ))
    return params


# ------------------------------ pure-JAX ref ------------------------------

def ref_forward(x, params, n_head):
    def lin(a, w, b): return a @ w.T + b

    def ln(a, g, b, eps=1e-5):
        mu = a.mean(-1, keepdims=True)
        var = ((a - mu) ** 2).mean(-1, keepdims=True)
        return (a - mu) / jnp.sqrt(var + eps) * g + b

    B, N, _ = x.shape
    D = params["emb_w"].shape[0]
    Dh = D // n_head
    h = lin(x, params["emb_w"], params["emb_b"])
    tok = jnp.broadcast_to(params["pose_token"], (B, 1, D))
    h = jnp.concatenate([tok, h], axis=1)
    h = jnp.transpose(h, (1, 0, 2))
    Nb, S, _ = h.shape
    for p in params["layers"]:
        qkv = lin(h, p["in_proj_w"], p["in_proj_b"]).reshape(Nb, S, 3, n_head, Dh)
        q = jnp.transpose(qkv[:, :, 0], (0, 2, 1, 3))
        k = jnp.transpose(qkv[:, :, 1], (0, 2, 1, 3))
        v = jnp.transpose(qkv[:, :, 2], (0, 2, 1, 3))
        sc = jnp.einsum("nhqd,nhkd->nhqk", q, k) / math.sqrt(Dh)
        a = jax.nn.softmax(sc, axis=-1)
        o = jnp.einsum("nhqk,nhkd->nhqd", a, v)
        o = jnp.transpose(o, (0, 2, 1, 3)).reshape(Nb, S, D)
        o = lin(o, p["out_proj_w"], p["out_proj_b"])
        h = ln(h + o, p["ln1_g"], p["ln1_b"])
        f = lin(jax.nn.relu(lin(h, p["lin1_w"], p["lin1_b"])), p["lin2_w"], p["lin2_b"])
        h = ln(h + f, p["ln2_g"], p["ln2_b"])
    return jnp.transpose(h[:1], (1, 0, 2))


# ----------------------------------- main -----------------------------------

if __name__ == "__main__":
    # small shapes consistent with the module's forward (pose_dim, d_model scaled down)
    pose_dim, d_model, n_head, n_layers, d_ff = 12, 32, 4, 2, 64
    B, N = 2, 7

    key = jax.random.PRNGKey(0)
    kp, kx = jax.random.split(key)
    params = init_params(kp, pose_dim, d_model, n_head, n_layers, d_ff)
    x = jax.random.normal(kx, (B, N, pose_dim), jnp.float32)

    packed = jax.tree_util.tree_map(lambda a: a, pack_params(params))  # one-time

    fwd = jax.jit(functools.partial(pose_encoder_forward, n_head=n_head))
    out = jax.block_until_ready(fwd(x, packed))
    assert out.shape == (B, 1, d_model), out.shape

    ref = jax.block_until_ready(ref_forward(x, params, n_head))
    err = float(jnp.max(jnp.abs(out - ref)))
    assert jnp.allclose(out, ref, atol=5e-3, rtol=5e-3), err

    print("KERNEL_OK")
</pallas_src>

<mosaic_0001>
module attributes {stable_mosaic.version = 11 : i64} {
  func.func @_pose_block_kernel(%arg0: i32, %arg1: memref<1x2x12xf32, #tpu.memory_space<vmem>>, %arg2: memref<12x32xf32, #tpu.memory_space<vmem>>, %arg3: memref<2x32xf32, #tpu.memory_space<vmem>>, %arg4: memref<2x32x96xf32, #tpu.memory_space<vmem>>, %arg5: memref<2x32x32xf32, #tpu.memory_space<vmem>>, %arg6: memref<2x32x64xf32, #tpu.memory_space<vmem>>, %arg7: memref<2x64x32xf32, #tpu.memory_space<vmem>>, %arg8: memref<2x9x32xf32, #tpu.memory_space<vmem>>, %arg9: memref<2x1x64xf32, #tpu.memory_space<vmem>>, %arg10: memref<1x2x32xf32, #tpu.memory_space<vmem>>) attributes {dimension_semantics = [#tpu.dimension_semantics<parallel>], iteration_bounds = array<i64: 8>, scalar_prefetch = 0 : i64, scratch_operands = 0 : i64, tpu.core_type = #tpu.core_type<tc>, window_params = [{transform_indices = @transform_0, window_bounds = array<i64: 1, 2, 12>}, {pipeline_mode = #tpu.pipeline_mode<synchronous>, transform_indices = @transform_1, window_bounds = array<i64: 12, 32>}, {pipeline_mode = #tpu.pipeline_mode<synchronous>, transform_indices = @transform_2, window_bounds = array<i64: 2, 32>}, {pipeline_mode = #tpu.pipeline_mode<synchronous>, transform_indices = @transform_3, window_bounds = array<i64: 2, 32, 96>}, {pipeline_mode = #tpu.pipeline_mode<synchronous>, transform_indices = @transform_4, window_bounds = array<i64: 2, 32, 32>}, {pipeline_mode = #tpu.pipeline_mode<synchronous>, transform_indices = @transform_5, window_bounds = array<i64: 2, 32, 64>}, {pipeline_mode = #tpu.pipeline_mode<synchronous>, transform_indices = @transform_6, window_bounds = array<i64: 2, 64, 32>}, {pipeline_mode = #tpu.pipeline_mode<synchronous>, transform_indices = @transform_7, window_bounds = array<i64: 2, 9, 32>}, {pipeline_mode = #tpu.pipeline_mode<synchronous>, transform_indices = @transform_8, window_bounds = array<i64: 2, 1, 64>}, {transform_indices = @transform_9, window_bounds = array<i64: 1, 2, 32>}]} {
    %c0 = arith.constant 0 : index
    %c0_0 = arith.constant 0 : index
    %c0_1 = arith.constant 0 : index
    %0 = vector.load %arg1[%c0, %c0_0, %c0_1] : memref<1x2x12xf32, #tpu.memory_space<vmem>>, vector<1x2x12xf32>
    %1 = vector.shape_cast %0 : vector<1x2x12xf32> to vector<2x12xf32>
    %c0_2 = arith.constant 0 : index
    %c0_3 = arith.constant 0 : index
    %2 = vector.load %arg2[%c0_2, %c0_3] : memref<12x32xf32, #tpu.memory_space<vmem>>, vector<12x32xf32>
    %cst = arith.constant dense<0.000000e+00> : vector<2x32xf32>
    %3 = tpu.matmul %1, %2, %cst {dimension_numbers = #tpu.dot_dimension_numbers<[1], [0], [0], [1], [0, 0, 1, 1], [], []>} : vector<2x12xf32>, vector<12x32xf32>, vector<2x32xf32> -> vector<2x32xf32>
    %c0_4 = arith.constant 0 : index
    %c0_5 = arith.constant 0 : index
    %4 = vector.load %arg3[%c0_4, %c0_5] : memref<2x32xf32, #tpu.memory_space<vmem>>, vector<1x32xf32>
    %5 = vector.broadcast %4 : vector<1x32xf32> to vector<2x32xf32>
    %6 = arith.addf %3, %5 : vector<2x32xf32>
    %c1 = arith.constant 1 : index
    %c0_6 = arith.constant 0 : index
    %7 = vector.load %arg3[%c1, %c0_6] : memref<2x32xf32, #tpu.memory_space<vmem>>, vector<1x32xf32>
    %8 = vector.shape_cast %7 : vector<1x32xf32> to vector<1x32xf32>
    %9 = vector.broadcast %8 : vector<1x32xf32> to vector<2x32xf32>
    %c0_i32 = arith.constant 0 : i32
    %10 = arith.cmpi eq, %arg0, %c0_i32 : i32
    %11 = arith.extui %10 : i1 to i32
    %12 = arith.sitofp %11 : i32 to f32
    %13 = vector.broadcast %12 : f32 to vector<2x32xf32>
    %14 = arith.mulf %9, %13 : vector<2x32xf32>
    %cst_7 = arith.constant 1.000000e+00 : f32
    %15 = arith.subf %cst_7, %12 : f32
    %16 = vector.broadcast %15 : f32 to vector<2x32xf32>
    %17 = arith.mulf %6, %16 : vector<2x32xf32>
    %18 = arith.addf %14, %17 : vector<2x32xf32>
    %c0_8 = arith.constant 0 : index
    %c0_9 = arith.constant 0 : index
    %c0_10 = arith.constant 0 : index
    %19 = vector.load %arg8[%c0_8, %c0_9, %c0_10] : memref<2x9x32xf32, #tpu.memory_space<vmem>>, vector<1x9x32xf32>
    %20 = vector.shape_cast %19 : vector<1x9x32xf32> to vector<9x32xf32>
    %21 = vector.extract_strided_slice %20 {offsets = [0, 0], sizes = [1, 32], strides = [1, 1]} : vector<9x32xf32> to vector<1x32xf32>
    %22 = vector.extract_strided_slice %20 {offsets = [1, 0], sizes = [1, 32], strides = [1, 1]} : vector<9x32xf32> to vector<1x32xf32>
    %23 = vector.extract_strided_slice %20 {offsets = [2, 0], sizes = [1, 32], strides = [1, 1]} : vector<9x32xf32> to vector<1x32xf32>
    %24 = vector.extract_strided_slice %20 {offsets = [3, 0], sizes = [1, 32], strides = [1, 1]} : vector<9x32xf32> to vector<1x32xf32>
    %25 = vector.extract_strided_slice %20 {offsets = [4, 0], sizes = [1, 32], strides = [1, 1]} : vector<9x32xf32> to vector<1x32xf32>
    %26 = vector.extract_strided_slice %20 {offsets = [5, 0], sizes = [1, 32], strides = [1, 1]} : vector<9x32xf32> to vector<1x32xf32>
    %27 = vector.extract_strided_slice %20 {offsets = [6, 0], sizes = [1, 32], strides = [1, 1]} : vector<9x32xf32> to vector<1x32xf32>
    %28 = vector.extract_strided_slice %20 {offsets = [7, 0], sizes = [1, 32], strides = [1, 1]} : vector<9x32xf32> to vector<1x32xf32>
    %29 = vector.extract_strided_slice %20 {offsets = [8, 0], sizes = [1, 32], strides = [1, 1]} : vector<9x32xf32> to vector<1x32xf32>
    %c0_11 = arith.constant 0 : index
    %c0_12 = arith.constant 0 : index
    %c0_13 = arith.constant 0 : index
    %30 = vector.load %arg9[%c0_11, %c0_12, %c0_13] : memref<2x1x64xf32, #tpu.memory_space<vmem>>, vector<1x1x64xf32>
    %31 = vector.shape_cast %30 : vector<1x1x64xf32> to vector<1x64xf32>
    %c0_14 = arith.constant 0 : index
    %c0_15 = arith.constant 0 : index
    %c0_16 = arith.constant 0 : index
    %32 = vector.load %arg4[%c0_14, %c0_15, %c0_16] : memref<2x32x96xf32, #tpu.memory_space<vmem>>, vector<1x32x96xf32>
    %33 = vector.shape_cast %32 : vector<1x32x96xf32> to vector<32x96xf32>
    %cst_17 = arith.constant dense<0.000000e+00> : vector<2x96xf32>
    %34 = tpu.matmul %18, %33, %cst_17 {dimension_numbers = #tpu.dot_dimension_numbers<[1], [0], [0], [1], [0, 0, 1, 1], [], []>} : vector<2x32xf32>, vector<32x96xf32>, vector<2x96xf32> -> vector<2x96xf32>
    %35 = vector.extract_strided_slice %34 {offsets = [0, 0], sizes = [2, 32], strides = [1, 1]} : vector<2x96xf32> to vector<2x32xf32>
    %36 = vector.broadcast %21 : vector<1x32xf32> to vector<2x32xf32>
    %37 = arith.addf %35, %36 : vector<2x32xf32>
    %38 = vector.extract_strided_slice %34 {offsets = [0, 32], sizes = [2, 32], strides = [1, 1]} : vector<2x96xf32> to vector<2x32xf32>
    %39 = vector.broadcast %22 : vector<1x32xf32> to vector<2x32xf32>
    %40 = arith.addf %38, %39 : vector<2x32xf32>
    %41 = vector.extract_strided_slice %34 {offsets = [0, 64], sizes = [2, 32], strides = [1, 1]} : vector<2x96xf32> to vector<2x32xf32>
    %42 = vector.broadcast %23 : vector<1x32xf32> to vector<2x32xf32>
    %43 = arith.addf %41, %42 : vector<2x32xf32>
    %44 = vector.extract_strided_slice %37 {offsets = [0, 0], sizes = [2, 8], strides = [1, 1]} : vector<2x32xf32> to vector<2x8xf32>
    %45 = vector.extract_strided_slice %40 {offsets = [0, 0], sizes = [2, 8], strides = [1, 1]} : vector<2x32xf32> to vector<2x8xf32>
    %46 = vector.extract_strided_slice %43 {offsets = [0, 0], sizes = [2, 8], strides = [1, 1]} : vector<2x32xf32> to vector<2x8xf32>
    %cst_18 = arith.constant dense<0.000000e+00> : vector<2x2xf32>
    %47 = tpu.matmul %44, %45, %cst_18 {dimension_numbers = #tpu.dot_dimension_numbers<[1], [1], [0], [0], [0, 0, 1, 0], [], []>} : vector<2x8xf32>, vector<2x8xf32>, vector<2x2xf32> -> vector<2x2xf32>
    %cst_19 = arith.constant 0.353553385 : f32
    %48 = vector.broadcast %cst_19 : f32 to vector<2x2xf32>
    %49 = arith.mulf %47, %48 : vector<2x2xf32>
    %cst_20 = arith.constant dense<0xFF800000> : vector<2xf32>
    %50 = vector.multi_reduction <maximumf>, %49, %cst_20 [1] : vector<2x2xf32> to vector<2xf32>
    %51 = vector.shape_cast %50 : vector<2xf32> to vector<2x1xf32>
    %52 = vector.broadcast %51 : vector<2x1xf32> to vector<2x2xf32>
    %53 = arith.subf %49, %52 : vector<2x2xf32>
    %54 = math.exp %53 : vector<2x2xf32>
    %cst_21 = arith.constant dense<0.000000e+00> : vector<2xf32>
    %55 = vector.multi_reduction <add>, %54, %cst_21 [1] : vector<2x2xf32> to vector<2xf32>
    %56 = vector.shape_cast %55 : vector<2xf32> to vector<2x1xf32>
    %57 = vector.broadcast %56 : vector<2x1xf32> to vector<2x2xf32>
    %58 = arith.divf %54, %57 : vector<2x2xf32>
    %cst_22 = arith.constant dense<0.000000e+00> : vector<2x8xf32>
    %59 = tpu.matmul %58, %46, %cst_22 {dimension_numbers = #tpu.dot_dimension_numbers<[1], [0], [0], [1], [0, 0, 1, 1], [], []>} : vector<2x2xf32>, vector<2x8xf32>, vector<2x8xf32> -> vector<2x8xf32>
    %60 = vector.extract_strided_slice %37 {offsets = [0, 8], sizes = [2, 8], strides = [1, 1]} : vector<2x32xf32> to vector<2x8xf32>
    %61 = vector.extract_strided_slice %40 {offsets = [0, 8], sizes = [2, 8], strides = [1, 1]} : vector<2x32xf32> to vector<2x8xf32>
    %62 = vector.extract_strided_slice %43 {offsets = [0, 8], sizes = [2, 8], strides = [1, 1]} : vector<2x32xf32> to vector<2x8xf32>
    %cst_23 = arith.constant dense<0.000000e+00> : vector<2x2xf32>
    %63 = tpu.matmul %60, %61, %cst_23 {dimension_numbers = #tpu.dot_dimension_numbers<[1], [1], [0], [0], [0, 0, 1, 0], [], []>} : vector<2x8xf32>, vector<2x8xf32>, vector<2x2xf32> -> vector<2x2xf32>
    %cst_24 = arith.constant 0.353553385 : f32
    %64 = vector.broadcast %cst_24 : f32 to vector<2x2xf32>
    %65 = arith.mulf %63, %64 : vector<2x2xf32>
    %cst_25 = arith.constant dense<0xFF800000> : vector<2xf32>
    %66 = vector.multi_reduction <maximumf>, %65, %cst_25 [1] : vector<2x2xf32> to vector<2xf32>
    %67 = vector.shape_cast %66 : vector<2xf32> to vector<2x1xf32>
    %68 = vector.broadcast %67 : vector<2x1xf32> to vector<2x2xf32>
    %69 = arith.subf %65, %68 : vector<2x2xf32>
    %70 = math.exp %69 : vector<2x2xf32>
    %cst_26 = arith.constant dense<0.000000e+00> : vector<2xf32>
    %71 = vector.multi_reduction <add>, %70, %cst_26 [1] : vector<2x2xf32> to vector<2xf32>
    %72 = vector.shape_cast %71 : vector<2xf32> to vector<2x1xf32>
    %73 = vector.broadcast %72 : vector<2x1xf32> to vector<2x2xf32>
    %74 = arith.divf %70, %73 : vector<2x2xf32>
    %cst_27 = arith.constant dense<0.000000e+00> : vector<2x8xf32>
    %75 = tpu.matmul %74, %62, %cst_27 {dimension_numbers = #tpu.dot_dimension_numbers<[1], [0], [0], [1], [0, 0, 1, 1], [], []>} : vector<2x2xf32>, vector<2x8xf32>, vector<2x8xf32> -> vector<2x8xf32>
    %76 = vector.extract_strided_slice %37 {offsets = [0, 16], sizes = [2, 8], strides = [1, 1]} : vector<2x32xf32> to vector<2x8xf32>
    %77 = vector.extract_strided_slice %40 {offsets = [0, 16], sizes = [2, 8], strides = [1, 1]} : vector<2x32xf32> to vector<2x8xf32>
    %78 = vector.extract_strided_slice %43 {offsets = [0, 16], sizes = [2, 8], strides = [1, 1]} : vector<2x32xf32> to vector<2x8xf32>
    %cst_28 = arith.constant dense<0.000000e+00> : vector<2x2xf32>
    %79 = tpu.matmul %76, %77, %cst_28 {dimension_numbers = #tpu.dot_dimension_numbers<[1], [1], [0], [0], [0, 0, 1, 0], [], []>} : vector<2x8xf32>, vector<2x8xf32>, vector<2x2xf32> -> vector<2x2xf32>
    %cst_29 = arith.constant 0.353553385 : f32
    %80 = vector.broadcast %cst_29 : f32 to vector<2x2xf32>
    %81 = arith.mulf %79, %80 : vector<2x2xf32>
    %cst_30 = arith.constant dense<0xFF800000> : vector<2xf32>
    %82 = vector.multi_reduction <maximumf>, %81, %cst_30 [1] : vector<2x2xf32> to vector<2xf32>
    %83 = vector.shape_cast %82 : vector<2xf32> to vector<2x1xf32>
    %84 = vector.broadcast %83 : vector<2x1xf32> to vector<2x2xf32>
    %85 = arith.subf %81, %84 : vector<2x2xf32>
    %86 = math.exp %85 : vector<2x2xf32>
    %cst_31 = arith.constant dense<0.000000e+00> : vector<2xf32>
    %87 = vector.multi_reduction <add>, %86, %cst_31 [1] : vector<2x2xf32> to vector<2xf32>
    %88 = vector.shape_cast %87 : vector<2xf32> to vector<2x1xf32>
    %89 = vector.broadcast %88 : vector<2x1xf32> to vector<2x2xf32>
    %90 = arith.divf %86, %89 : vector<2x2xf32>
    %cst_32 = arith.constant dense<0.000000e+00> : vector<2x8xf32>
    %91 = tpu.matmul %90, %78, %cst_32 {dimension_numbers = #tpu.dot_dimension_numbers<[1], [0], [0], [1], [0, 0, 1, 1], [], []>} : vector<2x2xf32>, vector<2x8xf32>, vector<2x8xf32> -> vector<2x8xf32>
    %92 = vector.extract_strided_slice %37 {offsets = [0, 24], sizes = [2, 8], strides = [1, 1]} : vector<2x32xf32> to vector<2x8xf32>
    %93 = vector.extract_strided_slice %40 {offsets = [0, 24], sizes = [2, 8], strides = [1, 1]} : vector<2x32xf32> to vector<2x8xf32>
    %94 = vector.extract_strided_slice %43 {offsets = [0, 24], sizes = [2, 8], strides = [1, 1]} : vector<2x32xf32> to vector<2x8xf32>
    %cst_33 = arith.constant dense<0.000000e+00> : vector<2x2xf32>
    %95 = tpu.matmul %92, %93, %cst_33 {dimension_numbers = #tpu.dot_dimension_numbers<[1], [1], [0], [0], [0, 0, 1, 0], [], []>} : vector<2x8xf32>, vector<2x8xf32>, vector<2x2xf32> -> vector<2x2xf32>
    %cst_34 = arith.constant 0.353553385 : f32
    %96 = vector.broadcast %cst_34 : f32 to vector<2x2xf32>
    %97 = arith.mulf %95, %96 : vector<2x2xf32>
    %cst_35 = arith.constant dense<0xFF800000> : vector<2xf32>
    %98 = vector.multi_reduction <maximumf>, %97, %cst_35 [1] : vector<2x2xf32> to vector<2xf32>
    %99 = vector.shape_cast %98 : vector<2xf32> to vector<2x1xf32>
    %100 = vector.broadcast %99 : vector<2x1xf32> to vector<2x2xf32>
    %101 = arith.subf %97, %100 : vector<2x2xf32>
    %102 = math.exp %101 : vector<2x2xf32>
    %cst_36 = arith.constant dense<0.000000e+00> : vector<2xf32>
    %103 = vector.multi_reduction <add>, %102, %cst_36 [1] : vector<2x2xf32> to vector<2xf32>
    %104 = vector.shape_cast %103 : vector<2xf32> to vector<2x1xf32>
    %105 = vector.broadcast %104 : vector<2x1xf32> to vector<2x2xf32>
    %106 = arith.divf %102, %105 : vector<2x2xf32>
    %cst_37 = arith.constant dense<0.000000e+00> : vector<2x8xf32>
    %107 = tpu.matmul %106, %94, %cst_37 {dimension_numbers = #tpu.dot_dimension_numbers<[1], [0], [0], [1], [0, 0, 1, 1], [], []>} : vector<2x2xf32>, vector<2x8xf32>, vector<2x8xf32> -> vector<2x8xf32>
    %108 = tpu.concatenate %59, %75, %91, %107 in 1 : vector<2x8xf32>, vector<2x8xf32>, vector<2x8xf32>, vector<2x8xf32> -> vector<2x32xf32>
    %c0_38 = arith.constant 0 : index
    %c0_39 = arith.constant 0 : index
    %c0_40 = arith.constant 0 : index
    %109 = vector.load %arg5[%c0_38, %c0_39, %c0_40] : memref<2x32x32xf32, #tpu.memory_space<vmem>>, vector<1x32x32xf32>
    %110 = vector.shape_cast %109 : vector<1x32x32xf32> to vector<32x32xf32>
    %cst_41 = arith.constant dense<0.000000e+00> : vector<2x32xf32>
    %111 = tpu.matmul %108, %110, %cst_41 {dimension_numbers = #tpu.dot_dimension_numbers<[1], [0], [0], [1], [0, 0, 1, 1], [], []>} : vector<2x32xf32>, vector<32x32xf32>, vector<2x32xf32> -> vector<2x32xf32>
    %112 = vector.broadcast %24 : vector<1x32xf32> to vector<2x32xf32>
    %113 = arith.addf %111, %112 : vector<2x32xf32>
    %114 = arith.addf %18, %113 : vector<2x32xf32>
    %cst_42 = arith.constant dense<0.000000e+00> : vector<2xf32>
    %115 = vector.multi_reduction <add>, %114, %cst_42 [1] : vector<2x32xf32> to vector<2xf32>
    %116 = vector.shape_cast %115 : vector<2xf32> to vector<2x1xf32>
    %cst_43 = arith.constant 3.200000e+01 : f32
    %117 = vector.broadcast %cst_43 : f32 to vector<2x1xf32>
    %118 = arith.divf %116, %117 : vector<2x1xf32>
    %119 = vector.broadcast %118 : vector<2x1xf32> to vector<2x32xf32>
    %120 = arith.subf %114, %119 : vector<2x32xf32>
    %121 = arith.mulf %120, %120 : vector<2x32xf32>
    %cst_44 = arith.constant dense<0.000000e+00> : vector<2xf32>
    %122 = vector.multi_reduction <add>, %121, %cst_44 [1] : vector<2x32xf32> to vector<2xf32>
    %123 = vector.shape_cast %122 : vector<2xf32> to vector<2x1xf32>
    %cst_45 = arith.constant 3.200000e+01 : f32
    %124 = vector.broadcast %cst_45 : f32 to vector<2x1xf32>
    %125 = arith.divf %123, %124 : vector<2x1xf32>
    %cst_46 = arith.constant 9.99999974E-6 : f32
    %126 = vector.broadcast %cst_46 : f32 to vector<2x1xf32>
    %127 = arith.addf %125, %126 : vector<2x1xf32>
    %128 = math.rsqrt %127 : vector<2x1xf32>
    %129 = vector.broadcast %128 : vector<2x1xf32> to vector<2x32xf32>
    %130 = arith.mulf %120, %129 : vector<2x32xf32>
    %131 = vector.broadcast %26 : vector<1x32xf32> to vector<2x32xf32>
    %132 = arith.mulf %130, %131 : vector<2x32xf32>
    %133 = vector.broadcast %27 : vector<1x32xf32> to vector<2x32xf32>
    %134 = arith.addf %132, %133 : vector<2x32xf32>
    %c0_47 = arith.constant 0 : index
    %c0_48 = arith.constant 0 : index
    %c0_49 = arith.constant 0 : index
    %135 = vector.load %arg6[%c0_47, %c0_48, %c0_49] : memref<2x32x64xf32, #tpu.memory_space<vmem>>, vector<1x32x64xf32>
    %136 = vector.shape_cast %135 : vector<1x32x64xf32> to vector<32x64xf32>
    %cst_50 = arith.constant dense<0.000000e+00> : vector<2x64xf32>
    %137 = tpu.matmul %134, %136, %cst_50 {dimension_numbers = #tpu.dot_dimension_numbers<[1], [0], [0], [1], [0, 0, 1, 1], [], []>} : vector<2x32xf32>, vector<32x64xf32>, vector<2x64xf32> -> vector<2x64xf32>
    %138 = vector.broadcast %31 : vector<1x64xf32> to vector<2x64xf32>
    %139 = arith.addf %137, %138 : vector<2x64xf32>
    %cst_51 = arith.constant 0.000000e+00 : f32
    %140 = vector.broadcast %cst_51 : f32 to vector<2x64xf32>
    %141 = arith.maximumf %139, %140 : vector<2x64xf32>
    %c0_52 = arith.constant 0 : index
    %c0_53 = arith.constant 0 : index
    %c0_54 = arith.constant 0 : index
    %142 = vector.load %arg7[%c0_52, %c0_53, %c0_54] : memref<2x64x32xf32, #tpu.memory_space<vmem>>, vector<1x64x32xf32>
    %143 = vector.shape_cast %142 : vector<1x64x32xf32> to vector<64x32xf32>
    %cst_55 = arith.constant dense<0.000000e+00> : vector<2x32xf32>
    %144 = tpu.matmul %141, %143, %cst_55 {dimension_numbers = #tpu.dot_dimension_numbers<[1], [0], [0], [1], [0, 0, 1, 1], [], []>} : vector<2x64xf32>, vector<64x32xf32>, vector<2x32xf32> -> vector<2x32xf32>
    %145 = vector.broadcast %25 : vector<1x32xf32> to vector<2x32xf32>
    %146 = arith.addf %144, %145 : vector<2x32xf32>
    %147 = arith.addf %134, %146 : vector<2x32xf32>
    %cst_56 = arith.constant dense<0.000000e+00> : vector<2xf32>
    %148 = vector.multi_reduction <add>, %147, %cst_56 [1] : vector<2x32xf32> to vector<2xf32>
    %149 = vector.shape_cast %148 : vector<2xf32> to vector<2x1xf32>
    %cst_57 = arith.constant 3.200000e+01 : f32
    %150 = vector.broadcast %cst_57 : f32 to vector<2x1xf32>
    %151 = arith.divf %149, %150 : vector<2x1xf32>
    %152 = vector.broadcast %151 : vector<2x1xf32> to vector<2x32xf32>
    %153 = arith.subf %147, %152 : vector<2x32xf32>
    %154 = arith.mulf %153, %153 : vector<2x32xf32>
    %cst_58 = arith.constant dense<0.000000e+00> : vector<2xf32>
    %155 = vector.multi_reduction <add>, %154, %cst_58 [1] : vector<2x32xf32> to vector<2xf32>
    %156 = vector.shape_cast %155 : vector<2xf32> to vector<2x1xf32>
    %cst_59 = arith.constant 3.200000e+01 : f32
    %157 = vector.broadcast %cst_59 : f32 to vector<2x1xf32>
    %158 = arith.divf %156, %157 : vector<2x1xf32>
    %cst_60 = arith.constant 9.99999974E-6 : f32
    %159 = vector.broadcast %cst_60 : f32 to vector<2x1xf32>
    %160 = arith.addf %158, %159 : vector<2x1xf32>
    %161 = math.rsqrt %160 : vector<2x1xf32>
    %162 = vector.broadcast %161 : vector<2x1xf32> to vector<2x32xf32>
    %163 = arith.mulf %153, %162 : vector<2x32xf32>
    %164 = vector.broadcast %28 : vector<1x32xf32> to vector<2x32xf32>
    %165 = arith.mulf %163, %164 : vector<2x32xf32>
    %166 = vector.broadcast %29 : vector<1x32xf32> to vector<2x32xf32>
    %167 = arith.addf %165, %166 : vector<2x32xf32>
    %c1_61 = arith.constant 1 : index
    %c0_62 = arith.constant 0 : index
    %c0_63 = arith.constant 0 : index
    %168 = vector.load %arg8[%c1_61, %c0_62, %c0_63] : memref<2x9x32xf32, #tpu.memory_space<vmem>>, vector<1x9x32xf32>
    %169 = vector.shape_cast %168 : vector<1x9x32xf32> to vector<9x32xf32>
    %170 = vector.extract_strided_slice %169 {offsets = [0, 0], sizes = [1, 32], strides = [1, 1]} : vector<9x32xf32> to vector<1x32xf32>
    %171 = vector.extract_strided_slice %169 {offsets = [1, 0], sizes = [1, 32], strides = [1, 1]} : vector<9x32xf32> to vector<1x32xf32>
    %172 = vector.extract_strided_slice %169 {offsets = [2, 0], sizes = [1, 32], strides = [1, 1]} : vector<9x32xf32> to vector<1x32xf32>
    %173 = vector.extract_strided_slice %169 {offsets = [3, 0], sizes = [1, 32], strides = [1, 1]} : vector<9x32xf32> to vector<1x32xf32>
    %174 = vector.extract_strided_slice %169 {offsets = [4, 0], sizes = [1, 32], strides = [1, 1]} : vector<9x32xf32> to vector<1x32xf32>
    %175 = vector.extract_strided_slice %169 {offsets = [5, 0], sizes = [1, 32], strides = [1, 1]} : vector<9x32xf32> to vector<1x32xf32>
    %176 = vector.extract_strided_slice %169 {offsets = [6, 0], sizes = [1, 32], strides = [1, 1]} : vector<9x32xf32> to vector<1x32xf32>
    %177 = vector.extract_strided_slice %169 {offsets = [7, 0], sizes = [1, 32], strides = [1, 1]} : vector<9x32xf32> to vector<1x32xf32>
    %178 = vector.extract_strided_slice %169 {offsets = [8, 0], sizes = [1, 32], strides = [1, 1]} : vector<9x32xf32> to vector<1x32xf32>
    %c1_64 = arith.constant 1 : index
    %c0_65 = arith.constant 0 : index
    %c0_66 = arith.constant 0 : index
    %179 = vector.load %arg9[%c1_64, %c0_65, %c0_66] : memref<2x1x64xf32, #tpu.memory_space<vmem>>, vector<1x1x64xf32>
    %180 = vector.shape_cast %179 : vector<1x1x64xf32> to vector<1x64xf32>
    %c1_67 = arith.constant 1 : index
    %c0_68 = arith.constant 0 : index
    %c0_69 = arith.constant 0 : index
    %181 = vector.load %arg4[%c1_67, %c0_68, %c0_69] : memref<2x32x96xf32, #tpu.memory_space<vmem>>, vector<1x32x96xf32>
    %182 = vector.shape_cast %181 : vector<1x32x96xf32> to vector<32x96xf32>
    %cst_70 = arith.constant dense<0.000000e+00> : vector<2x96xf32>
    %183 = tpu.matmul %167, %182, %cst_70 {dimension_numbers = #tpu.dot_dimension_numbers<[1], [0], [0], [1], [0, 0, 1, 1], [], []>} : vector<2x32xf32>, vector<32x96xf32>, vector<2x96xf32> -> vector<2x96xf32>
    %184 = vector.extract_strided_slice %183 {offsets = [0, 0], sizes = [2, 32], strides = [1, 1]} : vector<2x96xf32> to vector<2x32xf32>
    %185 = vector.broadcast %170 : vector<1x32xf32> to vector<2x32xf32>
    %186 = arith.addf %184, %185 : vector<2x32xf32>
    %187 = vector.extract_strided_slice %183 {offsets = [0, 32], sizes = [2, 32], strides = [1, 1]} : vector<2x96xf32> to vector<2x32xf32>
    %188 = vector.broadcast %171 : vector<1x32xf32> to vector<2x32xf32>
    %189 = arith.addf %187, %188 : vector<2x32xf32>
    %190 = vector.extract_strided_slice %183 {offsets = [0, 64], sizes = [2, 32], strides = [1, 1]} : vector<2x96xf32> to vector<2x32xf32>
    %191 = vector.broadcast %172 : vector<1x32xf32> to vector<2x32xf32>
    %192 = arith.addf %190, %191 : vector<2x32xf32>
    %193 = vector.extract_strided_slice %186 {offsets = [0, 0], sizes = [2, 8], strides = [1, 1]} : vector<2x32xf32> to vector<2x8xf32>
    %194 = vector.extract_strided_slice %189 {offsets = [0, 0], sizes = [2, 8], strides = [1, 1]} : vector<2x32xf32> to vector<2x8xf32>
    %195 = vector.extract_strided_slice %192 {offsets = [0, 0], sizes = [2, 8], strides = [1, 1]} : vector<2x32xf32> to vector<2x8xf32>
    %cst_71 = arith.constant dense<0.000000e+00> : vector<2x2xf32>
    %196 = tpu.matmul %193, %194, %cst_71 {dimension_numbers = #tpu.dot_dimension_numbers<[1], [1], [0], [0], [0, 0, 1, 0], [], []>} : vector<2x8xf32>, vector<2x8xf32>, vector<2x2xf32> -> vector<2x2xf32>
    %cst_72 = arith.constant 0.353553385 : f32
    %197 = vector.broadcast %cst_72 : f32 to vector<2x2xf32>
    %198 = arith.mulf %196, %197 : vector<2x2xf32>
    %cst_73 = arith.constant dense<0xFF800000> : vector<2xf32>
    %199 = vector.multi_reduction <maximumf>, %198, %cst_73 [1] : vector<2x2xf32> to vector<2xf32>
    %200 = vector.shape_cast %199 : vector<2xf32> to vector<2x1xf32>
    %201 = vector.broadcast %200 : vector<2x1xf32> to vector<2x2xf32>
    %202 = arith.subf %198, %201 : vector<2x2xf32>
    %203 = math.exp %202 : vector<2x2xf32>
    %cst_74 = arith.constant dense<0.000000e+00> : vector<2xf32>
    %204 = vector.multi_reduction <add>, %203, %cst_74 [1] : vector<2x2xf32> to vector<2xf32>
    %205 = vector.shape_cast %204 : vector<2xf32> to vector<2x1xf32>
    %206 = vector.broadcast %205 : vector<2x1xf32> to vector<2x2xf32>
    %207 = arith.divf %203, %206 : vector<2x2xf32>
    %cst_75 = arith.constant dense<0.000000e+00> : vector<2x8xf32>
    %208 = tpu.matmul %207, %195, %cst_75 {dimension_numbers = #tpu.dot_dimension_numbers<[1], [0], [0], [1], [0, 0, 1, 1], [], []>} : vector<2x2xf32>, vector<2x8xf32>, vector<2x8xf32> -> vector<2x8xf32>
    %209 = vector.extract_strided_slice %186 {offsets = [0, 8], sizes = [2, 8], strides = [1, 1]} : vector<2x32xf32> to vector<2x8xf32>
    %210 = vector.extract_strided_slice %189 {offsets = [0, 8], sizes = [2, 8], strides = [1, 1]} : vector<2x32xf32> to vector<2x8xf32>
    %211 = vector.extract_strided_slice %192 {offsets = [0, 8], sizes = [2, 8], strides = [1, 1]} : vector<2x32xf32> to vector<2x8xf32>
    %cst_76 = arith.constant dense<0.000000e+00> : vector<2x2xf32>
    %212 = tpu.matmul %209, %210, %cst_76 {dimension_numbers = #tpu.dot_dimension_numbers<[1], [1], [0], [0], [0, 0, 1, 0], [], []>} : vector<2x8xf32>, vector<2x8xf32>, vector<2x2xf32> -> vector<2x2xf32>
    %cst_77 = arith.constant 0.353553385 : f32
    %213 = vector.broadcast %cst_77 : f32 to vector<2x2xf32>
    %214 = arith.mulf %212, %213 : vector<2x2xf32>
    %cst_78 = arith.constant dense<0xFF800000> : vector<2xf32>
    %215 = vector.multi_reduction <maximumf>, %214, %cst_78 [1] : vector<2x2xf32> to vector<2xf32>
    %216 = vector.shape_cast %215 : vector<2xf32> to vector<2x1xf32>
    %217 = vector.broadcast %216 : vector<2x1xf32> to vector<2x2xf32>
    %218 = arith.subf %214, %217 : vector<2x2xf32>
    %219 = math.exp %218 : vector<2x2xf32>
    %cst_79 = arith.constant dense<0.000000e+00> : vector<2xf32>
    %220 = vector.multi_reduction <add>, %219, %cst_79 [1] : vector<2x2xf32> to vector<2xf32>
    %221 = vector.shape_cast %220 : vector<2xf32> to vector<2x1xf32>
    %222 = vector.broadcast %221 : vector<2x1xf32> to vector<2x2xf32>
    %223 = arith.divf %219, %222 : vector<2x2xf32>
    %cst_80 = arith.constant dense<0.000000e+00> : vector<2x8xf32>
    %224 = tpu.matmul %223, %211, %cst_80 {dimension_numbers = #tpu.dot_dimension_numbers<[1], [0], [0], [1], [0, 0, 1, 1], [], []>} : vector<2x2xf32>, vector<2x8xf32>, vector<2x8xf32> -> vector<2x8xf32>
    %225 = vector.extract_strided_slice %186 {offsets = [0, 16], sizes = [2, 8], strides = [1, 1]} : vector<2x32xf32> to vector<2x8xf32>
    %226 = vector.extract_strided_slice %189 {offsets = [0, 16], sizes = [2, 8], strides = [1, 1]} : vector<2x32xf32> to vector<2x8xf32>
    %227 = vector.extract_strided_slice %192 {offsets = [0, 16], sizes = [2, 8], strides = [1, 1]} : vector<2x32xf32> to vector<2x8xf32>
    %cst_81 = arith.constant dense<0.000000e+00> : vector<2x2xf32>
    %228 = tpu.matmul %225, %226, %cst_81 {dimension_numbers = #tpu.dot_dimension_numbers<[1], [1], [0], [0], [0, 0, 1, 0], [], []>} : vector<2x8xf32>, vector<2x8xf32>, vector<2x2xf32> -> vector<2x2xf32>
    %cst_82 = arith.constant 0.353553385 : f32
    %229 = vector.broadcast %cst_82 : f32 to vector<2x2xf32>
    %230 = arith.mulf %228, %229 : vector<2x2xf32>
    %cst_83 = arith.constant dense<0xFF800000> : vector<2xf32>
    %231 = vector.multi_reduction <maximumf>, %230, %cst_83 [1] : vector<2x2xf32> to vector<2xf32>
    %232 = vector.shape_cast %231 : vector<2xf32> to vector<2x1xf32>
    %233 = vector.broadcast %232 : vector<2x1xf32> to vector<2x2xf32>
    %234 = arith.subf %230, %233 : vector<2x2xf32>
    %235 = math.exp %234 : vector<2x2xf32>
    %cst_84 = arith.constant dense<0.000000e+00> : vector<2xf32>
    %236 = vector.multi_reduction <add>, %235, %cst_84 [1] : vector<2x2xf32> to vector<2xf32>
    %237 = vector.shape_cast %236 : vector<2xf32> to vector<2x1xf32>
    %238 = vector.broadcast %237 : vector<2x1xf32> to vector<2x2xf32>
    %239 = arith.divf %235, %238 : vector<2x2xf32>
    %cst_85 = arith.constant dense<0.000000e+00> : vector<2x8xf32>
    %240 = tpu.matmul %239, %227, %cst_85 {dimension_numbers = #tpu.dot_dimension_numbers<[1], [0], [0], [1], [0, 0, 1, 1], [], []>} : vector<2x2xf32>, vector<2x8xf32>, vector<2x8xf32> -> vector<2x8xf32>
    %241 = vector.extract_strided_slice %186 {offsets = [0, 24], sizes = [2, 8], strides = [1, 1]} : vector<2x32xf32> to vector<2x8xf32>
    %242 = vector.extract_strided_slice %189 {offsets = [0, 24], sizes = [2, 8], strides = [1, 1]} : vector<2x32xf32> to vector<2x8xf32>
    %243 = vector.extract_strided_slice %192 {offsets = [0, 24], sizes = [2, 8], strides = [1, 1]} : vector<2x32xf32> to vector<2x8xf32>
    %cst_86 = arith.constant dense<0.000000e+00> : vector<2x2xf32>
    %244 = tpu.matmul %241, %242, %cst_86 {dimension_numbers = #tpu.dot_dimension_numbers<[1], [1], [0], [0], [0, 0, 1, 0], [], []>} : vector<2x8xf32>, vector<2x8xf32>, vector<2x2xf32> -> vector<2x2xf32>
    %cst_87 = arith.constant 0.353553385 : f32
    %245 = vector.broadcast %cst_87 : f32 to vector<2x2xf32>
    %246 = arith.mulf %244, %245 : vector<2x2xf32>
    %cst_88 = arith.constant dense<0xFF800000> : vector<2xf32>
    %247 = vector.multi_reduction <maximumf>, %246, %cst_88 [1] : vector<2x2xf32> to vector<2xf32>
    %248 = vector.shape_cast %247 : vector<2xf32> to vector<2x1xf32>
    %249 = vector.broadcast %248 : vector<2x1xf32> to vector<2x2xf32>
    %250 = arith.subf %246, %249 : vector<2x2xf32>
    %251 = math.exp %250 : vector<2x2xf32>
    %cst_89 = arith.constant dense<0.000000e+00> : vector<2xf32>
    %252 = vector.multi_reduction <add>, %251, %cst_89 [1] : vector<2x2xf32> to vector<2xf32>
    %253 = vector.shape_cast %252 : vector<2xf32> to vector<2x1xf32>
    %254 = vector.broadcast %253 : vector<2x1xf32> to vector<2x2xf32>
    %255 = arith.divf %251, %254 : vector<2x2xf32>
    %cst_90 = arith.constant dense<0.000000e+00> : vector<2x8xf32>
    %256 = tpu.matmul %255, %243, %cst_90 {dimension_numbers = #tpu.dot_dimension_numbers<[1], [0], [0], [1], [0, 0, 1, 1], [], []>} : vector<2x2xf32>, vector<2x8xf32>, vector<2x8xf32> -> vector<2x8xf32>
    %257 = tpu.concatenate %208, %224, %240, %256 in 1 : vector<2x8xf32>, vector<2x8xf32>, vector<2x8xf32>, vector<2x8xf32> -> vector<2x32xf32>
    %c1_91 = arith.constant 1 : index
    %c0_92 = arith.constant 0 : index
    %c0_93 = arith.constant 0 : index
    %258 = vector.load %arg5[%c1_91, %c0_92, %c0_93] : memref<2x32x32xf32, #tpu.memory_space<vmem>>, vector<1x32x32xf32>
    %259 = vector.shape_cast %258 : vector<1x32x32xf32> to vector<32x32xf32>
    %cst_94 = arith.constant dense<0.000000e+00> : vector<2x32xf32>
    %260 = tpu.matmul %257, %259, %cst_94 {dimension_numbers = #tpu.dot_dimension_numbers<[1], [0], [0], [1], [0, 0, 1, 1], [], []>} : vector<2x32xf32>, vector<32x32xf32>, vector<2x32xf32> -> vector<2x32xf32>
    %261 = vector.broadcast %173 : vector<1x32xf32> to vector<2x32xf32>
    %262 = arith.addf %260, %261 : vector<2x32xf32>
    %263 = arith.addf %167, %262 : vector<2x32xf32>
    %cst_95 = arith.constant dense<0.000000e+00> : vector<2xf32>
    %264 = vector.multi_reduction <add>, %263, %cst_95 [1] : vector<2x32xf32> to vector<2xf32>
    %265 = vector.shape_cast %264 : vector<2xf32> to vector<2x1xf32>
    %cst_96 = arith.constant 3.200000e+01 : f32
    %266 = vector.broadcast %cst_96 : f32 to vector<2x1xf32>
    %267 = arith.divf %265, %266 : vector<2x1xf32>
    %268 = vector.broadcast %267 : vector<2x1xf32> to vector<2x32xf32>
    %269 = arith.subf %263, %268 : vector<2x32xf32>
    %270 = arith.mulf %269, %269 : vector<2x32xf32>
    %cst_97 = arith.constant dense<0.000000e+00> : vector<2xf32>
    %271 = vector.multi_reduction <add>, %270, %cst_97 [1] : vector<2x32xf32> to vector<2xf32>
    %272 = vector.shape_cast %271 : vector<2xf32> to vector<2x1xf32>
    %cst_98 = arith.constant 3.200000e+01 : f32
    %273 = vector.broadcast %cst_98 : f32 to vector<2x1xf32>
    %274 = arith.divf %272, %273 : vector<2x1xf32>
    %cst_99 = arith.constant 9.99999974E-6 : f32
    %275 = vector.broadcast %cst_99 : f32 to vector<2x1xf32>
    %276 = arith.addf %274, %275 : vector<2x1xf32>
    %277 = math.rsqrt %276 : vector<2x1xf32>
    %278 = vector.broadcast %277 : vector<2x1xf32> to vector<2x32xf32>
    %279 = arith.mulf %269, %278 : vector<2x32xf32>
    %280 = vector.broadcast %175 : vector<1x32xf32> to vector<2x32xf32>
    %281 = arith.mulf %279, %280 : vector<2x32xf32>
    %282 = vector.broadcast %176 : vector<1x32xf32> to vector<2x32xf32>
    %283 = arith.addf %281, %282 : vector<2x32xf32>
    %c1_100 = arith.constant 1 : index
    %c0_101 = arith.constant 0 : index
    %c0_102 = arith.constant 0 : index
    %284 = vector.load %arg6[%c1_100, %c0_101, %c0_102] : memref<2x32x64xf32, #tpu.memory_space<vmem>>, vector<1x32x64xf32>
    %285 = vector.shape_cast %284 : vector<1x32x64xf32> to vector<32x64xf32>
    %cst_103 = arith.constant dense<0.000000e+00> : vector<2x64xf32>
    %286 = tpu.matmul %283, %285, %cst_103 {dimension_numbers = #tpu.dot_dimension_numbers<[1], [0], [0], [1], [0, 0, 1, 1], [], []>} : vector<2x32xf32>, vector<32x64xf32>, vector<2x64xf32> -> vector<2x64xf32>
    %287 = vector.broadcast %180 : vector<1x64xf32> to vector<2x64xf32>
    %288 = arith.addf %286, %287 : vector<2x64xf32>
    %cst_104 = arith.constant 0.000000e+00 : f32
    %289 = vector.broadcast %cst_104 : f32 to vector<2x64xf32>
    %290 = arith.maximumf %288, %289 : vector<2x64xf32>
    %c1_105 = arith.constant 1 : index
    %c0_106 = arith.constant 0 : index
    %c0_107 = arith.constant 0 : index
    %291 = vector.load %arg7[%c1_105, %c0_106, %c0_107] : memref<2x64x32xf32, #tpu.memory_space<vmem>>, vector<1x64x32xf32>
    %292 = vector.shape_cast %291 : vector<1x64x32xf32> to vector<64x32xf32>
    %cst_108 = arith.constant dense<0.000000e+00> : vector<2x32xf32>
    %293 = tpu.matmul %290, %292, %cst_108 {dimension_numbers = #tpu.dot_dimension_numbers<[1], [0], [0], [1], [0, 0, 1, 1], [], []>} : vector<2x64xf32>, vector<64x32xf32>, vector<2x32xf32> -> vector<2x32xf32>
    %294 = vector.broadcast %174 : vector<1x32xf32> to vector<2x32xf32>
    %295 = arith.addf %293, %294 : vector<2x32xf32>
    %296 = arith.addf %283, %295 : vector<2x32xf32>
    %cst_109 = arith.constant dense<0.000000e+00> : vector<2xf32>
    %297 = vector.multi_reduction <add>, %296, %cst_109 [1] : vector<2x32xf32> to vector<2xf32>
    %298 = vector.shape_cast %297 : vector<2xf32> to vector<2x1xf32>
    %cst_110 = arith.constant 3.200000e+01 : f32
    %299 = vector.broadcast %cst_110 : f32 to vector<2x1xf32>
    %300 = arith.divf %298, %299 : vector<2x1xf32>
    %301 = vector.broadcast %300 : vector<2x1xf32> to vector<2x32xf32>
    %302 = arith.subf %296, %301 : vector<2x32xf32>
    %303 = arith.mulf %302, %302 : vector<2x32xf32>
    %cst_111 = arith.constant dense<0.000000e+00> : vector<2xf32>
    %304 = vector.multi_reduction <add>, %303, %cst_111 [1] : vector<2x32xf32> to vector<2xf32>
    %305 = vector.shape_cast %304 : vector<2xf32> to vector<2x1xf32>
    %cst_112 = arith.constant 3.200000e+01 : f32
    %306 = vector.broadcast %cst_112 : f32 to vector<2x1xf32>
    %307 = arith.divf %305, %306 : vector<2x1xf32>
    %cst_113 = arith.constant 9.99999974E-6 : f32
    %308 = vector.broadcast %cst_113 : f32 to vector<2x1xf32>
    %309 = arith.addf %307, %308 : vector<2x1xf32>
    %310 = math.rsqrt %309 : vector<2x1xf32>
    %311 = vector.broadcast %310 : vector<2x1xf32> to vector<2x32xf32>
    %312 = arith.mulf %302, %311 : vector<2x32xf32>
    %313 = vector.broadcast %177 : vector<1x32xf32> to vector<2x32xf32>
    %314 = arith.mulf %312, %313 : vector<2x32xf32>
    %315 = vector.broadcast %178 : vector<1x32xf32> to vector<2x32xf32>
    %316 = arith.addf %314, %315 : vector<2x32xf32>
    %c0_114 = arith.constant 0 : index
    %c0_115 = arith.constant 0 : index
    %c0_116 = arith.constant 0 : index
    %317 = vector.load %arg10[%c0_114, %c0_115, %c0_116] : memref<1x2x32xf32, #tpu.memory_space<vmem>>, vector<1x2x32xf32>
    %318 = vector.shape_cast %317 : vector<1x2x32xf32> to vector<2x32xf32>
    %319 = vector.shape_cast %316 : vector<2x32xf32> to vector<1x2x32xf32>
    tpu.vector_store %arg10[%c0_114, %c0_115, %c0_116], %319 {strides = array<i32>} : memref<1x2x32xf32, #tpu.memory_space<vmem>>, vector<1x2x32xf32>,
    return
  }
  func.func @transform_0(%arg0: i32) -> (i32, i32, i32) {
    %c0_i32 = arith.constant 0 : i32
    %c0_i32_0 = arith.constant 0 : i32
    %c0_i32_1 = arith.constant 0 : i32
    return %arg0, %c0_i32, %c0_i32_0 : i32, i32, i32
  }
  func.func @transform_1(%arg0: i32) -> (i32, i32) {
    %c0_i32 = arith.constant 0 : i32
    %c0_i32_0 = arith.constant 0 : i32
    %c0_i32_1 = arith.constant 0 : i32
    return %c0_i32, %c0_i32_0 : i32, i32
  }
  func.func @transform_2(%arg0: i32) -> (i32, i32) {
    %c0_i32 = arith.constant 0 : i32
    %c0_i32_0 = arith.constant 0 : i32
    %c0_i32_1 = arith.constant 0 : i32
    return %c0_i32, %c0_i32_0 : i32, i32
  }
  func.func @transform_3(%arg0: i32) -> (i32, i32, i32) {
    %c0_i32 = arith.constant 0 : i32
    %c0_i32_0 = arith.constant 0 : i32
    %c0_i32_1 = arith.constant 0 : i32
    %c0_i32_2 = arith.constant 0 : i32
    return %c0_i32, %c0_i32_0, %c0_i32_1 : i32, i32, i32
  }
  func.func @transform_4(%arg0: i32) -> (i32, i32, i32) {
    %c0_i32 = arith.constant 0 : i32
    %c0_i32_0 = arith.constant 0 : i32
    %c0_i32_1 = arith.constant 0 : i32
    %c0_i32_2 = arith.constant 0 : i32
    return %c0_i32, %c0_i32_0, %c0_i32_1 : i32, i32, i32
  }
  func.func @transform_5(%arg0: i32) -> (i32, i32, i32) {
    %c0_i32 = arith.constant 0 : i32
    %c0_i32_0 = arith.constant 0 : i32
    %c0_i32_1 = arith.constant 0 : i32
    %c0_i32_2 = arith.constant 0 : i32
    return %c0_i32, %c0_i32_0, %c0_i32_1 : i32, i32, i32
  }
  func.func @transform_6(%arg0: i32) -> (i32, i32, i32) {
    %c0_i32 = arith.constant 0 : i32
    %c0_i32_0 = arith.constant 0 : i32
    %c0_i32_1 = arith.constant 0 : i32
    %c0_i32_2 = arith.constant 0 : i32
    return %c0_i32, %c0_i32_0, %c0_i32_1 : i32, i32, i32
  }
  func.func @transform_7(%arg0: i32) -> (i32, i32, i32) {
    %c0_i32 = arith.constant 0 : i32
    %c0_i32_0 = arith.constant 0 : i32
    %c0_i32_1 = arith.constant 0 : i32
    %c0_i32_2 = arith.constant 0 : i32
    return %c0_i32, %c0_i32_0, %c0_i32_1 : i32, i32, i32
  }
  func.func @transform_8(%arg0: i32) -> (i32, i32, i32) {
    %c0_i32 = arith.constant 0 : i32
    %c0_i32_0 = arith.constant 0 : i32
    %c0_i32_1 = arith.constant 0 : i32
    %c0_i32_2 = arith.constant 0 : i32
    return %c0_i32, %c0_i32_0, %c0_i32_1 : i32, i32, i32
  }
  func.func @transform_9(%arg0: i32) -> (i32, i32, i32) {
    %c0_i32 = arith.constant 0 : i32
    %c0_i32_0 = arith.constant 0 : i32
    %c0_i32_1 = arith.constant 0 : i32
    return %arg0, %c0_i32, %c0_i32_0 : i32, i32, i32
  }
}

</mosaic_0001>

<llo_original>
// kernel: pose_encoder_forward.1
$region0: #{pose_encoder_forward.1}
  #allocation0 [shape = 'u32[]', space=smem, size = 0x4, offset = 0x4, fixed_abs, tag = 'smem constant byte address 0x4 - core index']
  #allocation1 [shape = 'u32[144,128]{1,0:T(1,128)}', space=vmem, size = 0x12000, scoped, tag = 'internal scratch']
  %s0 = inlined_call_operand.vmem [shape: f32[8,2,12], index: 0, kind: input, shape index: {}]
  %s1 = inlined_call_operand.vmem [shape: f32[12,32], index: 1, kind: input, shape index: {}]
  %s2 = inlined_call_operand.vmem [shape: f32[2,32], index: 2, kind: input, shape index: {}]
  %s3 = inlined_call_operand.vmem [shape: f32[2,32,96], index: 3, kind: input, shape index: {}]
  %s4 = inlined_call_operand.vmem [shape: f32[2,32,32], index: 4, kind: input, shape index: {}]
  %s5 = inlined_call_operand.vmem [shape: f32[2,32,64], index: 5, kind: input, shape index: {}]
  %s6 = inlined_call_operand.vmem [shape: f32[2,64,32], index: 6, kind: input, shape index: {}]
  %s7 = inlined_call_operand.vmem [shape: f32[2,9,32], index: 7, kind: input, shape index: {}]
  %s8 = inlined_call_operand.vmem [shape: f32[2,1,64], index: 8, kind: input, shape index: {}]
  %s9 = inlined_call_operand.vmem [shape: f32[8,2,32], index: 9, kind: output, shape index: {}]
  %s10 = sld [smem:[#allocation0]]
  $region69: #{pose_encoder_forward.1} parent=0
    _
  %s12 = ssub.s32 1, %s10
  %s13 = scalar_select 0, %s12, %s10
  loop: start=0, step=1, limit=10
  $region2: #{pose_encoder_forward.1} parent=0 // loop_pre_header
    _
  $region3: #{pose_encoder_forward.1} parent=0 // loop_header
    %s15 = sphi 0, %s19
    %p16 = scmp.ge.s32.totalorder %s15, 10
    %s25 = sphi 0, %s27
    %s28 = sphi 0, %s25
    %s29 = sphi 0, %s28
    %s45 = sphi 0, %s29
    %s49 = sphi 0, %s49
    %s51 = sphi 0, %s49
    %s52 = sphi 0, %s51
    %s66 = sphi 0, %s52
    %s70 = sphi 0, %s70
    %s72 = sphi 0, %s70
    %s73 = sphi 0, %s72
    %s87 = sphi 0, %s73
    %s91 = sphi 0, %s91
    %s93 = sphi 0, %s91
    %s94 = sphi 0, %s93
    %s108 = sphi 0, %s94
    %s112 = sphi 0, %s112
    %s114 = sphi 0, %s112
    %s115 = sphi 0, %s114
    %s129 = sphi 0, %s115
    %s133 = sphi 0, %s133
    %s135 = sphi 0, %s133
    %s136 = sphi 0, %s135
    %s150 = sphi 0, %s136
    %s154 = sphi 0, %s154
    %s156 = sphi 0, %s154
    %s157 = sphi 0, %s156
    %s171 = sphi 0, %s157
    %s175 = sphi 0, %s175
    %s177 = sphi 0, %s175
    %s178 = sphi 0, %s177
    %s192 = sphi 0, %s178
    %s196 = sphi 0, %s196
    %s198 = sphi 0, %s196
    %s199 = sphi 0, %s198
    %s213 = sphi 0, %s199
    %s219 = sphi 0, %s221
    %s222 = sphi 0, %s219
    %s223 = sphi 0, %s222
    %s239 = sphi 0, %s223
  $region4: #{pose_encoder_forward.1} parent=0 // loop_header_branch
    %18 = sbr.rel (%p16) target = $region8
  $region5: #{pose_encoder_forward.1} parent=0 // loop_body
    %s20 = ssub.s32 %s15, 1
    %s21 = ssub.s32 %s15, 2
    %s22 = sadd.s32 %s15, 1
    %s23 = ssub.s32 %s15, %s22
    %p24 = scmp.eq.s32.totalorder %s23, 0
    %s26 = sadd.s32 %s25, 1
    %s27 = scalar_select %p24, %s25, %s26
    %p30 = pneg %p24
    %p31 = scmp.eq.s32.totalorder %s15, 7
    %p32 = por %p30, %p31
    %p33 = scmp.ne.s32.totalorder %s25, %s28
    %p34 = scmp.eq.s32.totalorder %s15, 0
    %p35 = por %p33, %p34
    %p36 = scmp.ne.s32.totalorder %s25, %s28
    %p37 = scmp.eq.s32.totalorder %s20, 7
    %p38 = por %p36, %p37
    %p39 = scmp.ne.s32.totalorder %s28, %s29
    %p40 = scmp.eq.s32.totalorder %s20, 0
    %p41 = por %p39, %p40
    %p42 = scmp.ne.s32.totalorder %s28, %s29
    %p43 = scmp.eq.s32.totalorder %s21, 7
    %p44 = por %p42, %p43
    %p46 = scmp.ne.s32.totalorder %s29, %s45
    %p47 = scmp.eq.s32.totalorder %s21, 0
    %p48 = por %p46, %p47
    %s50 = sadd.s32 %s49, 1
    %p53 = scmp.eq.s32.totalorder %s15, 7
    %p54 = scmp.ne.s32.totalorder %s49, %s51
    %p55 = scmp.eq.s32.totalorder %s15, 0
    %p56 = por %p54, %p55
    %p57 = scmp.ne.s32.totalorder %s49, %s51
    %p58 = scmp.eq.s32.totalorder %s20, 7
    %p59 = por %p57, %p58
    %p60 = scmp.ne.s32.totalorder %s51, %s52
    %p61 = scmp.eq.s32.totalorder %s20, 0
    %p62 = por %p60, %p61
    %p63 = scmp.ne.s32.totalorder %s51, %s52
    %p64 = scmp.eq.s32.totalorder %s21, 7
    %p65 = por %p63, %p64
    %p67 = scmp.ne.s32.totalorder %s52, %s66
    %p68 = scmp.eq.s32.totalorder %s21, 0
    %p69 = por %p67, %p68
    %s71 = sadd.s32 %s70, 1
    %p74 = scmp.eq.s32.totalorder %s15, 7
    %p75 = scmp.ne.s32.totalorder %s70, %s72
    %p76 = scmp.eq.s32.totalorder %s15, 0
    %p77 = por %p75, %p76
    %p78 = scmp.ne.s32.totalorder %s70, %s72
    %p79 = scmp.eq.s32.totalorder %s20, 7
    %p80 = por %p78, %p79
    %p81 = scmp.ne.s32.totalorder %s72, %s73
    %p82 = scmp.eq.s32.totalorder %s20, 0
    %p83 = por %p81, %p82
    %p84 = scmp.ne.s32.totalorder %s72, %s73
    %p85 = scmp.eq.s32.totalorder %s21, 7
    %p86 = por %p84, %p85
    %p88 = scmp.ne.s32.totalorder %s73, %s87
    %p89 = scmp.eq.s32.totalorder %s21, 0
    %p90 = por %p88, %p89
    %s92 = sadd.s32 %s91, 1
    %p95 = scmp.eq.s32.totalorder %s15, 7
    %p96 = scmp.ne.s32.totalorder %s91, %s93
    %p97 = scmp.eq.s32.totalorder %s15, 0
    %p98 = por %p96, %p97
    %p99 = scmp.ne.s32.totalorder %s91, %s93
    %p100 = scmp.eq.s32.totalorder %s20, 7
    %p101 = por %p99, %p100
    %p102 = scmp.ne.s32.totalorder %s93, %s94
    %p103 = scmp.eq.s32.totalorder %s20, 0
    %p104 = por %p102, %p103
    %p105 = scmp.ne.s32.totalorder %s93, %s94
    %p106 = scmp.eq.s32.totalorder %s21, 7
    %p107 = por %p105, %p106
    %p109 = scmp.ne.s32.totalorder %s94, %s108
    %p110 = scmp.eq.s32.totalorder %s21, 0
    %p111 = por %p109, %p110
    %s113 = sadd.s32 %s112, 1
    %p116 = scmp.eq.s32.totalorder %s15, 7
    %p117 = scmp.ne.s32.totalorder %s112, %s114
    %p118 = scmp.eq.s32.totalorder %s15, 0
    %p119 = por %p117, %p118
    %p120 = scmp.ne.s32.totalorder %s112, %s114
    %p121 = scmp.eq.s32.totalorder %s20, 7
    %p122 = por %p120, %p121
    %p123 = scmp.ne.s32.totalorder %s114, %s115
    %p124 = scmp.eq.s32.totalorder %s20, 0
    %p125 = por %p123, %p124
    %p126 = scmp.ne.s32.totalorder %s114, %s115
    %p127 = scmp.eq.s32.totalorder %s21, 7
    %p128 = por %p126, %p127
    %p130 = scmp.ne.s32.totalorder %s115, %s129
    %p131 = scmp.eq.s32.totalorder %s21, 0
    %p132 = por %p130, %p131
    %s134 = sadd.s32 %s133, 1
    %p137 = scmp.eq.s32.totalorder %s15, 7
    %p138 = scmp.ne.s32.totalorder %s133, %s135
    %p139 = scmp.eq.s32.totalorder %s15, 0
    %p140 = por %p138, %p139
    %p141 = scmp.ne.s32.totalorder %s133, %s135
    %p142 = scmp.eq.s32.totalorder %s20, 7
    %p143 = por %p141, %p142
    %p144 = scmp.ne.s32.totalorder %s135, %s136
    %p145 = scmp.eq.s32.totalorder %s20, 0
    %p146 = por %p144, %p145
    %p147 = scmp.ne.s32.totalorder %s135, %s136
    %p148 = scmp.eq.s32.totalorder %s21, 7
    %p149 = por %p147, %p148
    %p151 = scmp.ne.s32.totalorder %s136, %s150
    %p152 = scmp.eq.s32.totalorder %s21, 0
    %p153 = por %p151, %p152
    %s155 = sadd.s32 %s154, 1
    %p158 = scmp.eq.s32.totalorder %s15, 7
    %p159 = scmp.ne.s32.totalorder %s154, %s156
    %p160 = scmp.eq.s32.totalorder %s15, 0
    %p161 = por %p159, %p160
    %p162 = scmp.ne.s32.totalorder %s154, %s156
    %p163 = scmp.eq.s32.totalorder %s20, 7
    %p164 = por %p162, %p163
    %p165 = scmp.ne.s32.totalorder %s156, %s157
    %p166 = scmp.eq.s32.totalorder %s20, 0
    %p167 = por %p165, %p166
    %p168 = scmp.ne.s32.totalorder %s156, %s157
    %p169 = scmp.eq.s32.totalorder %s21, 7
    %p170 = por %p168, %p169
    %p172 = scmp.ne.s32.totalorder %s157, %s171
    %p173 = scmp.eq.s32.totalorder %s21, 0
    %p174 = por %p172, %p173
    %s176 = sadd.s32 %s175, 1
    %p179 = scmp.eq.s32.totalorder %s15, 7
    %p180 = scmp.ne.s32.totalorder %s175, %s177
    %p181 = scmp.eq.s32.totalorder %s15, 0
    %p182 = por %p180, %p181
    %p183 = scmp.ne.s32.totalorder %s175, %s177
    %p184 = scmp.eq.s32.totalorder %s20, 7
    %p185 = por %p183, %p184
    %p186 = scmp.ne.s32.totalorder %s177, %s178
    %p187 = scmp.eq.s32.totalorder %s20, 0
    %p188 = por %p186, %p187
    %p189 = scmp.ne.s32.totalorder %s177, %s178
    %p190 = scmp.eq.s32.totalorder %s21, 7
    %p191 = por %p189, %p190
    %p193 = scmp.ne.s32.totalorder %s178, %s192
    %p194 = scmp.eq.s32.totalorder %s21, 0
    %p195 = por %p193, %p194
    %s197 = sadd.s32 %s196, 1
    %p200 = scmp.eq.s32.totalorder %s15, 7
    %p201 = scmp.ne.s32.totalorder %s196, %s198
    %p202 = scmp.eq.s32.totalorder %s15, 0
    %p203 = por %p201, %p202
    %p204 = scmp.ne.s32.totalorder %s196, %s198
    %p205 = scmp.eq.s32.totalorder %s20, 7
    %p206 = por %p204, %p205
    %p207 = scmp.ne.s32.totalorder %s198, %s199
    %p208 = scmp.eq.s32.totalorder %s20, 0
    %p209 = por %p207, %p208
    %p210 = scmp.ne.s32.totalorder %s198, %s199
    %p211 = scmp.eq.s32.totalorder %s21, 7
    %p212 = por %p210, %p211
    %p214 = scmp.ne.s32.totalorder %s199, %s213
    %p215 = scmp.eq.s32.totalorder %s21, 0
    %p216 = por %p214, %p215
    %s217 = ssub.s32 %s15, %s22
    %p218 = scmp.eq.s32.totalorder %s217, 0
    %s220 = sadd.s32 %s219, 1
    %s221 = scalar_select %p218, %s219, %s220
    %p224 = pneg %p218
    %p225 = scmp.eq.s32.totalorder %s15, 7
    %p226 = por %p224, %p225
    %p227 = scmp.ne.s32.totalorder %s219, %s222
    %p228 = scmp.eq.s32.totalorder %s15, 0
    %p229 = por %p227, %p228
    %p230 = scmp.ne.s32.totalorder %s219, %s222
    %p231 = scmp.eq.s32.totalorder %s20, 7
    %p232 = por %p230, %p231
    %p233 = scmp.ne.s32.totalorder %s222, %s223
    %p234 = scmp.eq.s32.totalorder %s20, 0
    %p235 = por %p233, %p234
    %p236 = scmp.ne.s32.totalorder %s222, %s223
    %p237 = scmp.eq.s32.totalorder %s21, 7
    %p238 = por %p236, %p237
    %p240 = scmp.ne.s32.totalorder %s223, %s239
    %p241 = scmp.eq.s32.totalorder %s21, 0
    %p242 = por %p240, %p241
    %p243 = scmp.le.s32.totalorder 1, %s15
    %p244 = scmp.lt.s32.totalorder %s15, 9
    %p245 = pnand %p243, %p244
    %p246 = pneg %p245
    // Predicated region
    $region9: #{pose_encoder_forward.1} parent=5 // pred_check
      _
    $region10: #{pose_encoder_forward.1} parent=5 // pred_check_branch
      %248 = sbr.rel (%p245) target = $region12
    $region11: #{pose_encoder_forward.1} parent=5 // pred_region
      %s249 = ssub.s32 %s15, 1
      // Predicated region
      $region13: #{pose_encoder_forward.1} parent=11 // pred_check
        %p250 = pneg %p62
      $region14: #{pose_encoder_forward.1} parent=11 // pred_check_branch
        %252 = sbr.rel (%p250) target = $region16
      $region15: #{pose_encoder_forward.1} parent=11 // pred_region
        _
      $region16: #{pose_encoder_forward.1} parent=11 // pred_fallthru
        _
      // Predicated region
      $region17: #{pose_encoder_forward.1} parent=11 // pred_check
        %p253 = pneg %p83
      $region18: #{pose_encoder_forward.1} parent=11 // pred_check_branch
        %255 = sbr.rel (%p253) target = $region20
      $region19: #{pose_encoder_forward.1} parent=11 // pred_region
        _
      $region20: #{pose_encoder_forward.1} parent=11 // pred_fallthru
        _
      // Predicated region
      $region21: #{pose_encoder_forward.1} parent=11 // pred_check
        %p256 = pneg %p104
      $region22: #{pose_encoder_forward.1} parent=11 // pred_check_branch
        %258 = sbr.rel (%p256) target = $region24
      $region23: #{pose_encoder_forward.1} parent=11 // pred_region
        _
      $region24: #{pose_encoder_forward.1} parent=11 // pred_fallthru
        _
      // Predicated region
      $region25: #{pose_encoder_forward.1} parent=11 // pred_check
        %p259 = pneg %p125
      $region26: #{pose_encoder_forward.1} parent=11 // pred_check_branch
        %261 = sbr.rel (%p259) target = $region28
      $region27: #{pose_encoder_forward.1} parent=11 // pred_region
        _
      $region28: #{pose_encoder_forward.1} parent=11 // pred_fallthru
        _
      // Predicated region
      $region29: #{pose_encoder_forward.1} parent=11 // pred_check
        %p262 = pneg %p146
      $region30: #{pose_encoder_forward.1} parent=11 // pred_check_branch
        %264 = sbr.rel (%p262) target = $region32
      $region31: #{pose_encoder_forward.1} parent=11 // pred_region
        _
      $region32: #{pose_encoder_forward.1} parent=11 // pred_fallthru
        _
      // Predicated region
      $region33: #{pose_encoder_forward.1} parent=11 // pred_check
        %p265 = pneg %p167
      $region34: #{pose_encoder_forward.1} parent=11 // pred_check_branch
        %267 = sbr.rel (%p265) target = $region36
      $region35: #{pose_encoder_forward.1} parent=11 // pred_region
        _
      $region36: #{pose_encoder_forward.1} parent=11 // pred_fallthru
        _
      // Predicated region
      $region37: #{pose_encoder_forward.1} parent=11 // pred_check
        %p268 = pneg %p188
      $region38: #{pose_encoder_forward.1} parent=11 // pred_check_branch
        %270 = sbr.rel (%p268) target = $region40
      $region39: #{pose_encoder_forward.1} parent=11 // pred_region
        _
      $region40: #{pose_encoder_forward.1} parent=11 // pred_fallthru
        _
      // Predicated region
      $region41: #{pose_encoder_forward.1} parent=11 // pred_check
        %p271 = pneg %p209
      $region42: #{pose_encoder_forward.1} parent=11 // pred_check_branch
        %273 = sbr.rel (%p271) target = $region44
      $region43: #{pose_encoder_forward.1} parent=11 // pred_region
        _
      $region44: #{pose_encoder_forward.1} parent=11 // pred_fallthru
        _
    $region12: #{pose_encoder_forward.1} parent=5 // pred_fallthru
      _
    %p274 = scmp.lt.s32.totalorder %s15, 8
    // Predicated region
    $region45: #{pose_encoder_forward.1} parent=5 // pred_check
      %p275 = pneg %p274
    $region46: #{pose_encoder_forward.1} parent=5 // pred_check_branch
      %277 = sbr.rel (%p275) target = $region48
    $region47: #{pose_encoder_forward.1} parent=5 // pred_region
      // Predicated region
      $region49: #{pose_encoder_forward.1} parent=47 // pred_check
        %p278 = pneg %p35
      $region50: #{pose_encoder_forward.1} parent=47 // pred_check_branch
        %280 = sbr.rel (%p278) target = $region52
      $region51: #{pose_encoder_forward.1} parent=47 // pred_region
        %p281 = scmp.lt.s32.totalorder %s15, 7
        %s282 = scalar_select %p281, %s15, 7
        %s283 = smul.addr %s282, 2
        %s284 = scalar_lea.vmem %s0, %s283
      $region52: #{pose_encoder_forward.1} parent=47 // pred_fallthru
        _
    $region48: #{pose_encoder_forward.1} parent=5 // pred_fallthru
      _
    %p285 = scmp.le.s32.totalorder 1, %s15
    %p286 = scmp.lt.s32.totalorder %s15, 9
    %p287 = pnand %p285, %p286
    %p288 = pneg %p287
    // Predicated region
    $region53: #{pose_encoder_forward.1} parent=5 // pred_check
      _
    $region54: #{pose_encoder_forward.1} parent=5 // pred_check_branch
      %290 = sbr.rel (%p287) target = $region56
    $region55: #{pose_encoder_forward.1} parent=5 // pred_region
      %s291 = ssub.s32 %s15, 1
      %p292 = scmp.lt.s32.totalorder %s20, 7
      %s293 = scalar_select %p292, %s20, 7
      %s294 = smul.addr %s293, 2
      %s295 = scalar_lea.vmem %s0, %s294
      %p296 = pneg %p41
      %p297 = pneg %p38
      %p298 = pneg %p62
      %p299 = pneg %p59
      %p300 = pneg %p83
      %p301 = pneg %p80
      %p302 = pneg %p104
      %p303 = pneg %p101
      %p304 = pneg %p125
      %p305 = pneg %p122
      %p306 = pneg %p146
      %p307 = pneg %p143
      %p308 = pneg %p167
      %p309 = pneg %p164
      %p310 = pneg %p188
      %p311 = pneg %p185
      %p312 = pneg %p209
      %p313 = pneg %p206
      %p314 = pneg %p235
      %p315 = pneg %p232
      %p316 = scmp.lt.s32.totalorder %s20, 7
      %s317 = scalar_select %p316, %s20, 7
      %s318 = smul.addr %s317, 2
      %s319 = scalar_lea.vmem %s9, %s318
      %p320 = scmp.lt.s32.totalorder %s20, 7
      %s321 = scalar_select %p320, %s20, 7
      %s322 = smul.addr %s321, 2
      %s323 = scalar_lea.vmem %s0, %s322
      %p324 = scmp.lt.s32.totalorder %s20, 7
      %s325 = scalar_select %p324, %s20, 7
      %s326 = smul.addr %s325, 2
      %s327 = scalar_lea.vmem %s9, %s326
      %v328 = vld [vmem:[%s323] sm:$0x3]
      %v329 = vld [vmem:[%s1] sm:$0xff]
      %v330 = vld [vmem:[%s1 + $0x8] sm:$0xf]
      %v331 = vld [vmem:[%s2] sm:$0x1]
      %v332 = vlaneseq
      %v333 = vshrl.u32 %v332, 7
      %v334 = vsub.s32 0, %v333
      %v335 = vrot.slane %v331, %v334
      %vm336 = vcmask 97280
      %v338 = vsel %vm336, %v328, 0
      %vm340 = vcmask 1043456
      %v342 = vsel %vm340, %v330, 0
      %344 = vmatprep.subr.mxu0 0.0
      %345 = vmatpush1.msra.mxu0 %v329
      %346 = vmatprep.subr.mxu0 0.0
      %347 = vmatpush1.msra.mxu0 %v342
      %348 = vmatprep.subr.mxu0 0.0
      %349 = vmatpush1.msra.mxu0 0.0
      %350 = vmatprep.subr.mxu0 0.0
      %351 = vmatpush1.msra.mxu0 0.0
      %352 = vmatprep.subr.mxu0 0.0
      %353 = vmatpush1.msra.mxu0 0.0
      %354 = vmatprep.subr.mxu0 0.0
      %355 = vmatpush1.msra.mxu0 0.0
      %356 = vmatprep.subr.mxu0 0.0
      %357 = vmatpush1.msra.mxu0 0.0
      %358 = vmatprep.subr.mxu0 0.0
      %359 = vmatpush1.msra.mxu0 0.0
      %360 = vmatprep.subr.mxu0 0.0
      %361 = vmatpush1.msra.mxu0 0.0
      %362 = vmatprep.subr.mxu0 0.0
      %363 = vmatpush1.msra.mxu0 0.0
      %364 = vmatprep.subr.mxu0 0.0
      %365 = vmatpush1.msra.mxu0 0.0
      %366 = vmatprep.subr.mxu0 0.0
      %367 = vmatpush1.msra.mxu0 0.0
      %368 = vmatprep.subr.mxu0 0.0
      %369 = vmatpush1.msra.mxu0 0.0
      %370 = vmatprep.subr.mxu0 0.0
      %371 = vmatpush1.msra.mxu0 0.0
      %372 = vmatprep.subr.mxu0 0.0
      %373 = vmatpush1.msra.mxu0 0.0
      %374 = vmatprep.subr.mxu0 0.0
      %375 = vmatpush1.msra.mxu0 0.0
      %376 = vmatprep.subr.mxu0 0.0
      %377 = vmatpush1.msra.mxu0 0.0
      %378 = vmatprep.subr.mxu0 0.0
      %379 = vmatpush1.msra.mxu0 0.0
      %380 = vmatprep.subr.mxu0 0.0
      %381 = vmatpush1.msra.mxu0 0.0
      %382 = vmatprep.subr.mxu0 0.0
      %383 = vmatpush1.msra.mxu0 0.0
      %384 = vmatprep.subr.mxu0 0.0
      %385 = vmatpush1.msra.mxu0 0.0
      %386 = vmatprep.subr.mxu0 0.0
      %387 = vmatpush1.msra.mxu0 0.0
      %388 = vmatprep.subr.mxu0 0.0
      %389 = vmatpush1.msra.mxu0 0.0
      %390 = vmatprep.subr.mxu0 0.0
      %391 = vmatpush1.msra.mxu0 0.0
      %392 = vmatprep.subr.mxu0 0.0
      %393 = vmatpush1.msra.mxu0 0.0
      %394 = vmatprep.subr.mxu0 0.0
      %395 = vmatpush1.msra.mxu0 0.0
      %396 = vmatprep.subr.mxu0 0.0
      %397 = vmatpush1.msra.mxu0 0.0
      %398 = vmatprep.subr.mxu0 0.0
      %399 = vmatpush1.msra.mxu0 0.0
      %400 = vmatprep.subr.mxu0 0.0
      %401 = vmatpush1.msra.mxu0 0.0
      %402 = vmatprep.subr.mxu0 0.0
      %403 = vmatpush1.msra.mxu0 0.0
      %404 = vmatprep.subr.mxu0 0.0
      %405 = vmatpush1.msra.mxu0 0.0
      %406 = vmatprep.subr.mxu0 0.0
      %407 = vmatpush1.msra.mxu0 0.0
      %408 = vmatprep.mubr.f32.mxu0 0.0
      %409 = vmatmul.mubr.f32.gmra.mrb[0].mxu0 %v338
      %v410 = vpop.f32.mrb[0].mxu0
      %v411 = vadd.f32 %v335, %v410
      %v412 = vpop.f32.mrb[0].mxu0
      %413 = vdwg.mxu0
      %v414 = vld [vmem:[%s2 + $0x1] sm:$0x1]
      %v415 = vlaneseq
      %v416 = vshrl.u32 %v415, 7
      %v417 = vsub.s32 0, %v416
      %v418 = vrot.slane %v414, %v417
      %p419 = scmp.eq.s32.totalorder %s20, 0
      %s420 = scalar_select %p419, 1, 0
      %s421 = scvt.s32.f32 %s420
      %v422 = vstv %s421
      %v423 = vmul.f32 %v418, %v422
      %s424 = ssub.f32 1.0, %s421
      %v425 = vstv %s424
      %v426 = vmul.f32 %v411, %v425
      %v427 = vadd.f32 %v423, %v426
      %v428 = vld [vmem:[%s7] sm:$0xff]
      %v429 = vld [vmem:[%s7 + $0x8] sm:$0x1]
      %v430 = vld [vmem:[%s8] sm:$0x1]
      %v431 = vld [vmem:[%s3] sm:$0xff]
      %v432 = vld [vmem:[%s3 + $0x8] sm:$0xff]
      %v433 = vld [vmem:[%s3 + $0x10] sm:$0xff]
      %v434 = vld [vmem:[%s3 + $0x18] sm:$0xff]
      %vm435 = vcmask 261120
      %v437 = vsel %vm435, %v427, 0
      %439 = vmatprep.subr.mxu0 0.0
      %440 = vmatpush1.msra.mxu0 %v431
      %441 = vmatprep.subr.mxu0 0.0
      %442 = vmatpush1.msra.mxu0 %v432
      %443 = vmatprep.subr.mxu0 0.0
      %444 = vmatpush1.msra.mxu0 %v433
      %445 = vmatprep.subr.mxu0 0.0
      %446 = vmatpush1.msra.mxu0 %v434
      %447 = vmatprep.subr.mxu0 0.0
      %448 = vmatpush1.msra.mxu0 0.0
      %449 = vmatprep.subr.mxu0 0.0
      %450 = vmatpush1.msra.mxu0 0.0
      %451 = vmatprep.subr.mxu0 0.0
      %452 = vmatpush1.msra.mxu0 0.0
      %453 = vmatprep.subr.mxu0 0.0
      %454 = vmatpush1.msra.mxu0 0.0
      %455 = vmatprep.subr.mxu0 0.0
      %456 = vmatpush1.msra.mxu0 0.0
      %457 = vmatprep.subr.mxu0 0.0
      %458 = vmatpush1.msra.mxu0 0.0
      %459 = vmatprep.subr.mxu0 0.0
      %460 = vmatpush1.msra.mxu0 0.0
      %461 = vmatprep.subr.mxu0 0.0
      %462 = vmatpush1.msra.mxu0 0.0
      %463 = vmatprep.subr.mxu0 0.0
      %464 = vmatpush1.msra.mxu0 0.0
      %465 = vmatprep.subr.mxu0 0.0
      %466 = vmatpush1.msra.mxu0 0.0
      %467 = vmatprep.subr.mxu0 0.0
      %468 = vmatpush1.msra.mxu0 0.0
      %469 = vmatprep.subr.mxu0 0.0
      %470 = vmatpush1.msra.mxu0 0.0
      %471 = vmatprep.subr.mxu0 0.0
      %472 = vmatpush1.msra.mxu0 0.0
      %473 = vmatprep.subr.mxu0 0.0
      %474 = vmatpush1.msra.mxu0 0.0
      %475 = vmatprep.subr.mxu0 0.0
      %476 = vmatpush1.msra.mxu0 0.0
      %477 = vmatprep.subr.mxu0 0.0
      %478 = vmatpush1.msra.mxu0 0.0
      %479 = vmatprep.subr.mxu0 0.0
      %480 = vmatpush1.msra.mxu0 0.0
      %481 = vmatprep.subr.mxu0 0.0
      %482 = vmatpush1.msra.mxu0 0.0
      %483 = vmatprep.subr.mxu0 0.0
      %484 = vmatpush1.msra.mxu0 0.0
      %485 = vmatprep.subr.mxu0 0.0
      %486 = vmatpush1.msra.mxu0 0.0
      %487 = vmatprep.subr.mxu0 0.0
      %488 = vmatpush1.msra.mxu0 0.0
      %489 = vmatprep.subr.mxu0 0.0
      %490 = vmatpush1.msra.mxu0 0.0
      %491 = vmatprep.subr.mxu0 0.0
      %492 = vmatpush1.msra.mxu0 0.0
      %493 = vmatprep.subr.mxu0 0.0
      %494 = vmatpush1.msra.mxu0 0.0
      %495 = vmatprep.subr.mxu0 0.0
      %496 = vmatpush1.msra.mxu0 0.0
      %497 = vmatprep.subr.mxu0 0.0
      %498 = vmatpush1.msra.mxu0 0.0
      %499 = vmatprep.subr.mxu0 0.0
      %500 = vmatpush1.msra.mxu0 0.0
      %501 = vmatprep.subr.mxu0 0.0
      %502 = vmatpush1.msra.mxu0 0.0
      %503 = vmatprep.mubr.f32.mxu0 0.0
      %504 = vmatmul.mubr.f32.gmra.mrb[0].mxu0 %v437
      %v505 = vpop.f32.mrb[0].mxu0
      %v506 = vadd.f32 0.0, %v505
      %v507 = vpop.f32.mrb[0].mxu0
      %508 = vdwg.mxu0
      %v509 = vlaneseq
      %v510 = vshrl.u32 %v509, 7
      %v511 = vsub.s32 0, %v510
      %v512 = vrot.slane %v428, %v511
      %v513 = vadd.f32 %v506, %v512
      %v514 = vlaneseq
      %v515 = vshrl.u32 %v514, 7
      %v516 = vsub.s32 1, %v515
      %v517 = vrot.slane %v428, %v516
      %519 = vrot.lane.b32.xlu0 %v517, 32
      %v520 = vpop.permute.xlu0 %519
      %v522 = vadd.f32 %v506, %v520
      %v523 = vlaneseq
      %v524 = vshrl.u32 %v523, 7
      %v525 = vsub.s32 2, %v524
      %v526 = vrot.slane %v428, %v525
      %528 = vrot.lane.b32.xlu0 %v526, 64
      %v529 = vpop.permute.xlu0 %528
      %v531 = vadd.f32 %v506, %v529
      %533 = vrot.lane.b32.xlu0 %v522, 96
      %v534 = vpop.permute.xlu0 %533
      %vm535 = vcmask 64512
      %v537 = vsel %vm535, %v513, 0
      %v539 = vsel %vm535, %v534, 0
      %541 = vmatprep.subr.mxu0 0.0
      %542 = vmatpush1.xpose.msra.mxu0 %v539
      %543 = vmatprep.subr.mxu0 0.0
      %544 = vmatpush1.xpose.msra.mxu0 0.0
      %545 = vmatprep.subr.mxu0 0.0
      %546 = vmatpush1.xpose.msra.mxu0 0.0
      %547 = vmatprep.subr.mxu0 0.0
      %548 = vmatpush1.xpose.msra.mxu0 0.0
      %549 = vmatprep.subr.mxu0 0.0
      %550 = vmatpush1.xpose.msra.mxu0 0.0
      %551 = vmatprep.subr.mxu0 0.0
      %552 = vmatpush1.xpose.msra.mxu0 0.0
      %553 = vmatprep.subr.mxu0 0.0
      %554 = vmatpush1.xpose.msra.mxu0 0.0
      %555 = vmatprep.subr.mxu0 0.0
      %556 = vmatpush1.xpose.msra.mxu0 0.0
      %557 = vmatprep.subr.mxu0 0.0
      %558 = vmatpush1.xpose.msra.mxu0 0.0
      %559 = vmatprep.subr.mxu0 0.0
      %560 = vmatpush1.xpose.msra.mxu0 0.0
      %561 = vmatprep.subr.mxu0 0.0
      %562 = vmatpush1.xpose.msra.mxu0 0.0
      %563 = vmatprep.subr.mxu0 0.0
      %564 = vmatpush1.xpose.msra.mxu0 0.0
      %565 = vmatprep.subr.mxu0 0.0
      %566 = vmatpush1.xpose.msra.mxu0 0.0
      %567 = vmatprep.subr.mxu0 0.0
      %568 = vmatpush1.xpose.msra.mxu0 0.0
      %569 = vmatprep.subr.mxu0 0.0
      %570 = vmatpush1.xpose.msra.mxu0 0.0
      %571 = vmatprep.subr.mxu0 0.0
      %572 = vmatpush1.xpose.msra.mxu0 0.0
      %573 = vmatprep.subr.mxu0 0.0
      %574 = vmatpush1.xpose.msra.mxu0 0.0
      %575 = vmatprep.subr.mxu0 0.0
      %576 = vmatpush1.xpose.msra.mxu0 0.0
      %577 = vmatprep.subr.mxu0 0.0
      %578 = vmatpush1.xpose.msra.mxu0 0.0
      %579 = vmatprep.subr.mxu0 0.0
      %580 = vmatpush1.xpose.msra.mxu0 0.0
      %581 = vmatprep.subr.mxu0 0.0
      %582 = vmatpush1.xpose.msra.mxu0 0.0
      %583 = vmatprep.subr.mxu0 0.0
      %584 = vmatpush1.xpose.msra.mxu0 0.0
      %585 = vmatprep.subr.mxu0 0.0
      %586 = vmatpush1.xpose.msra.mxu0 0.0
      %587 = vmatprep.subr.mxu0 0.0
      %588 = vmatpush1.xpose.msra.mxu0 0.0
      %589 = vmatprep.subr.mxu0 0.0
      %590 = vmatpush1.xpose.msra.mxu0 0.0
      %591 = vmatprep.subr.mxu0 0.0
      %592 = vmatpush1.xpose.msra.mxu0 0.0
      %593 = vmatprep.subr.mxu0 0.0
      %594 = vmatpush1.xpose.msra.mxu0 0.0
      %595 = vmatprep.subr.mxu0 0.0
      %596 = vmatpush1.xpose.msra.mxu0 0.0
      %597 = vmatprep.subr.mxu0 0.0
      %598 = vmatpush1.xpose.msra.mxu0 0.0
      %599 = vmatprep.subr.mxu0 0.0
      %600 = vmatpush1.xpose.msra.mxu0 0.0
      %601 = vmatprep.subr.mxu0 0.0
      %602 = vmatpush1.xpose.msra.mxu0 0.0
      %603 = vmatprep.subr.mxu0 0.0
      %604 = vmatpush1.xpose.msra.mxu0 0.0
      %605 = vmatprep.mubr.f32.mxu0 0.0
      %606 = vmatmul.mubr.f32.gmra.mrb[0].mxu0 %v537
      %v607 = vpop.f32.mrb[0].mxu0
      %v608 = vadd.f32 0.0, %v607
      %v609 = vpop.f32.mrb[0].mxu0
      %610 = vdwg.mxu0
      %v611 = vmul.f32 %v608, 0.35355338
      %vm612 = vcmask 9216
      %v613 = vsel %vm612, %v611, -inf
      %614 = vmax.xlane.f32.xlu0 %v613
      %v615 = vpop.xlane.xlu0 %614
      %v616 = vsub.f32 %v611, %v615
      %v617 = vmul.f32 %v616, 1.442695
      %v618 = vpow.pop %v617
      %v619 = vsel %vm612, %v618, 0.0
      %620 = vadd.xlane.f32.xlu0 %v619
      %v621 = vpop.xlane.xlu0 %620
      %v622 = vrcp.pop %v621
      %v623 = vmul.f32 %v618, %v622
      %625 = vrot.lane.b32.xlu0 %v531, 64
      %v626 = vpop.permute.xlu0 %625
      %vm627 = vcmask 15360
      %v629 = vsel %vm627, %v623, 0
      %vm631 = vcmask 1041408
      %v632 = vsel %vm631, %v626, 0
      %634 = vmatprep.subr.mxu0 0.0
      %635 = vmatpush1.msra.mxu0 %v632
      %636 = vmatprep.subr.mxu0 0.0
      %637 = vmatpush1.msra.mxu0 0.0
      %638 = vmatprep.subr.mxu0 0.0
      %639 = vmatpush1.msra.mxu0 0.0
      %640 = vmatprep.subr.mxu0 0.0
      %641 = vmatpush1.msra.mxu0 0.0
      %642 = vmatprep.subr.mxu0 0.0
      %643 = vmatpush1.msra.mxu0 0.0
      %644 = vmatprep.subr.mxu0 0.0
      %645 = vmatpush1.msra.mxu0 0.0
      %646 = vmatprep.subr.mxu0 0.0
      %647 = vmatpush1.msra.mxu0 0.0
      %648 = vmatprep.subr.mxu0 0.0
      %649 = vmatpush1.msra.mxu0 0.0
      %650 = vmatprep.subr.mxu0 0.0
      %651 = vmatpush1.msra.mxu0 0.0
      %652 = vmatprep.subr.mxu0 0.0
      %653 = vmatpush1.msra.mxu0 0.0
      %654 = vmatprep.subr.mxu0 0.0
      %655 = vmatpush1.msra.mxu0 0.0
      %656 = vmatprep.subr.mxu0 0.0
      %657 = vmatpush1.msra.mxu0 0.0
      %658 = vmatprep.subr.mxu0 0.0
      %659 = vmatpush1.msra.mxu0 0.0
      %660 = vmatprep.subr.mxu0 0.0
      %661 = vmatpush1.msra.mxu0 0.0
      %662 = vmatprep.subr.mxu0 0.0
      %663 = vmatpush1.msra.mxu0 0.0
      %664 = vmatprep.subr.mxu0 0.0
      %665 = vmatpush1.msra.mxu0 0.0
      %666 = vmatprep.subr.mxu0 0.0
      %667 = vmatpush1.msra.mxu0 0.0
      %668 = vmatprep.subr.mxu0 0.0
      %669 = vmatpush1.msra.mxu0 0.0
      %670 = vmatprep.subr.mxu0 0.0
      %671 = vmatpush1.msra.mxu0 0.0
      %672 = vmatprep.subr.mxu0 0.0
      %673 = vmatpush1.msra.mxu0 0.0
      %674 = vmatprep.subr.mxu0 0.0
      %675 = vmatpush1.msra.mxu0 0.0
      %676 = vmatprep.subr.mxu0 0.0
      %677 = vmatpush1.msra.mxu0 0.0
      %678 = vmatprep.subr.mxu0 0.0
      %679 = vmatpush1.msra.mxu0 0.0
      %680 = vmatprep.subr.mxu0 0.0
      %681 = vmatpush1.msra.mxu0 0.0
      %682 = vmatprep.subr.mxu0 0.0
      %683 = vmatpush1.msra.mxu0 0.0
      %684 = vmatprep.subr.mxu0 0.0
      %685 = vmatpush1.msra.mxu0 0.0
      %686 = vmatprep.subr.mxu0 0.0
      %687 = vmatpush1.msra.mxu0 0.0
      %688 = vmatprep.subr.mxu0 0.0
      %689 = vmatpush1.msra.mxu0 0.0
      %690 = vmatprep.subr.mxu0 0.0
      %691 = vmatpush1.msra.mxu0 0.0
      %692 = vmatprep.subr.mxu0 0.0
      %693 = vmatpush1.msra.mxu0 0.0
      %694 = vmatprep.subr.mxu0 0.0
      %695 = vmatpush1.msra.mxu0 0.0
      %696 = vmatprep.subr.mxu0 0.0
      %697 = vmatpush1.msra.mxu0 0.0
      %698 = vmatprep.mubr.f32.mxu0 0.0
      %699 = vmatmul.mubr.f32.gmra.mrb[0].mxu0 %v629
      %v700 = vpop.f32.mrb[0].mxu0
      %v701 = vadd.f32 0.0, %v700
      %v702 = vpop.f32.mrb[0].mxu0
      %703 = vdwg.mxu0
      %704 = vrot.lane.b32.xlu0 %v513, 120
      %v705 = vpop.permute.xlu0 %704
      %706 = vrot.lane.b32.xlu0 %v522, 88
      %v707 = vpop.permute.xlu0 %706
      %v708 = vsel %vm535, %v705, 0
      %v710 = vsel %vm535, %v707, 0
      %712 = vmatprep.subr.mxu0 0.0
      %713 = vmatpush1.xpose.msra.mxu0 %v710
      %714 = vmatprep.subr.mxu0 0.0
      %715 = vmatpush1.xpose.msra.mxu0 0.0
      %716 = vmatprep.subr.mxu0 0.0
      %717 = vmatpush1.xpose.msra.mxu0 0.0
      %718 = vmatprep.subr.mxu0 0.0
      %719 = vmatpush1.xpose.msra.mxu0 0.0
      %720 = vmatprep.subr.mxu0 0.0
      %721 = vmatpush1.xpose.msra.mxu0 0.0
      %722 = vmatprep.subr.mxu0 0.0
      %723 = vmatpush1.xpose.msra.mxu0 0.0
      %724 = vmatprep.subr.mxu0 0.0
      %725 = vmatpush1.xpose.msra.mxu0 0.0
      %726 = vmatprep.subr.mxu0 0.0
      %727 = vmatpush1.xpose.msra.mxu0 0.0
      %728 = vmatprep.subr.mxu0 0.0
      %729 = vmatpush1.xpose.msra.mxu0 0.0
      %730 = vmatprep.subr.mxu0 0.0
      %731 = vmatpush1.xpose.msra.mxu0 0.0
      %732 = vmatprep.subr.mxu0 0.0
      %733 = vmatpush1.xpose.msra.mxu0 0.0
      %734 = vmatprep.subr.mxu0 0.0
      %735 = vmatpush1.xpose.msra.mxu0 0.0
      %736 = vmatprep.subr.mxu0 0.0
      %737 = vmatpush1.xpose.msra.mxu0 0.0
      %738 = vmatprep.subr.mxu0 0.0
      %739 = vmatpush1.xpose.msra.mxu0 0.0
      %740 = vmatprep.subr.mxu0 0.0
      %741 = vmatpush1.xpose.msra.mxu0 0.0
      %742 = vmatprep.subr.mxu0 0.0
      %743 = vmatpush1.xpose.msra.mxu0 0.0
      %744 = vmatprep.subr.mxu0 0.0
      %745 = vmatpush1.xpose.msra.mxu0 0.0
      %746 = vmatprep.subr.mxu0 0.0
      %747 = vmatpush1.xpose.msra.mxu0 0.0
      %748 = vmatprep.subr.mxu0 0.0
      %749 = vmatpush1.xpose.msra.mxu0 0.0
      %750 = vmatprep.subr.mxu0 0.0
      %751 = vmatpush1.xpose.msra.mxu0 0.0
      %752 = vmatprep.subr.mxu0 0.0
      %753 = vmatpush1.xpose.msra.mxu0 0.0
      %754 = vmatprep.subr.mxu0 0.0
      %755 = vmatpush1.xpose.msra.mxu0 0.0
      %756 = vmatprep.subr.mxu0 0.0
      %757 = vmatpush1.xpose.msra.mxu0 0.0
      %758 = vmatprep.subr.mxu0 0.0
      %759 = vmatpush1.xpose.msra.mxu0 0.0
      %760 = vmatprep.subr.mxu0 0.0
      %761 = vmatpush1.xpose.msra.mxu0 0.0
      %762 = vmatprep.subr.mxu0 0.0
      %763 = vmatpush1.xpose.msra.mxu0 0.0
      %764 = vmatprep.subr.mxu0 0.0
      %765 = vmatpush1.xpose.msra.mxu0 0.0
      %766 = vmatprep.subr.mxu0 0.0
      %767 = vmatpush1.xpose.msra.mxu0 0.0
      %768 = vmatprep.subr.mxu0 0.0
      %769 = vmatpush1.xpose.msra.mxu0 0.0
      %770 = vmatprep.subr.mxu0 0.0
      %771 = vmatpush1.xpose.msra.mxu0 0.0
      %772 = vmatprep.subr.mxu0 0.0
      %773 = vmatpush1.xpose.msra.mxu0 0.0
      %774 = vmatprep.subr.mxu0 0.0
      %775 = vmatpush1.xpose.msra.mxu0 0.0
      %776 = vmatprep.mubr.f32.mxu0 0.0
      %777 = vmatmul.mubr.f32.gmra.mrb[0].mxu0 %v708
      %v778 = vpop.f32.mrb[0].mxu0
      %v779 = vadd.f32 0.0, %v778
      %v780 = vpop.f32.mrb[0].mxu0
      %781 = vdwg.mxu0
      %v782 = vmul.f32 %v779, 0.35355338
      %v783 = vsel %vm612, %v782, -inf
      %784 = vmax.xlane.f32.xlu0 %v783
      %v785 = vpop.xlane.xlu0 %784
      %v786 = vsub.f32 %v782, %v785
      %v787 = vmul.f32 %v786, 1.442695
      %v788 = vpow.pop %v787
      %v789 = vsel %vm612, %v788, 0.0
      %790 = vadd.xlane.f32.xlu0 %v789
      %v791 = vpop.xlane.xlu0 %790
      %v792 = vrcp.pop %v791
      %v793 = vmul.f32 %v788, %v792
      %794 = vrot.lane.b32.xlu0 %v531, 56
      %v795 = vpop.permute.xlu0 %794
      %v797 = vsel %vm627, %v793, 0
      %v799 = vsel %vm631, %v795, 0
      %801 = vmatprep.subr.mxu0 0.0
      %802 = vmatpush1.msra.mxu0 %v799
      %803 = vmatprep.subr.mxu0 0.0
      %804 = vmatpush1.msra.mxu0 0.0
      %805 = vmatprep.subr.mxu0 0.0
      %806 = vmatpush1.msra.mxu0 0.0
      %807 = vmatprep.subr.mxu0 0.0
      %808 = vmatpush1.msra.mxu0 0.0
      %809 = vmatprep.subr.mxu0 0.0
      %810 = vmatpush1.msra.mxu0 0.0
      %811 = vmatprep.subr.mxu0 0.0
      %812 = vmatpush1.msra.mxu0 0.0
      %813 = vmatprep.subr.mxu0 0.0
      %814 = vmatpush1.msra.mxu0 0.0
      %815 = vmatprep.subr.mxu0 0.0
      %816 = vmatpush1.msra.mxu0 0.0
      %817 = vmatprep.subr.mxu0 0.0
      %818 = vmatpush1.msra.mxu0 0.0
      %819 = vmatprep.subr.mxu0 0.0
      %820 = vmatpush1.msra.mxu0 0.0
      %821 = vmatprep.subr.mxu0 0.0
      %822 = vmatpush1.msra.mxu0 0.0
      %823 = vmatprep.subr.mxu0 0.0
      %824 = vmatpush1.msra.mxu0 0.0
      %825 = vmatprep.subr.mxu0 0.0
      %826 = vmatpush1.msra.mxu0 0.0
      %827 = vmatprep.subr.mxu0 0.0
      %828 = vmatpush1.msra.mxu0 0.0
      %829 = vmatprep.subr.mxu0 0.0
      %830 = vmatpush1.msra.mxu0 0.0
      %831 = vmatprep.subr.mxu0 0.0
      %832 = vmatpush1.msra.mxu0 0.0
      %833 = vmatprep.subr.mxu0 0.0
      %834 = vmatpush1.msra.mxu0 0.0
      %835 = vmatprep.subr.mxu0 0.0
      %836 = vmatpush1.msra.mxu0 0.0
      %837 = vmatprep.subr.mxu0 0.0
      %838 = vmatpush1.msra.mxu0 0.0
      %839 = vmatprep.subr.mxu0 0.0
      %840 = vmatpush1.msra.mxu0 0.0
      %841 = vmatprep.subr.mxu0 0.0
      %842 = vmatpush1.msra.mxu0 0.0
      %843 = vmatprep.subr.mxu0 0.0
      %844 = vmatpush1.msra.mxu0 0.0
      %845 = vmatprep.subr.mxu0 0.0
      %846 = vmatpush1.msra.mxu0 0.0
      %847 = vmatprep.subr.mxu0 0.0
      %848 = vmatpush1.msra.mxu0 0.0
      %849 = vmatprep.subr.mxu0 0.0
      %850 = vmatpush1.msra.mxu0 0.0
      %851 = vmatprep.subr.mxu0 0.0
      %852 = vmatpush1.msra.mxu0 0.0
      %853 = vmatprep.subr.mxu0 0.0
      %854 = vmatpush1.msra.mxu0 0.0
      %855 = vmatprep.subr.mxu0 0.0
      %856 = vmatpush1.msra.mxu0 0.0
      %857 = vmatprep.subr.mxu0 0.0
      %858 = vmatpush1.msra.mxu0 0.0
      %859 = vmatprep.subr.mxu0 0.0
      %860 = vmatpush1.msra.mxu0 0.0
      %861 = vmatprep.subr.mxu0 0.0
      %862 = vmatpush1.msra.mxu0 0.0
      %863 = vmatprep.subr.mxu0 0.0
      %864 = vmatpush1.msra.mxu0 0.0
      %865 = vmatprep.mubr.f32.mxu0 0.0
      %866 = vmatmul.mubr.f32.gmra.mrb[0].mxu0 %v797
      %v867 = vpop.f32.mrb[0].mxu0
      %v868 = vadd.f32 0.0, %v867
      %v869 = vpop.f32.mrb[0].mxu0
      %870 = vdwg.mxu0
      %871 = vrot.lane.b32.xlu0 %v513, 112
      %v872 = vpop.permute.xlu0 %871
      %873 = vrot.lane.b32.xlu0 %v522, 80
      %v874 = vpop.permute.xlu0 %873
      %v875 = vsel %vm535, %v872, 0
      %v877 = vsel %vm535, %v874, 0
      %879 = vmatprep.subr.mxu0 0.0
      %880 = vmatpush1.xpose.msra.mxu0 %v877
      %881 = vmatprep.subr.mxu0 0.0
      %882 = vmatpush1.xpose.msra.mxu0 0.0
      %883 = vmatprep.subr.mxu0 0.0
      %884 = vmatpush1.xpose.msra.mxu0 0.0
      %885 = vmatprep.subr.mxu0 0.0
      %886 = vmatpush1.xpose.msra.mxu0 0.0
      %887 = vmatprep.subr.mxu0 0.0
      %888 = vmatpush1.xpose.msra.mxu0 0.0
      %889 = vmatprep.subr.mxu0 0.0
      %890 = vmatpush1.xpose.msra.mxu0 0.0
      %891 = vmatprep.subr.mxu0 0.0
      %892 = vmatpush1.xpose.msra.mxu0 0.0
      %893 = vmatprep.subr.mxu0 0.0
      %894 = vmatpush1.xpose.msra.mxu0 0.0
      %895 = vmatprep.subr.mxu0 0.0
      %896 = vmatpush1.xpose.msra.mxu0 0.0
      %897 = vmatprep.subr.mxu0 0.0
      %898 = vmatpush1.xpose.msra.mxu0 0.0
      %899 = vmatprep.subr.mxu0 0.0
      %900 = vmatpush1.xpose.msra.mxu0 0.0
      %901 = vmatprep.subr.mxu0 0.0
      %902 = vmatpush1.xpose.msra.mxu0 0.0
      %903 = vmatprep.subr.mxu0 0.0
      %904 = vmatpush1.xpose.msra.mxu0 0.0
      %905 = vmatprep.subr.mxu0 0.0
      %906 = vmatpush1.xpose.msra.mxu0 0.0
      %907 = vmatprep.subr.mxu0 0.0
      %908 = vmatpush1.xpose.msra.mxu0 0.0
      %909 = vmatprep.subr.mxu0 0.0
      %910 = vmatpush1.xpose.msra.mxu0 0.0
      %911 = vmatprep.subr.mxu0 0.0
      %912 = vmatpush1.xpose.msra.mxu0 0.0
      %913 = vmatprep.subr.mxu0 0.0
      %914 = vmatpush1.xpose.msra.mxu0 0.0
      %915 = vmatprep.subr.mxu0 0.0
      %916 = vmatpush1.xpose.msra.mxu0 0.0
      %917 = vmatprep.subr.mxu0 0.0
      %918 = vmatpush1.xpose.msra.mxu0 0.0
      %919 = vmatprep.subr.mxu0 0.0
      %920 = vmatpush1.xpose.msra.mxu0 0.0
      %921 = vmatprep.subr.mxu0 0.0
      %922 = vmatpush1.xpose.msra.mxu0 0.0
      %923 = vmatprep.subr.mxu0 0.0
      %924 = vmatpush1.xpose.msra.mxu0 0.0
      %925 = vmatprep.subr.mxu0 0.0
      %926 = vmatpush1.xpose.msra.mxu0 0.0
      %927 = vmatprep.subr.mxu0 0.0
      %928 = vmatpush1.xpose.msra.mxu0 0.0
      %929 = vmatprep.subr.mxu0 0.0
      %930 = vmatpush1.xpose.msra.mxu0 0.0
      %931 = vmatprep.subr.mxu0 0.0
      %932 = vmatpush1.xpose.msra.mxu0 0.0
      %933 = vmatprep.subr.mxu0 0.0
      %934 = vmatpush1.xpose.msra.mxu0 0.0
      %935 = vmatprep.subr.mxu0 0.0
      %936 = vmatpush1.xpose.msra.mxu0 0.0
      %937 = vmatprep.subr.mxu0 0.0
      %938 = vmatpush1.xpose.msra.mxu0 0.0
      %939 = vmatprep.subr.mxu0 0.0
      %940 = vmatpush1.xpose.msra.mxu0 0.0
      %941 = vmatprep.subr.mxu0 0.0
      %942 = vmatpush1.xpose.msra.mxu0 0.0
      %943 = vmatprep.mubr.f32.mxu0 0.0
      %944 = vmatmul.mubr.f32.gmra.mrb[0].mxu0 %v875
      %v945 = vpop.f32.mrb[0].mxu0
      %v946 = vadd.f32 0.0, %v945
      %v947 = vpop.f32.mrb[0].mxu0
      %948 = vdwg.mxu0
      %v949 = vmul.f32 %v946, 0.35355338
      %v950 = vsel %vm612, %v949, -inf
      %951 = vmax.xlane.f32.xlu0 %v950
      %v952 = vpop.xlane.xlu0 %951
      %v953 = vsub.f32 %v949, %v952
      %v954 = vmul.f32 %v953, 1.442695
      %v955 = vpow.pop %v954
      %v956 = vsel %vm612, %v955, 0.0
      %957 = vadd.xlane.f32.xlu0 %v956
      %v958 = vpop.xlane.xlu0 %957
      %v959 = vrcp.pop %v958
      %v960 = vmul.f32 %v955, %v959
      %961 = vrot.lane.b32.xlu0 %v531, 48
      %v962 = vpop.permute.xlu0 %961
      %v964 = vsel %vm627, %v960, 0
      %v966 = vsel %vm631, %v962, 0
      %968 = vmatprep.subr.mxu0 0.0
      %969 = vmatpush1.msra.mxu0 %v966
      %970 = vmatprep.subr.mxu0 0.0
      %971 = vmatpush1.msra.mxu0 0.0
      %972 = vmatprep.subr.mxu0 0.0
      %973 = vmatpush1.msra.mxu0 0.0
      %974 = vmatprep.subr.mxu0 0.0
      %975 = vmatpush1.msra.mxu0 0.0
      %976 = vmatprep.subr.mxu0 0.0
      %977 = vmatpush1.msra.mxu0 0.0
      %978 = vmatprep.subr.mxu0 0.0
      %979 = vmatpush1.msra.mxu0 0.0
      %980 = vmatprep.subr.mxu0 0.0
      %981 = vmatpush1.msra.mxu0 0.0
      %982 = vmatprep.subr.mxu0 0.0
      %983 = vmatpush1.msra.mxu0 0.0
      %984 = vmatprep.subr.mxu0 0.0
      %985 = vmatpush1.msra.mxu0 0.0
      %986 = vmatprep.subr.mxu0 0.0
      %987 = vmatpush1.msra.mxu0 0.0
      %988 = vmatprep.subr.mxu0 0.0
      %989 = vmatpush1.msra.mxu0 0.0
      %990 = vmatprep.subr.mxu0 0.0
      %991 = vmatpush1.msra.mxu0 0.0
      %992 = vmatprep.subr.mxu0 0.0
      %993 = vmatpush1.msra.mxu0 0.0
      %994 = vmatprep.subr.mxu0 0.0
      %995 = vmatpush1.msra.mxu0 0.0
      %996 = vmatprep.subr.mxu0 0.0
      %997 = vmatpush1.msra.mxu0 0.0
      %998 = vmatprep.subr.mxu0 0.0
      %999 = vmatpush1.msra.mxu0 0.0
      %1000 = vmatprep.subr.mxu0 0.0
      %1001 = vmatpush1.msra.mxu0 0.0
      %1002 = vmatprep.subr.mxu0 0.0
      %1003 = vmatpush1.msra.mxu0 0.0
      %1004 = vmatprep.subr.mxu0 0.0
      %1005 = vmatpush1.msra.mxu0 0.0
      %1006 = vmatprep.subr.mxu0 0.0
      %1007 = vmatpush1.msra.mxu0 0.0
      %1008 = vmatprep.subr.mxu0 0.0
      %1009 = vmatpush1.msra.mxu0 0.0
      %1010 = vmatprep.subr.mxu0 0.0
      %1011 = vmatpush1.msra.mxu0 0.0
      %1012 = vmatprep.subr.mxu0 0.0
      %1013 = vmatpush1.msra.mxu0 0.0
      %1014 = vmatprep.subr.mxu0 0.0
      %1015 = vmatpush1.msra.mxu0 0.0
      %1016 = vmatprep.subr.mxu0 0.0
      %1017 = vmatpush1.msra.mxu0 0.0
      %1018 = vmatprep.subr.mxu0 0.0
      %1019 = vmatpush1.msra.mxu0 0.0
      %1020 = vmatprep.subr.mxu0 0.0
      %1021 = vmatpush1.msra.mxu0 0.0
      %1022 = vmatprep.subr.mxu0 0.0
      %1023 = vmatpush1.msra.mxu0 0.0
      %1024 = vmatprep.subr.mxu0 0.0
      %1025 = vmatpush1.msra.mxu0 0.0
      %1026 = vmatprep.subr.mxu0 0.0
      %1027 = vmatpush1.msra.mxu0 0.0
      %1028 = vmatprep.subr.mxu0 0.0
      %1029 = vmatpush1.msra.mxu0 0.0
      %1030 = vmatprep.subr.mxu0 0.0
      %1031 = vmatpush1.msra.mxu0 0.0
      %1032 = vmatprep.mubr.f32.mxu0 0.0
      %1033 = vmatmul.mubr.f32.gmra.mrb[0].mxu0 %v964
      %v1034 = vpop.f32.mrb[0].mxu0
      %v1035 = vadd.f32 0.0, %v1034
      %v1036 = vpop.f32.mrb[0].mxu0
      %1037 = vdwg.mxu0
      %1038 = vrot.lane.b32.xlu0 %v513, 104
      %v1039 = vpop.permute.xlu0 %1038
      %1040 = vrot.lane.b32.xlu0 %v522, 72
      %v1041 = vpop.permute.xlu0 %1040
      %v1042 = vsel %vm535, %v1039, 0
      %v1044 = vsel %vm535, %v1041, 0
      %1046 = vmatprep.subr.mxu0 0.0
      %1047 = vmatpush1.xpose.msra.mxu0 %v1044
      %1048 = vmatprep.subr.mxu0 0.0
      %1049 = vmatpush1.xpose.msra.mxu0 0.0
      %1050 = vmatprep.subr.mxu0 0.0
      %1051 = vmatpush1.xpose.msra.mxu0 0.0
      %1052 = vmatprep.subr.mxu0 0.0
      %1053 = vmatpush1.xpose.msra.mxu0 0.0
      %1054 = vmatprep.subr.mxu0 0.0
      %1055 = vmatpush1.xpose.msra.mxu0 0.0
      %1056 = vmatprep.subr.mxu0 0.0
      %1057 = vmatpush1.xpose.msra.mxu0 0.0
      %1058 = vmatprep.subr.mxu0 0.0
      %1059 = vmatpush1.xpose.msra.mxu0 0.0
      %1060 = vmatprep.subr.mxu0 0.0
      %1061 = vmatpush1.xpose.msra.mxu0 0.0
      %1062 = vmatprep.subr.mxu0 0.0
      %1063 = vmatpush1.xpose.msra.mxu0 0.0
      %1064 = vmatprep.subr.mxu0 0.0
      %1065 = vmatpush1.xpose.msra.mxu0 0.0
      %1066 = vmatprep.subr.mxu0 0.0
      %1067 = vmatpush1.xpose.msra.mxu0 0.0
      %1068 = vmatprep.subr.mxu0 0.0
      %1069 = vmatpush1.xpose.msra.mxu0 0.0
      %1070 = vmatprep.subr.mxu0 0.0
      %1071 = vmatpush1.xpose.msra.mxu0 0.0
      %1072 = vmatprep.subr.mxu0 0.0
      %1073 = vmatpush1.xpose.msra.mxu0 0.0
      %1074 = vmatprep.subr.mxu0 0.0
      %1075 = vmatpush1.xpose.msra.mxu0 0.0
      %1076 = vmatprep.subr.mxu0 0.0
      %1077 = vmatpush1.xpose.msra.mxu0 0.0
      %1078 = vmatprep.subr.mxu0 0.0
      %1079 = vmatpush1.xpose.msra.mxu0 0.0
      %1080 = vmatprep.subr.mxu0 0.0
      %1081 = vmatpush1.xpose.msra.mxu0 0.0
      %1082 = vmatprep.subr.mxu0 0.0
      %1083 = vmatpush1.xpose.msra.mxu0 0.0
      %1084 = vmatprep.subr.mxu0 0.0
      %1085 = vmatpush1.xpose.msra.mxu0 0.0
      %1086 = vmatprep.subr.mxu0 0.0
      %1087 = vmatpush1.xpose.msra.mxu0 0.0
      %1088 = vmatprep.subr.mxu0 0.0
      %1089 = vmatpush1.xpose.msra.mxu0 0.0
      %1090 = vmatprep.subr.mxu0 0.0
      %1091 = vmatpush1.xpose.msra.mxu0 0.0
      %1092 = vmatprep.subr.mxu0 0.0
      %1093 = vmatpush1.xpose.msra.mxu0 0.0
      %1094 = vmatprep.subr.mxu0 0.0
      %1095 = vmatpush1.xpose.msra.mxu0 0.0
      %1096 = vmatprep.subr.mxu0 0.0
      %1097 = vmatpush1.xpose.msra.mxu0 0.0
      %1098 = vmatprep.subr.mxu0 0.0
      %1099 = vmatpush1.xpose.msra.mxu0 0.0
      %1100 = vmatprep.subr.mxu0 0.0
      %1101 = vmatpush1.xpose.msra.mxu0 0.0
      %1102 = vmatprep.subr.mxu0 0.0
      %1103 = vmatpush1.xpose.msra.mxu0 0.0
      %1104 = vmatprep.subr.mxu0 0.0
      %1105 = vmatpush1.xpose.msra.mxu0 0.0
      %1106 = vmatprep.subr.mxu0 0.0
      %1107 = vmatpush1.xpose.msra.mxu0 0.0
      %1108 = vmatprep.subr.mxu0 0.0
      %1109 = vmatpush1.xpose.msra.mxu0 0.0
      %1110 = vmatprep.mubr.f32.mxu0 0.0
      %1111 = vmatmul.mubr.f32.gmra.mrb[0].mxu0 %v1042
      %v1112 = vpop.f32.mrb[0].mxu0
      %v1113 = vadd.f32 0.0, %v1112
      %v1114 = vpop.f32.mrb[0].mxu0
      %1115 = vdwg.mxu0
      %v1116 = vmul.f32 %v1113, 0.35355338
      %v1117 = vsel %vm612, %v1116, -inf
      %1118 = vmax.xlane.f32.xlu0 %v1117
      %v1119 = vpop.xlane.xlu0 %1118
      %v1120 = vsub.f32 %v1116, %v1119
      %v1121 = vmul.f32 %v1120, 1.442695
      %v1122 = vpow.pop %v1121
      %v1123 = vsel %vm612, %v1122, 0.0
      %1124 = vadd.xlane.f32.xlu0 %v1123
      %v1125 = vpop.xlane.xlu0 %1124
      %v1126 = vrcp.pop %v1125
      %v1127 = vmul.f32 %v1122, %v1126
      %1128 = vrot.lane.b32.xlu0 %v531, 40
      %v1129 = vpop.permute.xlu0 %1128
      %v1131 = vsel %vm627, %v1127, 0
      %v1133 = vsel %vm631, %v1129, 0
      %1135 = vmatprep.subr.mxu0 0.0
      %1136 = vmatpush1.msra.mxu0 %v1133
      %1137 = vmatprep.subr.mxu0 0.0
      %1138 = vmatpush1.msra.mxu0 0.0
      %1139 = vmatprep.subr.mxu0 0.0
      %1140 = vmatpush1.msra.mxu0 0.0
      %1141 = vmatprep.subr.mxu0 0.0
      %1142 = vmatpush1.msra.mxu0 0.0
      %1143 = vmatprep.subr.mxu0 0.0
      %1144 = vmatpush1.msra.mxu0 0.0
      %1145 = vmatprep.subr.mxu0 0.0
      %1146 = vmatpush1.msra.mxu0 0.0
      %1147 = vmatprep.subr.mxu0 0.0
      %1148 = vmatpush1.msra.mxu0 0.0
      %1149 = vmatprep.subr.mxu0 0.0
      %1150 = vmatpush1.msra.mxu0 0.0
      %1151 = vmatprep.subr.mxu0 0.0
      %1152 = vmatpush1.msra.mxu0 0.0
      %1153 = vmatprep.subr.mxu0 0.0
      %1154 = vmatpush1.msra.mxu0 0.0
      %1155 = vmatprep.subr.mxu0 0.0
      %1156 = vmatpush1.msra.mxu0 0.0
      %1157 = vmatprep.subr.mxu0 0.0
      %1158 = vmatpush1.msra.mxu0 0.0
      %1159 = vmatprep.subr.mxu0 0.0
      %1160 = vmatpush1.msra.mxu0 0.0
      %1161 = vmatprep.subr.mxu0 0.0
      %1162 = vmatpush1.msra.mxu0 0.0
      %1163 = vmatprep.subr.mxu0 0.0
      %1164 = vmatpush1.msra.mxu0 0.0
      %1165 = vmatprep.subr.mxu0 0.0
      %1166 = vmatpush1.msra.mxu0 0.0
      %1167 = vmatprep.subr.mxu0 0.0
      %1168 = vmatpush1.msra.mxu0 0.0
      %1169 = vmatprep.subr.mxu0 0.0
      %1170 = vmatpush1.msra.mxu0 0.0
      %1171 = vmatprep.subr.mxu0 0.0
      %1172 = vmatpush1.msra.mxu0 0.0
      %1173 = vmatprep.subr.mxu0 0.0
      %1174 = vmatpush1.msra.mxu0 0.0
      %1175 = vmatprep.subr.mxu0 0.0
      %1176 = vmatpush1.msra.mxu0 0.0
      %1177 = vmatprep.subr.mxu0 0.0
      %1178 = vmatpush1.msra.mxu0 0.0
      %1179 = vmatprep.subr.mxu0 0.0
      %1180 = vmatpush1.msra.mxu0 0.0
      %1181 = vmatprep.subr.mxu0 0.0
      %1182 = vmatpush1.msra.mxu0 0.0
      %1183 = vmatprep.subr.mxu0 0.0
      %1184 = vmatpush1.msra.mxu0 0.0
      %1185 = vmatprep.subr.mxu0 0.0
      %1186 = vmatpush1.msra.mxu0 0.0
      %1187 = vmatprep.subr.mxu0 0.0
      %1188 = vmatpush1.msra.mxu0 0.0
      %1189 = vmatprep.subr.mxu0 0.0
      %1190 = vmatpush1.msra.mxu0 0.0
      %1191 = vmatprep.subr.mxu0 0.0
      %1192 = vmatpush1.msra.mxu0 0.0
      %1193 = vmatprep.subr.mxu0 0.0
      %1194 = vmatpush1.msra.mxu0 0.0
      %1195 = vmatprep.subr.mxu0 0.0
      %1196 = vmatpush1.msra.mxu0 0.0
      %1197 = vmatprep.subr.mxu0 0.0
      %1198 = vmatpush1.msra.mxu0 0.0
      %1199 = vmatprep.mubr.f32.mxu0 0.0
      %1200 = vmatmul.mubr.f32.gmra.mrb[0].mxu0 %v1131
      %v1201 = vpop.f32.mrb[0].mxu0
      %v1202 = vadd.f32 0.0, %v1201
      %v1203 = vpop.f32.mrb[0].mxu0
      %1204 = vdwg.mxu0
      %1206 = vrot.lane.b32.xlu0 %v868, 8
      %v1207 = vpop.permute.xlu0 %1206
      %1210 = vrot.lane.b32.xlu0 %v1035, 16
      %v1211 = vpop.permute.xlu0 %1210
      %1214 = vrot.lane.b32.xlu0 %v1202, 24
      %v1215 = vpop.permute.xlu0 %1214
      %v1217 = vsel %vm535, %v701, %v1207
      %vm1218 = vcmask 130048
      %v1219 = vsel %vm1218, %v1217, %v1211
      %vm1220 = vcmask 195584
      %v1221 = vsel %vm1220, %v1219, %v1215
      %v1222 = vld [vmem:[%s4] sm:$0xff]
      %v1223 = vld [vmem:[%s4 + $0x8] sm:$0xff]
      %v1224 = vld [vmem:[%s4 + $0x10] sm:$0xff]
      %v1225 = vld [vmem:[%s4 + $0x18] sm:$0xff]
      %v1226 = vlaneseq
      %v1227 = vshrl.u32 %v1226, 7
      %v1228 = vsub.s32 3, %v1227
      %v1229 = vrot.slane %v428, %v1228
      %v1231 = vsel %vm435, %v1221, 0
      %1233 = vmatprep.subr.mxu0 0.0
      %1234 = vmatpush1.msra.mxu0 %v1222
      %1235 = vmatprep.subr.mxu0 0.0
      %1236 = vmatpush1.msra.mxu0 %v1223
      %1237 = vmatprep.subr.mxu0 0.0
      %1238 = vmatpush1.msra.mxu0 %v1224
      %1239 = vmatprep.subr.mxu0 0.0
      %1240 = vmatpush1.msra.mxu0 %v1225
      %1241 = vmatprep.subr.mxu0 0.0
      %1242 = vmatpush1.msra.mxu0 0.0
      %1243 = vmatprep.subr.mxu0 0.0
      %1244 = vmatpush1.msra.mxu0 0.0
      %1245 = vmatprep.subr.mxu0 0.0
      %1246 = vmatpush1.msra.mxu0 0.0
      %1247 = vmatprep.subr.mxu0 0.0
      %1248 = vmatpush1.msra.mxu0 0.0
      %1249 = vmatprep.subr.mxu0 0.0
      %1250 = vmatpush1.msra.mxu0 0.0
      %1251 = vmatprep.subr.mxu0 0.0
      %1252 = vmatpush1.msra.mxu0 0.0
      %1253 = vmatprep.subr.mxu0 0.0
      %1254 = vmatpush1.msra.mxu0 0.0
      %1255 = vmatprep.subr.mxu0 0.0
      %1256 = vmatpush1.msra.mxu0 0.0
      %1257 = vmatprep.subr.mxu0 0.0
      %1258 = vmatpush1.msra.mxu0 0.0
      %1259 = vmatprep.subr.mxu0 0.0
      %1260 = vmatpush1.msra.mxu0 0.0
      %1261 = vmatprep.subr.mxu0 0.0
      %1262 = vmatpush1.msra.mxu0 0.0
      %1263 = vmatprep.subr.mxu0 0.0
      %1264 = vmatpush1.msra.mxu0 0.0
      %1265 = vmatprep.subr.mxu0 0.0
      %1266 = vmatpush1.msra.mxu0 0.0
      %1267 = vmatprep.subr.mxu0 0.0
      %1268 = vmatpush1.msra.mxu0 0.0
      %1269 = vmatprep.subr.mxu0 0.0
      %1270 = vmatpush1.msra.mxu0 0.0
      %1271 = vmatprep.subr.mxu0 0.0
      %1272 = vmatpush1.msra.mxu0 0.0
      %1273 = vmatprep.subr.mxu0 0.0
      %1274 = vmatpush1.msra.mxu0 0.0
      %1275 = vmatprep.subr.mxu0 0.0
      %1276 = vmatpush1.msra.mxu0 0.0
      %1277 = vmatprep.subr.mxu0 0.0
      %1278 = vmatpush1.msra.mxu0 0.0
      %1279 = vmatprep.subr.mxu0 0.0
      %1280 = vmatpush1.msra.mxu0 0.0
      %1281 = vmatprep.subr.mxu0 0.0
      %1282 = vmatpush1.msra.mxu0 0.0
      %1283 = vmatprep.subr.mxu0 0.0
      %1284 = vmatpush1.msra.mxu0 0.0
      %1285 = vmatprep.subr.mxu0 0.0
      %1286 = vmatpush1.msra.mxu0 0.0
      %1287 = vmatprep.subr.mxu0 0.0
      %1288 = vmatpush1.msra.mxu0 0.0
      %1289 = vmatprep.subr.mxu0 0.0
      %1290 = vmatpush1.msra.mxu0 0.0
      %1291 = vmatprep.subr.mxu0 0.0
      %1292 = vmatpush1.msra.mxu0 0.0
      %1293 = vmatprep.subr.mxu0 0.0
      %1294 = vmatpush1.msra.mxu0 0.0
      %1295 = vmatprep.subr.mxu0 0.0
      %1296 = vmatpush1.msra.mxu0 0.0
      %1297 = vmatprep.mubr.f32.mxu0 0.0
      %1298 = vmatmul.mubr.f32.gmra.mrb[0].mxu0 %v1231
      %v1299 = vpop.f32.mrb[0].mxu0
      %v1300 = vadd.f32 %v1229, %v1299
      %v1301 = vpop.f32.mrb[0].mxu0
      %1302 = vdwg.mxu0
      %v1303 = vadd.f32 %v427, %v1300
      %vm1304 = vcmask 254976
      %v1305 = vsel %vm1304, %v1303, 0.0
      %1306 = vadd.xlane.f32.xlu0 %v1305
      %v1307 = vpop.xlane.xlu0 %1306
      %v1308 = vrcp.pop 32.0
      %v1309 = vmul.f32 %v1307, %v1308
      %v1310 = vsub.f32 %v1303, %v1309
      %v1311 = vmul.f32 %v1310, %v1310
      %v1312 = vsel %vm1304, %v1311, 0.0
      %1313 = vadd.xlane.f32.xlu0 %v1312
      %v1314 = vpop.xlane.xlu0 %1313
      %v1315 = vmul.f32 %v1314, %v1308
      %v1316 = vadd.f32 %v1315, 1e-05
      %v1317 = vrsqrt.pop %v1316
      %v1318 = vmul.f32 %v1310, %v1317
      %v1319 = vlaneseq
      %v1320 = vshrl.u32 %v1319, 7
      %v1321 = vsub.s32 5, %v1320
      %v1322 = vrot.slane %v428, %v1321
      %v1323 = vmul.f32 %v1318, %v1322
      %v1324 = vlaneseq
      %v1325 = vshrl.u32 %v1324, 7
      %v1326 = vsub.s32 6, %v1325
      %v1327 = vrot.slane %v428, %v1326
      %v1328 = vadd.f32 %v1323, %v1327
      %v1329 = vld [vmem:[%s5] sm:$0xff]
      %v1330 = vld [vmem:[%s5 + $0x8] sm:$0xff]
      %v1331 = vld [vmem:[%s5 + $0x10] sm:$0xff]
      %v1332 = vld [vmem:[%s5 + $0x18] sm:$0xff]
      %v1334 = vlaneseq
      %v1335 = vshrl.u32 %v1334, 7
      %v1336 = vsub.s32 0, %v1335
      %v1337 = vrot.slane %v430, %v1336
      %v1340 = vsel %vm435, %v1328, 0
      %1342 = vmatprep.subr.mxu0 0.0
      %1343 = vmatpush1.msra.mxu0 %v1329
      %1344 = vmatprep.subr.mxu0 0.0
      %1345 = vmatpush1.msra.mxu0 %v1330
      %1346 = vmatprep.subr.mxu0 0.0
      %1347 = vmatpush1.msra.mxu0 %v1331
      %1348 = vmatprep.subr.mxu0 0.0
      %1349 = vmatpush1.msra.mxu0 %v1332
      %1350 = vmatprep.subr.mxu0 0.0
      %1351 = vmatpush1.msra.mxu0 0.0
      %1352 = vmatprep.subr.mxu0 0.0
      %1353 = vmatpush1.msra.mxu0 0.0
      %1354 = vmatprep.subr.mxu0 0.0
      %1355 = vmatpush1.msra.mxu0 0.0
      %1356 = vmatprep.subr.mxu0 0.0
      %1357 = vmatpush1.msra.mxu0 0.0
      %1358 = vmatprep.subr.mxu0 0.0
      %1359 = vmatpush1.msra.mxu0 0.0
      %1360 = vmatprep.subr.mxu0 0.0
      %1361 = vmatpush1.msra.mxu0 0.0
      %1362 = vmatprep.subr.mxu0 0.0
      %1363 = vmatpush1.msra.mxu0 0.0
      %1364 = vmatprep.subr.mxu0 0.0
      %1365 = vmatpush1.msra.mxu0 0.0
      %1366 = vmatprep.subr.mxu0 0.0
      %1367 = vmatpush1.msra.mxu0 0.0
      %1368 = vmatprep.subr.mxu0 0.0
      %1369 = vmatpush1.msra.mxu0 0.0
      %1370 = vmatprep.subr.mxu0 0.0
      %1371 = vmatpush1.msra.mxu0 0.0
      %1372 = vmatprep.subr.mxu0 0.0
      %1373 = vmatpush1.msra.mxu0 0.0
      %1374 = vmatprep.subr.mxu0 0.0
      %1375 = vmatpush1.msra.mxu0 0.0
      %1376 = vmatprep.subr.mxu0 0.0
      %1377 = vmatpush1.msra.mxu0 0.0
      %1378 = vmatprep.subr.mxu0 0.0
      %1379 = vmatpush1.msra.mxu0 0.0
      %1380 = vmatprep.subr.mxu0 0.0
      %1381 = vmatpush1.msra.mxu0 0.0
      %1382 = vmatprep.subr.mxu0 0.0
      %1383 = vmatpush1.msra.mxu0 0.0
      %1384 = vmatprep.subr.mxu0 0.0
      %1385 = vmatpush1.msra.mxu0 0.0
      %1386 = vmatprep.subr.mxu0 0.0
      %1387 = vmatpush1.msra.mxu0 0.0
      %1388 = vmatprep.subr.mxu0 0.0
      %1389 = vmatpush1.msra.mxu0 0.0
      %1390 = vmatprep.subr.mxu0 0.0
      %1391 = vmatpush1.msra.mxu0 0.0
      %1392 = vmatprep.subr.mxu0 0.0
      %1393 = vmatpush1.msra.mxu0 0.0
      %1394 = vmatprep.subr.mxu0 0.0
      %1395 = vmatpush1.msra.mxu0 0.0
      %1396 = vmatprep.subr.mxu0 0.0
      %1397 = vmatpush1.msra.mxu0 0.0
      %1398 = vmatprep.subr.mxu0 0.0
      %1399 = vmatpush1.msra.mxu0 0.0
      %1400 = vmatprep.subr.mxu0 0.0
      %1401 = vmatpush1.msra.mxu0 0.0
      %1402 = vmatprep.subr.mxu0 0.0
      %1403 = vmatpush1.msra.mxu0 0.0
      %1404 = vmatprep.subr.mxu0 0.0
      %1405 = vmatpush1.msra.mxu0 0.0
      %1406 = vmatprep.mubr.f32.mxu0 0.0
      %1407 = vmatmul.mubr.f32.gmra.mrb[0].mxu0 %v1340
      %v1408 = vpop.f32.mrb[0].mxu0
      %v1409 = vadd.f32 %v1337, %v1408
      %v1410 = vpop.f32.mrb[0].mxu0
      %1411 = vdwg.mxu0
      %v1412 = vmax.f32 %v1409, 0.0
      %v1413 = vld [vmem:[%s6] sm:$0xff]
      %v1414 = vld [vmem:[%s6 + $0x8] sm:$0xff]
      %v1415 = vld [vmem:[%s6 + $0x10] sm:$0xff]
      %v1416 = vld [vmem:[%s6 + $0x18] sm:$0xff]
      %v1417 = vld [vmem:[%s6 + $0x20] sm:$0xff]
      %v1418 = vld [vmem:[%s6 + $0x28] sm:$0xff]
      %v1419 = vld [vmem:[%s6 + $0x30] sm:$0xff]
      %v1420 = vld [vmem:[%s6 + $0x38] sm:$0xff]
      %v1421 = vlaneseq
      %v1422 = vshrl.u32 %v1421, 7
      %v1423 = vsub.s32 4, %v1422
      %v1424 = vrot.slane %v428, %v1423
      %vm1425 = vcmask 523264
      %v1427 = vsel %vm1425, %v1412, 0
      %1429 = vmatprep.subr.mxu0 0.0
      %1430 = vmatpush1.msra.mxu0 %v1413
      %1431 = vmatprep.subr.mxu0 0.0
      %1432 = vmatpush1.msra.mxu0 %v1414
      %1433 = vmatprep.subr.mxu0 0.0
      %1434 = vmatpush1.msra.mxu0 %v1415
      %1435 = vmatprep.subr.mxu0 0.0
      %1436 = vmatpush1.msra.mxu0 %v1416
      %1437 = vmatprep.subr.mxu0 0.0
      %1438 = vmatpush1.msra.mxu0 %v1417
      %1439 = vmatprep.subr.mxu0 0.0
      %1440 = vmatpush1.msra.mxu0 %v1418
      %1441 = vmatprep.subr.mxu0 0.0
      %1442 = vmatpush1.msra.mxu0 %v1419
      %1443 = vmatprep.subr.mxu0 0.0
      %1444 = vmatpush1.msra.mxu0 %v1420
      %1445 = vmatprep.subr.mxu0 0.0
      %1446 = vmatpush1.msra.mxu0 0.0
      %1447 = vmatprep.subr.mxu0 0.0
      %1448 = vmatpush1.msra.mxu0 0.0
      %1449 = vmatprep.subr.mxu0 0.0
      %1450 = vmatpush1.msra.mxu0 0.0
      %1451 = vmatprep.subr.mxu0 0.0
      %1452 = vmatpush1.msra.mxu0 0.0
      %1453 = vmatprep.subr.mxu0 0.0
      %1454 = vmatpush1.msra.mxu0 0.0
      %1455 = vmatprep.subr.mxu0 0.0
      %1456 = vmatpush1.msra.mxu0 0.0
      %1457 = vmatprep.subr.mxu0 0.0
      %1458 = vmatpush1.msra.mxu0 0.0
      %1459 = vmatprep.subr.mxu0 0.0
      %1460 = vmatpush1.msra.mxu0 0.0
      %1461 = vmatprep.subr.mxu0 0.0
      %1462 = vmatpush1.msra.mxu0 0.0
      %1463 = vmatprep.subr.mxu0 0.0
      %1464 = vmatpush1.msra.mxu0 0.0
      %1465 = vmatprep.subr.mxu0 0.0
      %1466 = vmatpush1.msra.mxu0 0.0
      %1467 = vmatprep.subr.mxu0 0.0
      %1468 = vmatpush1.msra.mxu0 0.0
      %1469 = vmatprep.subr.mxu0 0.0
      %1470 = vmatpush1.msra.mxu0 0.0
      %1471 = vmatprep.subr.mxu0 0.0
      %1472 = vmatpush1.msra.mxu0 0.0
      %1473 = vmatprep.subr.mxu0 0.0
      %1474 = vmatpush1.msra.mxu0 0.0
      %1475 = vmatprep.subr.mxu0 0.0
      %1476 = vmatpush1.msra.mxu0 0.0
      %1477 = vmatprep.subr.mxu0 0.0
      %1478 = vmatpush1.msra.mxu0 0.0
      %1479 = vmatprep.subr.mxu0 0.0
      %1480 = vmatpush1.msra.mxu0 0.0
      %1481 = vmatprep.subr.mxu0 0.0
      %1482 = vmatpush1.msra.mxu0 0.0
      %1483 = vmatprep.subr.mxu0 0.0
      %1484 = vmatpush1.msra.mxu0 0.0
      %1485 = vmatprep.subr.mxu0 0.0
      %1486 = vmatpush1.msra.mxu0 0.0
      %1487 = vmatprep.subr.mxu0 0.0
      %1488 = vmatpush1.msra.mxu0 0.0
      %1489 = vmatprep.subr.mxu0 0.0
      %1490 = vmatpush1.msra.mxu0 0.0
      %1491 = vmatprep.subr.mxu0 0.0
      %1492 = vmatpush1.msra.mxu0 0.0
      %1493 = vmatprep.mubr.f32.mxu0 0.0
      %1494 = vmatmul.mubr.f32.gmra.mrb[0].mxu0 %v1427
      %v1495 = vpop.f32.mrb[0].mxu0
      %v1496 = vadd.f32 %v1424, %v1495
      %v1497 = vpop.f32.mrb[0].mxu0
      %1498 = vdwg.mxu0
      %v1499 = vadd.f32 %v1328, %v1496
      %v1500 = vsel %vm1304, %v1499, 0.0
      %1501 = vadd.xlane.f32.xlu0 %v1500
      %v1502 = vpop.xlane.xlu0 %1501
      %v1503 = vmul.f32 %v1502, %v1308
      %v1504 = vsub.f32 %v1499, %v1503
      %v1505 = vmul.f32 %v1504, %v1504
      %v1506 = vsel %vm1304, %v1505, 0.0
      %1507 = vadd.xlane.f32.xlu0 %v1506
      %v1508 = vpop.xlane.xlu0 %1507
      %v1509 = vmul.f32 %v1508, %v1308
      %v1510 = vadd.f32 %v1509, 1e-05
      %v1511 = vrsqrt.pop %v1510
      %v1512 = vmul.f32 %v1504, %v1511
      %v1513 = vlaneseq
      %v1514 = vshrl.u32 %v1513, 7
      %v1515 = vsub.s32 7, %v1514
      %v1516 = vrot.slane %v428, %v1515
      %v1517 = vmul.f32 %v1512, %v1516
      %v1518 = vlaneseq
      %v1519 = vshrl.u32 %v1518, 7
      %v1520 = vsub.s32 0, %v1519
      %v1521 = vrot.slane %v429, %v1520
      %v1522 = vadd.f32 %v1517, %v1521
      %s1523 = scalar_lea.vmem %s7, 16
      %v1524 = vld [vmem:[%s1523] sm:$0xff]
      %v1525 = vld [vmem:[%s1523 + $0x8] sm:$0x1]
      %s1526 = scalar_lea.vmem %s8, 1
      %v1527 = vld [vmem:[%s1526] sm:$0x1]
      %s1528 = scalar_lea.vmem %s3, 32
      %v1529 = vld [vmem:[%s1528] sm:$0xff]
      %v1530 = vld [vmem:[%s1528 + $0x8] sm:$0xff]
      %v1531 = vld [vmem:[%s1528 + $0x10] sm:$0xff]
      %v1532 = vld [vmem:[%s1528 + $0x18] sm:$0xff]
      %v1534 = vsel %vm435, %v1522, 0
      %1536 = vmatprep.subr.mxu0 0.0
      %1537 = vmatpush1.msra.mxu0 %v1529
      %1538 = vmatprep.subr.mxu0 0.0
      %1539 = vmatpush1.msra.mxu0 %v1530
      %1540 = vmatprep.subr.mxu0 0.0
      %1541 = vmatpush1.msra.mxu0 %v1531
      %1542 = vmatprep.subr.mxu0 0.0
      %1543 = vmatpush1.msra.mxu0 %v1532
      %1544 = vmatprep.subr.mxu0 0.0
      %1545 = vmatpush1.msra.mxu0 0.0
      %1546 = vmatprep.subr.mxu0 0.0
      %1547 = vmatpush1.msra.mxu0 0.0
      %1548 = vmatprep.subr.mxu0 0.0
      %1549 = vmatpush1.msra.mxu0 0.0
      %1550 = vmatprep.subr.mxu0 0.0
      %1551 = vmatpush1.msra.mxu0 0.0
      %1552 = vmatprep.subr.mxu0 0.0
      %1553 = vmatpush1.msra.mxu0 0.0
      %1554 = vmatprep.subr.mxu0 0.0
      %1555 = vmatpush1.msra.mxu0 0.0
      %1556 = vmatprep.subr.mxu0 0.0
      %1557 = vmatpush1.msra.mxu0 0.0
      %1558 = vmatprep.subr.mxu0 0.0
      %1559 = vmatpush1.msra.mxu0 0.0
      %1560 = vmatprep.subr.mxu0 0.0
      %1561 = vmatpush1.msra.mxu0 0.0
      %1562 = vmatprep.subr.mxu0 0.0
      %1563 = vmatpush1.msra.mxu0 0.0
      %1564 = vmatprep.subr.mxu0 0.0
      %1565 = vmatpush1.msra.mxu0 0.0
      %1566 = vmatprep.subr.mxu0 0.0
      %1567 = vmatpush1.msra.mxu0 0.0
      %1568 = vmatprep.subr.mxu0 0.0
      %1569 = vmatpush1.msra.mxu0 0.0
      %1570 = vmatprep.subr.mxu0 0.0
      %1571 = vmatpush1.msra.mxu0 0.0
      %1572 = vmatprep.subr.mxu0 0.0
      %1573 = vmatpush1.msra.mxu0 0.0
      %1574 = vmatprep.subr.mxu0 0.0
      %1575 = vmatpush1.msra.mxu0 0.0
      %1576 = vmatprep.subr.mxu0 0.0
      %1577 = vmatpush1.msra.mxu0 0.0
      %1578 = vmatprep.subr.mxu0 0.0
      %1579 = vmatpush1.msra.mxu0 0.0
      %1580 = vmatprep.subr.mxu0 0.0
      %1581 = vmatpush1.msra.mxu0 0.0
      %1582 = vmatprep.subr.mxu0 0.0
      %1583 = vmatpush1.msra.mxu0 0.0
      %1584 = vmatprep.subr.mxu0 0.0
      %1585 = vmatpush1.msra.mxu0 0.0
      %1586 = vmatprep.subr.mxu0 0.0
      %1587 = vmatpush1.msra.mxu0 0.0
      %1588 = vmatprep.subr.mxu0 0.0
      %1589 = vmatpush1.msra.mxu0 0.0
      %1590 = vmatprep.subr.mxu0 0.0
      %1591 = vmatpush1.msra.mxu0 0.0
      %1592 = vmatprep.subr.mxu0 0.0
      %1593 = vmatpush1.msra.mxu0 0.0
      %1594 = vmatprep.subr.mxu0 0.0
      %1595 = vmatpush1.msra.mxu0 0.0
      %1596 = vmatprep.subr.mxu0 0.0
      %1597 = vmatpush1.msra.mxu0 0.0
      %1598 = vmatprep.subr.mxu0 0.0
      %1599 = vmatpush1.msra.mxu0 0.0
      %1600 = vmatprep.mubr.f32.mxu0 0.0
      %1601 = vmatmul.mubr.f32.gmra.mrb[0].mxu0 %v1534
      %v1602 = vpop.f32.mrb[0].mxu0
      %v1603 = vadd.f32 0.0, %v1602
      %v1604 = vpop.f32.mrb[0].mxu0
      %1605 = vdwg.mxu0
      %v1606 = vlaneseq
      %v1607 = vshrl.u32 %v1606, 7
      %v1608 = vsub.s32 0, %v1607
      %v1609 = vrot.slane %v1524, %v1608
      %v1610 = vadd.f32 %v1603, %v1609
      %v1611 = vlaneseq
      %v1612 = vshrl.u32 %v1611, 7
      %v1613 = vsub.s32 1, %v1612
      %v1614 = vrot.slane %v1524, %v1613
      %1616 = vrot.lane.b32.xlu0 %v1614, 32
      %v1617 = vpop.permute.xlu0 %1616
      %v1619 = vadd.f32 %v1603, %v1617
      %v1620 = vlaneseq
      %v1621 = vshrl.u32 %v1620, 7
      %v1622 = vsub.s32 2, %v1621
      %v1623 = vrot.slane %v1524, %v1622
      %1625 = vrot.lane.b32.xlu0 %v1623, 64
      %v1626 = vpop.permute.xlu0 %1625
      %v1628 = vadd.f32 %v1603, %v1626
      %1630 = vrot.lane.b32.xlu0 %v1619, 96
      %v1631 = vpop.permute.xlu0 %1630
      %v1633 = vsel %vm535, %v1610, 0
      %v1635 = vsel %vm535, %v1631, 0
      %1637 = vmatprep.subr.mxu0 0.0
      %1638 = vmatpush1.xpose.msra.mxu0 %v1635
      %1639 = vmatprep.subr.mxu0 0.0
      %1640 = vmatpush1.xpose.msra.mxu0 0.0
      %1641 = vmatprep.subr.mxu0 0.0
      %1642 = vmatpush1.xpose.msra.mxu0 0.0
      %1643 = vmatprep.subr.mxu0 0.0
      %1644 = vmatpush1.xpose.msra.mxu0 0.0
      %1645 = vmatprep.subr.mxu0 0.0
      %1646 = vmatpush1.xpose.msra.mxu0 0.0
      %1647 = vmatprep.subr.mxu0 0.0
      %1648 = vmatpush1.xpose.msra.mxu0 0.0
      %1649 = vmatprep.subr.mxu0 0.0
      %1650 = vmatpush1.xpose.msra.mxu0 0.0
      %1651 = vmatprep.subr.mxu0 0.0
      %1652 = vmatpush1.xpose.msra.mxu0 0.0
      %1653 = vmatprep.subr.mxu0 0.0
      %1654 = vmatpush1.xpose.msra.mxu0 0.0
      %1655 = vmatprep.subr.mxu0 0.0
      %1656 = vmatpush1.xpose.msra.mxu0 0.0
      %1657 = vmatprep.subr.mxu0 0.0
      %1658 = vmatpush1.xpose.msra.mxu0 0.0
      %1659 = vmatprep.subr.mxu0 0.0
      %1660 = vmatpush1.xpose.msra.mxu0 0.0
      %1661 = vmatprep.subr.mxu0 0.0
      %1662 = vmatpush1.xpose.msra.mxu0 0.0
      %1663 = vmatprep.subr.mxu0 0.0
      %1664 = vmatpush1.xpose.msra.mxu0 0.0
      %1665 = vmatprep.subr.mxu0 0.0
      %1666 = vmatpush1.xpose.msra.mxu0 0.0
      %1667 = vmatprep.subr.mxu0 0.0
      %1668 = vmatpush1.xpose.msra.mxu0 0.0
      %1669 = vmatprep.subr.mxu0 0.0
      %1670 = vmatpush1.xpose.msra.mxu0 0.0
      %1671 = vmatprep.subr.mxu0 0.0
      %1672 = vmatpush1.xpose.msra.mxu0 0.0
      %1673 = vmatprep.subr.mxu0 0.0
      %1674 = vmatpush1.xpose.msra.mxu0 0.0
      %1675 = vmatprep.subr.mxu0 0.0
      %1676 = vmatpush1.xpose.msra.mxu0 0.0
      %1677 = vmatprep.subr.mxu0 0.0
      %1678 = vmatpush1.xpose.msra.mxu0 0.0
      %1679 = vmatprep.subr.mxu0 0.0
      %1680 = vmatpush1.xpose.msra.mxu0 0.0
      %1681 = vmatprep.subr.mxu0 0.0
      %1682 = vmatpush1.xpose.msra.mxu0 0.0
      %1683 = vmatprep.subr.mxu0 0.0
      %1684 = vmatpush1.xpose.msra.mxu0 0.0
      %1685 = vmatprep.subr.mxu0 0.0
      %1686 = vmatpush1.xpose.msra.mxu0 0.0
      %1687 = vmatprep.subr.mxu0 0.0
      %1688 = vmatpush1.xpose.msra.mxu0 0.0
      %1689 = vmatprep.subr.mxu0 0.0
      %1690 = vmatpush1.xpose.msra.mxu0 0.0
      %1691 = vmatprep.subr.mxu0 0.0
      %1692 = vmatpush1.xpose.msra.mxu0 0.0
      %1693 = vmatprep.subr.mxu0 0.0
      %1694 = vmatpush1.xpose.msra.mxu0 0.0
      %1695 = vmatprep.subr.mxu0 0.0
      %1696 = vmatpush1.xpose.msra.mxu0 0.0
      %1697 = vmatprep.subr.mxu0 0.0
      %1698 = vmatpush1.xpose.msra.mxu0 0.0
      %1699 = vmatprep.subr.mxu0 0.0
      %1700 = vmatpush1.xpose.msra.mxu0 0.0
      %1701 = vmatprep.mubr.f32.mxu0 0.0
      %1702 = vmatmul.mubr.f32.gmra.mrb[0].mxu0 %v1633
      %v1703 = vpop.f32.mrb[0].mxu0
      %v1704 = vadd.f32 0.0, %v1703
      %v1705 = vpop.f32.mrb[0].mxu0
      %1706 = vdwg.mxu0
      %v1707 = vmul.f32 %v1704, 0.35355338
      %v1708 = vsel %vm612, %v1707, -inf
      %1709 = vmax.xlane.f32.xlu0 %v1708
      %v1710 = vpop.xlane.xlu0 %1709
      %v1711 = vsub.f32 %v1707, %v1710
      %v1712 = vmul.f32 %v1711, 1.442695
      %v1713 = vpow.pop %v1712
      %v1714 = vsel %vm612, %v1713, 0.0
      %1715 = vadd.xlane.f32.xlu0 %v1714
      %v1716 = vpop.xlane.xlu0 %1715
      %v1717 = vrcp.pop %v1716
      %v1718 = vmul.f32 %v1713, %v1717
      %1720 = vrot.lane.b32.xlu0 %v1628, 64
      %v1721 = vpop.permute.xlu0 %1720
      %v1723 = vsel %vm627, %v1718, 0
      %v1725 = vsel %vm631, %v1721, 0
      %1727 = vmatprep.subr.mxu0 0.0
      %1728 = vmatpush1.msra.mxu0 %v1725
      %1729 = vmatprep.subr.mxu0 0.0
      %1730 = vmatpush1.msra.mxu0 0.0
      %1731 = vmatprep.subr.mxu0 0.0
      %1732 = vmatpush1.msra.mxu0 0.0
      %1733 = vmatprep.subr.mxu0 0.0
      %1734 = vmatpush1.msra.mxu0 0.0
      %1735 = vmatprep.subr.mxu0 0.0
      %1736 = vmatpush1.msra.mxu0 0.0
      %1737 = vmatprep.subr.mxu0 0.0
      %1738 = vmatpush1.msra.mxu0 0.0
      %1739 = vmatprep.subr.mxu0 0.0
      %1740 = vmatpush1.msra.mxu0 0.0
      %1741 = vmatprep.subr.mxu0 0.0
      %1742 = vmatpush1.msra.mxu0 0.0
      %1743 = vmatprep.subr.mxu0 0.0
      %1744 = vmatpush1.msra.mxu0 0.0
      %1745 = vmatprep.subr.mxu0 0.0
      %1746 = vmatpush1.msra.mxu0 0.0
      %1747 = vmatprep.subr.mxu0 0.0
      %1748 = vmatpush1.msra.mxu0 0.0
      %1749 = vmatprep.subr.mxu0 0.0
      %1750 = vmatpush1.msra.mxu0 0.0
      %1751 = vmatprep.subr.mxu0 0.0
      %1752 = vmatpush1.msra.mxu0 0.0
      %1753 = vmatprep.subr.mxu0 0.0
      %1754 = vmatpush1.msra.mxu0 0.0
      %1755 = vmatprep.subr.mxu0 0.0
      %1756 = vmatpush1.msra.mxu0 0.0
      %1757 = vmatprep.subr.mxu0 0.0
      %1758 = vmatpush1.msra.mxu0 0.0
      %1759 = vmatprep.subr.mxu0 0.0
      %1760 = vmatpush1.msra.mxu0 0.0
      %1761 = vmatprep.subr.mxu0 0.0
      %1762 = vmatpush1.msra.mxu0 0.0
      %1763 = vmatprep.subr.mxu0 0.0
      %1764 = vmatpush1.msra.mxu0 0.0
      %1765 = vmatprep.subr.mxu0 0.0
      %1766 = vmatpush1.msra.mxu0 0.0
      %1767 = vmatprep.subr.mxu0 0.0
      %1768 = vmatpush1.msra.mxu0 0.0
      %1769 = vmatprep.subr.mxu0 0.0
      %1770 = vmatpush1.msra.mxu0 0.0
      %1771 = vmatprep.subr.mxu0 0.0
      %1772 = vmatpush1.msra.mxu0 0.0
      %1773 = vmatprep.subr.mxu0 0.0
      %1774 = vmatpush1.msra.mxu0 0.0
      %1775 = vmatprep.subr.mxu0 0.0
      %1776 = vmatpush1.msra.mxu0 0.0
      %1777 = vmatprep.subr.mxu0 0.0
      %1778 = vmatpush1.msra.mxu0 0.0
      %1779 = vmatprep.subr.mxu0 0.0
      %1780 = vmatpush1.msra.mxu0 0.0
      %1781 = vmatprep.subr.mxu0 0.0
      %1782 = vmatpush1.msra.mxu0 0.0
      %1783 = vmatprep.subr.mxu0 0.0
      %1784 = vmatpush1.msra.mxu0 0.0
      %1785 = vmatprep.subr.mxu0 0.0
      %1786 = vmatpush1.msra.mxu0 0.0
      %1787 = vmatprep.subr.mxu0 0.0
      %1788 = vmatpush1.msra.mxu0 0.0
      %1789 = vmatprep.subr.mxu0 0.0
      %1790 = vmatpush1.msra.mxu0 0.0
      %1791 = vmatprep.mubr.f32.mxu0 0.0
      %1792 = vmatmul.mubr.f32.gmra.mrb[0].mxu0 %v1723
      %v1793 = vpop.f32.mrb[0].mxu0
      %v1794 = vadd.f32 0.0, %v1793
      %v1795 = vpop.f32.mrb[0].mxu0
      %1796 = vdwg.mxu0
      %1797 = vrot.lane.b32.xlu0 %v1610, 120
      %v1798 = vpop.permute.xlu0 %1797
      %1799 = vrot.lane.b32.xlu0 %v1619, 88
      %v1800 = vpop.permute.xlu0 %1799
      %v1801 = vsel %vm535, %v1798, 0
      %v1803 = vsel %vm535, %v1800, 0
      %1805 = vmatprep.subr.mxu0 0.0
      %1806 = vmatpush1.xpose.msra.mxu0 %v1803
      %1807 = vmatprep.subr.mxu0 0.0
      %1808 = vmatpush1.xpose.msra.mxu0 0.0
      %1809 = vmatprep.subr.mxu0 0.0
      %1810 = vmatpush1.xpose.msra.mxu0 0.0
      %1811 = vmatprep.subr.mxu0 0.0
      %1812 = vmatpush1.xpose.msra.mxu0 0.0
      %1813 = vmatprep.subr.mxu0 0.0
      %1814 = vmatpush1.xpose.msra.mxu0 0.0
      %1815 = vmatprep.subr.mxu0 0.0
      %1816 = vmatpush1.xpose.msra.mxu0 0.0
      %1817 = vmatprep.subr.mxu0 0.0
      %1818 = vmatpush1.xpose.msra.mxu0 0.0
      %1819 = vmatprep.subr.mxu0 0.0
      %1820 = vmatpush1.xpose.msra.mxu0 0.0
      %1821 = vmatprep.subr.mxu0 0.0
      %1822 = vmatpush1.xpose.msra.mxu0 0.0
      %1823 = vmatprep.subr.mxu0 0.0
      %1824 = vmatpush1.xpose.msra.mxu0 0.0
      %1825 = vmatprep.subr.mxu0 0.0
      %1826 = vmatpush1.xpose.msra.mxu0 0.0
      %1827 = vmatprep.subr.mxu0 0.0
      %1828 = vmatpush1.xpose.msra.mxu0 0.0
      %1829 = vmatprep.subr.mxu0 0.0
      %1830 = vmatpush1.xpose.msra.mxu0 0.0
      %1831 = vmatprep.subr.mxu0 0.0
      %1832 = vmatpush1.xpose.msra.mxu0 0.0
      %1833 = vmatprep.subr.mxu0 0.0
      %1834 = vmatpush1.xpose.msra.mxu0 0.0
      %1835 = vmatprep.subr.mxu0 0.0
      %1836 = vmatpush1.xpose.msra.mxu0 0.0
      %1837 = vmatprep.subr.mxu0 0.0
      %1838 = vmatpush1.xpose.msra.mxu0 0.0
      %1839 = vmatprep.subr.mxu0 0.0
      %1840 = vmatpush1.xpose.msra.mxu0 0.0
      %1841 = vmatprep.subr.mxu0 0.0
      %1842 = vmatpush1.xpose.msra.mxu0 0.0
      %1843 = vmatprep.subr.mxu0 0.0
      %1844 = vmatpush1.xpose.msra.mxu0 0.0
      %1845 = vmatprep.subr.mxu0 0.0
      %1846 = vmatpush1.xpose.msra.mxu0 0.0
      %1847 = vmatprep.subr.mxu0 0.0
      %1848 = vmatpush1.xpose.msra.mxu0 0.0
      %1849 = vmatprep.subr.mxu0 0.0
      %1850 = vmatpush1.xpose.msra.mxu0 0.0
      %1851 = vmatprep.subr.mxu0 0.0
      %1852 = vmatpush1.xpose.msra.mxu0 0.0
      %1853 = vmatprep.subr.mxu0 0.0
      %1854 = vmatpush1.xpose.msra.mxu0 0.0
      %1855 = vmatprep.subr.mxu0 0.0
      %1856 = vmatpush1.xpose.msra.mxu0 0.0
      %1857 = vmatprep.subr.mxu0 0.0
      %1858 = vmatpush1.xpose.msra.mxu0 0.0
      %1859 = vmatprep.subr.mxu0 0.0
      %1860 = vmatpush1.xpose.msra.mxu0 0.0
      %1861 = vmatprep.subr.mxu0 0.0
      %1862 = vmatpush1.xpose.msra.mxu0 0.0
      %1863 = vmatprep.subr.mxu0 0.0
      %1864 = vmatpush1.xpose.msra.mxu0 0.0
      %1865 = vmatprep.subr.mxu0 0.0
      %1866 = vmatpush1.xpose.msra.mxu0 0.0
      %1867 = vmatprep.subr.mxu0 0.0
      %1868 = vmatpush1.xpose.msra.mxu0 0.0
      %1869 = vmatprep.mubr.f32.mxu0 0.0
      %1870 = vmatmul.mubr.f32.gmra.mrb[0].mxu0 %v1801
      %v1871 = vpop.f32.mrb[0].mxu0
      %v1872 = vadd.f32 0.0, %v1871
      %v1873 = vpop.f32.mrb[0].mxu0
      %1874 = vdwg.mxu0
      %v1875 = vmul.f32 %v1872, 0.35355338
      %v1876 = vsel %vm612, %v1875, -inf
      %1877 = vmax.xlane.f32.xlu0 %v1876
      %v1878 = vpop.xlane.xlu0 %1877
      %v1879 = vsub.f32 %v1875, %v1878
      %v1880 = vmul.f32 %v1879, 1.442695
      %v1881 = vpow.pop %v1880
      %v1882 = vsel %vm612, %v1881, 0.0
      %1883 = vadd.xlane.f32.xlu0 %v1882
      %v1884 = vpop.xlane.xlu0 %1883
      %v1885 = vrcp.pop %v1884
      %v1886 = vmul.f32 %v1881, %v1885
      %1887 = vrot.lane.b32.xlu0 %v1628, 56
      %v1888 = vpop.permute.xlu0 %1887
      %v1890 = vsel %vm627, %v1886, 0
      %v1892 = vsel %vm631, %v1888, 0
      %1894 = vmatprep.subr.mxu0 0.0
      %1895 = vmatpush1.msra.mxu0 %v1892
      %1896 = vmatprep.subr.mxu0 0.0
      %1897 = vmatpush1.msra.mxu0 0.0
      %1898 = vmatprep.subr.mxu0 0.0
      %1899 = vmatpush1.msra.mxu0 0.0
      %1900 = vmatprep.subr.mxu0 0.0
      %1901 = vmatpush1.msra.mxu0 0.0
      %1902 = vmatprep.subr.mxu0 0.0
      %1903 = vmatpush1.msra.mxu0 0.0
      %1904 = vmatprep.subr.mxu0 0.0
      %1905 = vmatpush1.msra.mxu0 0.0
      %1906 = vmatprep.subr.mxu0 0.0
      %1907 = vmatpush1.msra.mxu0 0.0
      %1908 = vmatprep.subr.mxu0 0.0
      %1909 = vmatpush1.msra.mxu0 0.0
      %1910 = vmatprep.subr.mxu0 0.0
      %1911 = vmatpush1.msra.mxu0 0.0
      %1912 = vmatprep.subr.mxu0 0.0
      %1913 = vmatpush1.msra.mxu0 0.0
      %1914 = vmatprep.subr.mxu0 0.0
      %1915 = vmatpush1.msra.mxu0 0.0
      %1916 = vmatprep.subr.mxu0 0.0
      %1917 = vmatpush1.msra.mxu0 0.0
      %1918 = vmatprep.subr.mxu0 0.0
      %1919 = vmatpush1.msra.mxu0 0.0
      %1920 = vmatprep.subr.mxu0 0.0
      %1921 = vmatpush1.msra.mxu0 0.0
      %1922 = vmatprep.subr.mxu0 0.0
      %1923 = vmatpush1.msra.mxu0 0.0
      %1924 = vmatprep.subr.mxu0 0.0
      %1925 = vmatpush1.msra.mxu0 0.0
      %1926 = vmatprep.subr.mxu0 0.0
      %1927 = vmatpush1.msra.mxu0 0.0
      %1928 = vmatprep.subr.mxu0 0.0
      %1929 = vmatpush1.msra.mxu0 0.0
      %1930 = vmatprep.subr.mxu0 0.0
      %1931 = vmatpush1.msra.mxu0 0.0
      %1932 = vmatprep.subr.mxu0 0.0
      %1933 = vmatpush1.msra.mxu0 0.0
      %1934 = vmatprep.subr.mxu0 0.0
      %1935 = vmatpush1.msra.mxu0 0.0
      %1936 = vmatprep.subr.mxu0 0.0
      %1937 = vmatpush1.msra.mxu0 0.0
      %1938 = vmatprep.subr.mxu0 0.0
      %1939 = vmatpush1.msra.mxu0 0.0
      %1940 = vmatprep.subr.mxu0 0.0
      %1941 = vmatpush1.msra.mxu0 0.0
      %1942 = vmatprep.subr.mxu0 0.0
      %1943 = vmatpush1.msra.mxu0 0.0
      %1944 = vmatprep.subr.mxu0 0.0
      %1945 = vmatpush1.msra.mxu0 0.0
      %1946 = vmatprep.subr.mxu0 0.0
      %1947 = vmatpush1.msra.mxu0 0.0
      %1948 = vmatprep.subr.mxu0 0.0
      %1949 = vmatpush1.msra.mxu0 0.0
      %1950 = vmatprep.subr.mxu0 0.0
      %1951 = vmatpush1.msra.mxu0 0.0
      %1952 = vmatprep.subr.mxu0 0.0
      %1953 = vmatpush1.msra.mxu0 0.0
      %1954 = vmatprep.subr.mxu0 0.0
      %1955 = vmatpush1.msra.mxu0 0.0
      %1956 = vmatprep.subr.mxu0 0.0
      %1957 = vmatpush1.msra.mxu0 0.0
      %1958 = vmatprep.mubr.f32.mxu0 0.0
      %1959 = vmatmul.mubr.f32.gmra.mrb[0].mxu0 %v1890
      %v1960 = vpop.f32.mrb[0].mxu0
      %v1961 = vadd.f32 0.0, %v1960
      %v1962 = vpop.f32.mrb[0].mxu0
      %1963 = vdwg.mxu0
      %1964 = vrot.lane.b32.xlu0 %v1610, 112
      %v1965 = vpop.permute.xlu0 %1964
      %1966 = vrot.lane.b32.xlu0 %v1619, 80
      %v1967 = vpop.permute.xlu0 %1966
      %v1968 = vsel %vm535, %v1965, 0
      %v1970 = vsel %vm535, %v1967, 0
      %1972 = vmatprep.subr.mxu0 0.0
      %1973 = vmatpush1.xpose.msra.mxu0 %v1970
      %1974 = vmatprep.subr.mxu0 0.0
      %1975 = vmatpush1.xpose.msra.mxu0 0.0
      %1976 = vmatprep.subr.mxu0 0.0
      %1977 = vmatpush1.xpose.msra.mxu0 0.0
      %1978 = vmatprep.subr.mxu0 0.0
      %1979 = vmatpush1.xpose.msra.mxu0 0.0
      %1980 = vmatprep.subr.mxu0 0.0
      %1981 = vmatpush1.xpose.msra.mxu0 0.0
      %1982 = vmatprep.subr.mxu0 0.0
      %1983 = vmatpush1.xpose.msra.mxu0 0.0
      %1984 = vmatprep.subr.mxu0 0.0
      %1985 = vmatpush1.xpose.msra.mxu0 0.0
      %1986 = vmatprep.subr.mxu0 0.0
      %1987 = vmatpush1.xpose.msra.mxu0 0.0
      %1988 = vmatprep.subr.mxu0 0.0
      %1989 = vmatpush1.xpose.msra.mxu0 0.0
      %1990 = vmatprep.subr.mxu0 0.0
      %1991 = vmatpush1.xpose.msra.mxu0 0.0
      %1992 = vmatprep.subr.mxu0 0.0
      %1993 = vmatpush1.xpose.msra.mxu0 0.0
      %1994 = vmatprep.subr.mxu0 0.0
      %1995 = vmatpush1.xpose.msra.mxu0 0.0
      %1996 = vmatprep.subr.mxu0 0.0
      %1997 = vmatpush1.xpose.msra.mxu0 0.0
      %1998 = vmatprep.subr.mxu0 0.0
      %1999 = vmatpush1.xpose.msra.mxu0 0.0
      %2000 = vmatprep.subr.mxu0 0.0
      %2001 = vmatpush1.xpose.msra.mxu0 0.0
      %2002 = vmatprep.subr.mxu0 0.0
      %2003 = vmatpush1.xpose.msra.mxu0 0.0
      %2004 = vmatprep.subr.mxu0 0.0
      %2005 = vmatpush1.xpose.msra.mxu0 0.0
      %2006 = vmatprep.subr.mxu0 0.0
      %2007 = vmatpush1.xpose.msra.mxu0 0.0
      %2008 = vmatprep.subr.mxu0 0.0
      %2009 = vmatpush1.xpose.msra.mxu0 0.0
      %2010 = vmatprep.subr.mxu0 0.0
      %2011 = vmatpush1.xpose.msra.mxu0 0.0
      %2012 = vmatprep.subr.mxu0 0.0
      %2013 = vmatpush1.xpose.msra.mxu0 0.0
      %2014 = vmatprep.subr.mxu0 0.0
      %2015 = vmatpush1.xpose.msra.mxu0 0.0
      %2016 = vmatprep.subr.mxu0 0.0
      %2017 = vmatpush1.xpose.msra.mxu0 0.0
      %2018 = vmatprep.subr.mxu0 0.0
      %2019 = vmatpush1.xpose.msra.mxu0 0.0
      %2020 = vmatprep.subr.mxu0 0.0
      %2021 = vmatpush1.xpose.msra.mxu0 0.0
      %2022 = vmatprep.subr.mxu0 0.0
      %2023 = vmatpush1.xpose.msra.mxu0 0.0
      %2024 = vmatprep.subr.mxu0 0.0
      %2025 = vmatpush1.xpose.msra.mxu0 0.0
      %2026 = vmatprep.subr.mxu0 0.0
      %2027 = vmatpush1.xpose.msra.mxu0 0.0
      %2028 = vmatprep.subr.mxu0 0.0
      %2029 = vmatpush1.xpose.msra.mxu0 0.0
      %2030 = vmatprep.subr.mxu0 0.0
      %2031 = vmatpush1.xpose.msra.mxu0 0.0
      %2032 = vmatprep.subr.mxu0 0.0
      %2033 = vmatpush1.xpose.msra.mxu0 0.0
      %2034 = vmatprep.subr.mxu0 0.0
      %2035 = vmatpush1.xpose.msra.mxu0 0.0
      %2036 = vmatprep.mubr.f32.mxu0 0.0
      %2037 = vmatmul.mubr.f32.gmra.mrb[0].mxu0 %v1968
      %v2038 = vpop.f32.mrb[0].mxu0
      %v2039 = vadd.f32 0.0, %v2038
      %v2040 = vpop.f32.mrb[0].mxu0
      %2041 = vdwg.mxu0
      %v2042 = vmul.f32 %v2039, 0.35355338
      %v2043 = vsel %vm612, %v2042, -inf
      %2044 = vmax.xlane.f32.xlu0 %v2043
      %v2045 = vpop.xlane.xlu0 %2044
      %v2046 = vsub.f32 %v2042, %v2045
      %v2047 = vmul.f32 %v2046, 1.442695
      %v2048 = vpow.pop %v2047
      %v2049 = vsel %vm612, %v2048, 0.0
      %2050 = vadd.xlane.f32.xlu0 %v2049
      %v2051 = vpop.xlane.xlu0 %2050
      %v2052 = vrcp.pop %v2051
      %v2053 = vmul.f32 %v2048, %v2052
      %2054 = vrot.lane.b32.xlu0 %v1628, 48
      %v2055 = vpop.permute.xlu0 %2054
      %v2057 = vsel %vm627, %v2053, 0
      %v2059 = vsel %vm631, %v2055, 0
      %2061 = vmatprep.subr.mxu0 0.0
      %2062 = vmatpush1.msra.mxu0 %v2059
      %2063 = vmatprep.subr.mxu0 0.0
      %2064 = vmatpush1.msra.mxu0 0.0
      %2065 = vmatprep.subr.mxu0 0.0
      %2066 = vmatpush1.msra.mxu0 0.0
      %2067 = vmatprep.subr.mxu0 0.0
      %2068 = vmatpush1.msra.mxu0 0.0
      %2069 = vmatprep.subr.mxu0 0.0
      %2070 = vmatpush1.msra.mxu0 0.0
      %2071 = vmatprep.subr.mxu0 0.0
      %2072 = vmatpush1.msra.mxu0 0.0
      %2073 = vmatprep.subr.mxu0 0.0
      %2074 = vmatpush1.msra.mxu0 0.0
      %2075 = vmatprep.subr.mxu0 0.0
      %2076 = vmatpush1.msra.mxu0 0.0
      %2077 = vmatprep.subr.mxu0 0.0
      %2078 = vmatpush1.msra.mxu0 0.0
      %2079 = vmatprep.subr.mxu0 0.0
      %2080 = vmatpush1.msra.mxu0 0.0
      %2081 = vmatprep.subr.mxu0 0.0
      %2082 = vmatpush1.msra.mxu0 0.0
      %2083 = vmatprep.subr.mxu0 0.0
      %2084 = vmatpush1.msra.mxu0 0.0
      %2085 = vmatprep.subr.mxu0 0.0
      %2086 = vmatpush1.msra.mxu0 0.0
      %2087 = vmatprep.subr.mxu0 0.0
      %2088 = vmatpush1.msra.mxu0 0.0
      %2089 = vmatprep.subr.mxu0 0.0
      %2090 = vmatpush1.msra.mxu0 0.0
      %2091 = vmatprep.subr.mxu0 0.0
      %2092 = vmatpush1.msra.mxu0 0.0
      %2093 = vmatprep.subr.mxu0 0.0
      %2094 = vmatpush1.msra.mxu0 0.0
      %2095 = vmatprep.subr.mxu0 0.0
      %2096 = vmatpush1.msra.mxu0 0.0
      %2097 = vmatprep.subr.mxu0 0.0
      %2098 = vmatpush1.msra.mxu0 0.0
      %2099 = vmatprep.subr.mxu0 0.0
      %2100 = vmatpush1.msra.mxu0 0.0
      %2101 = vmatprep.subr.mxu0 0.0
      %2102 = vmatpush1.msra.mxu0 0.0
      %2103 = vmatprep.subr.mxu0 0.0
      %2104 = vmatpush1.msra.mxu0 0.0
      %2105 = vmatprep.subr.mxu0 0.0
      %2106 = vmatpush1.msra.mxu0 0.0
      %2107 = vmatprep.subr.mxu0 0.0
      %2108 = vmatpush1.msra.mxu0 0.0
      %2109 = vmatprep.subr.mxu0 0.0
      %2110 = vmatpush1.msra.mxu0 0.0
      %2111 = vmatprep.subr.mxu0 0.0
      %2112 = vmatpush1.msra.mxu0 0.0
      %2113 = vmatprep.subr.mxu0 0.0
      %2114 = vmatpush1.msra.mxu0 0.0
      %2115 = vmatprep.subr.mxu0 0.0
      %2116 = vmatpush1.msra.mxu0 0.0
      %2117 = vmatprep.subr.mxu0 0.0
      %2118 = vmatpush1.msra.mxu0 0.0
      %2119 = vmatprep.subr.mxu0 0.0
      %2120 = vmatpush1.msra.mxu0 0.0
      %2121 = vmatprep.subr.mxu0 0.0
      %2122 = vmatpush1.msra.mxu0 0.0
      %2123 = vmatprep.subr.mxu0 0.0
      %2124 = vmatpush1.msra.mxu0 0.0
      %2125 = vmatprep.mubr.f32.mxu0 0.0
      %2126 = vmatmul.mubr.f32.gmra.mrb[0].mxu0 %v2057
      %v2127 = vpop.f32.mrb[0].mxu0
      %v2128 = vadd.f32 0.0, %v2127
      %v2129 = vpop.f32.mrb[0].mxu0
      %2130 = vdwg.mxu0
      %2131 = vrot.lane.b32.xlu0 %v1610, 104
      %v2132 = vpop.permute.xlu0 %2131
      %2133 = vrot.lane.b32.xlu0 %v1619, 72
      %v2134 = vpop.permute.xlu0 %2133
      %v2135 = vsel %vm535, %v2132, 0
      %v2137 = vsel %vm535, %v2134, 0
      %2139 = vmatprep.subr.mxu0 0.0
      %2140 = vmatpush1.xpose.msra.mxu0 %v2137
      %2141 = vmatprep.subr.mxu0 0.0
      %2142 = vmatpush1.xpose.msra.mxu0 0.0
      %2143 = vmatprep.subr.mxu0 0.0
      %2144 = vmatpush1.xpose.msra.mxu0 0.0
      %2145 = vmatprep.subr.mxu0 0.0
      %2146 = vmatpush1.xpose.msra.mxu0 0.0
      %2147 = vmatprep.subr.mxu0 0.0
      %2148 = vmatpush1.xpose.msra.mxu0 0.0
      %2149 = vmatprep.subr.mxu0 0.0
      %2150 = vmatpush1.xpose.msra.mxu0 0.0
      %2151 = vmatprep.subr.mxu0 0.0
      %2152 = vmatpush1.xpose.msra.mxu0 0.0
      %2153 = vmatprep.subr.mxu0 0.0
      %2154 = vmatpush1.xpose.msra.mxu0 0.0
      %2155 = vmatprep.subr.mxu0 0.0
      %2156 = vmatpush1.xpose.msra.mxu0 0.0
      %2157 = vmatprep.subr.mxu0 0.0
      %2158 = vmatpush1.xpose.msra.mxu0 0.0
      %2159 = vmatprep.subr.mxu0 0.0
      %2160 = vmatpush1.xpose.msra.mxu0 0.0
      %2161 = vmatprep.subr.mxu0 0.0
      %2162 = vmatpush1.xpose.msra.mxu0 0.0
      %2163 = vmatprep.subr.mxu0 0.0
      %2164 = vmatpush1.xpose.msra.mxu0 0.0
      %2165 = vmatprep.subr.mxu0 0.0
      %2166 = vmatpush1.xpose.msra.mxu0 0.0
      %2167 = vmatprep.subr.mxu0 0.0
      %2168 = vmatpush1.xpose.msra.mxu0 0.0
      %2169 = vmatprep.subr.mxu0 0.0
      %2170 = vmatpush1.xpose.msra.mxu0 0.0
      %2171 = vmatprep.subr.mxu0 0.0
      %2172 = vmatpush1.xpose.msra.mxu0 0.0
      %2173 = vmatprep.subr.mxu0 0.0
      %2174 = vmatpush1.xpose.msra.mxu0 0.0
      %2175 = vmatprep.subr.mxu0 0.0
      %2176 = vmatpush1.xpose.msra.mxu0 0.0
      %2177 = vmatprep.subr.mxu0 0.0
      %2178 = vmatpush1.xpose.msra.mxu0 0.0
      %2179 = vmatprep.subr.mxu0 0.0
      %2180 = vmatpush1.xpose.msra.mxu0 0.0
      %2181 = vmatprep.subr.mxu0 0.0
      %2182 = vmatpush1.xpose.msra.mxu0 0.0
      %2183 = vmatprep.subr.mxu0 0.0
      %2184 = vmatpush1.xpose.msra.mxu0 0.0
      %2185 = vmatprep.subr.mxu0 0.0
      %2186 = vmatpush1.xpose.msra.mxu0 0.0
      %2187 = vmatprep.subr.mxu0 0.0
      %2188 = vmatpush1.xpose.msra.mxu0 0.0
      %2189 = vmatprep.subr.mxu0 0.0
      %2190 = vmatpush1.xpose.msra.mxu0 0.0
      %2191 = vmatprep.subr.mxu0 0.0
      %2192 = vmatpush1.xpose.msra.mxu0 0.0
      %2193 = vmatprep.subr.mxu0 0.0
      %2194 = vmatpush1.xpose.msra.mxu0 0.0
      %2195 = vmatprep.subr.mxu0 0.0
      %2196 = vmatpush1.xpose.msra.mxu0 0.0
      %2197 = vmatprep.subr.mxu0 0.0
      %2198 = vmatpush1.xpose.msra.mxu0 0.0
      %2199 = vmatprep.subr.mxu0 0.0
      %2200 = vmatpush1.xpose.msra.mxu0 0.0
      %2201 = vmatprep.subr.mxu0 0.0
      %2202 = vmatpush1.xpose.msra.mxu0 0.0
      %2203 = vmatprep.mubr.f32.mxu0 0.0
      %2204 = vmatmul.mubr.f32.gmra.mrb[0].mxu0 %v2135
      %v2205 = vpop.f32.mrb[0].mxu0
      %v2206 = vadd.f32 0.0, %v2205
      %v2207 = vpop.f32.mrb[0].mxu0
      %2208 = vdwg.mxu0
      %v2209 = vmul.f32 %v2206, 0.35355338
      %v2210 = vsel %vm612, %v2209, -inf
      %2211 = vmax.xlane.f32.xlu0 %v2210
      %v2212 = vpop.xlane.xlu0 %2211
      %v2213 = vsub.f32 %v2209, %v2212
      %v2214 = vmul.f32 %v2213, 1.442695
      %v2215 = vpow.pop %v2214
      %v2216 = vsel %vm612, %v2215, 0.0
      %2217 = vadd.xlane.f32.xlu0 %v2216
      %v2218 = vpop.xlane.xlu0 %2217
      %v2219 = vrcp.pop %v2218
      %v2220 = vmul.f32 %v2215, %v2219
      %2221 = vrot.lane.b32.xlu0 %v1628, 40
      %v2222 = vpop.permute.xlu0 %2221
      %v2224 = vsel %vm627, %v2220, 0
      %v2226 = vsel %vm631, %v2222, 0
      %2228 = vmatprep.subr.mxu0 0.0
      %2229 = vmatpush1.msra.mxu0 %v2226
      %2230 = vmatprep.subr.mxu0 0.0
      %2231 = vmatpush1.msra.mxu0 0.0
      %2232 = vmatprep.subr.mxu0 0.0
      %2233 = vmatpush1.msra.mxu0 0.0
      %2234 = vmatprep.subr.mxu0 0.0
      %2235 = vmatpush1.msra.mxu0 0.0
      %2236 = vmatprep.subr.mxu0 0.0
      %2237 = vmatpush1.msra.mxu0 0.0
      %2238 = vmatprep.subr.mxu0 0.0
      %2239 = vmatpush1.msra.mxu0 0.0
      %2240 = vmatprep.subr.mxu0 0.0
      %2241 = vmatpush1.msra.mxu0 0.0
      %2242 = vmatprep.subr.mxu0 0.0
      %2243 = vmatpush1.msra.mxu0 0.0
      %2244 = vmatprep.subr.mxu0 0.0
      %2245 = vmatpush1.msra.mxu0 0.0
      %2246 = vmatprep.subr.mxu0 0.0
      %2247 = vmatpush1.msra.mxu0 0.0
      %2248 = vmatprep.subr.mxu0 0.0
      %2249 = vmatpush1.msra.mxu0 0.0
      %2250 = vmatprep.subr.mxu0 0.0
      %2251 = vmatpush1.msra.mxu0 0.0
      %2252 = vmatprep.subr.mxu0 0.0
      %2253 = vmatpush1.msra.mxu0 0.0
      %2254 = vmatprep.subr.mxu0 0.0
      %2255 = vmatpush1.msra.mxu0 0.0
      %2256 = vmatprep.subr.mxu0 0.0
      %2257 = vmatpush1.msra.mxu0 0.0
      %2258 = vmatprep.subr.mxu0 0.0
      %2259 = vmatpush1.msra.mxu0 0.0
      %2260 = vmatprep.subr.mxu0 0.0
      %2261 = vmatpush1.msra.mxu0 0.0
      %2262 = vmatprep.subr.mxu0 0.0
      %2263 = vmatpush1.msra.mxu0 0.0
      %2264 = vmatprep.subr.mxu0 0.0
      %2265 = vmatpush1.msra.mxu0 0.0
      %2266 = vmatprep.subr.mxu0 0.0
      %2267 = vmatpush1.msra.mxu0 0.0
      %2268 = vmatprep.subr.mxu0 0.0
      %2269 = vmatpush1.msra.mxu0 0.0
      %2270 = vmatprep.subr.mxu0 0.0
      %2271 = vmatpush1.msra.mxu0 0.0
      %2272 = vmatprep.subr.mxu0 0.0
      %2273 = vmatpush1.msra.mxu0 0.0
      %2274 = vmatprep.subr.mxu0 0.0
      %2275 = vmatpush1.msra.mxu0 0.0
      %2276 = vmatprep.subr.mxu0 0.0
      %2277 = vmatpush1.msra.mxu0 0.0
      %2278 = vmatprep.subr.mxu0 0.0
      %2279 = vmatpush1.msra.mxu0 0.0
      %2280 = vmatprep.subr.mxu0 0.0
      %2281 = vmatpush1.msra.mxu0 0.0
      %2282 = vmatprep.subr.mxu0 0.0
      %2283 = vmatpush1.msra.mxu0 0.0
      %2284 = vmatprep.subr.mxu0 0.0
      %2285 = vmatpush1.msra.mxu0 0.0
      %2286 = vmatprep.subr.mxu0 0.0
      %2287 = vmatpush1.msra.mxu0 0.0
      %2288 = vmatprep.subr.mxu0 0.0
      %2289 = vmatpush1.msra.mxu0 0.0
      %2290 = vmatprep.subr.mxu0 0.0
      %2291 = vmatpush1.msra.mxu0 0.0
      %2292 = vmatprep.mubr.f32.mxu0 0.0
      %2293 = vmatmul.mubr.f32.gmra.mrb[0].mxu0 %v2224
      %v2294 = vpop.f32.mrb[0].mxu0
      %v2295 = vadd.f32 0.0, %v2294
      %v2296 = vpop.f32.mrb[0].mxu0
      %2297 = vdwg.mxu0
      %2299 = vrot.lane.b32.xlu0 %v1961, 8
      %v2300 = vpop.permute.xlu0 %2299
      %2303 = vrot.lane.b32.xlu0 %v2128, 16
      %v2304 = vpop.permute.xlu0 %2303
      %2307 = vrot.lane.b32.xlu0 %v2295, 24
      %v2308 = vpop.permute.xlu0 %2307
      %v2310 = vsel %vm535, %v1794, %v2300
      %v2311 = vsel %vm1218, %v2310, %v2304
      %v2312 = vsel %vm1220, %v2311, %v2308
      %s2313 = scalar_lea.vmem %s4, 32
      %v2314 = vld [vmem:[%s2313] sm:$0xff]
      %v2315 = vld [vmem:[%s2313 + $0x8] sm:$0xff]
      %v2316 = vld [vmem:[%s2313 + $0x10] sm:$0xff]
      %v2317 = vld [vmem:[%s2313 + $0x18] sm:$0xff]
      %v2318 = vlaneseq
      %v2319 = vshrl.u32 %v2318, 7
      %v2320 = vsub.s32 3, %v2319
      %v2321 = vrot.slane %v1524, %v2320
      %v2323 = vsel %vm435, %v2312, 0
      %2325 = vmatprep.subr.mxu0 0.0
      %2326 = vmatpush1.msra.mxu0 %v2314
      %2327 = vmatprep.subr.mxu0 0.0
      %2328 = vmatpush1.msra.mxu0 %v2315
      %2329 = vmatprep.subr.mxu0 0.0
      %2330 = vmatpush1.msra.mxu0 %v2316
      %2331 = vmatprep.subr.mxu0 0.0
      %2332 = vmatpush1.msra.mxu0 %v2317
      %2333 = vmatprep.subr.mxu0 0.0
      %2334 = vmatpush1.msra.mxu0 0.0
      %2335 = vmatprep.subr.mxu0 0.0
      %2336 = vmatpush1.msra.mxu0 0.0
      %2337 = vmatprep.subr.mxu0 0.0
      %2338 = vmatpush1.msra.mxu0 0.0
      %2339 = vmatprep.subr.mxu0 0.0
      %2340 = vmatpush1.msra.mxu0 0.0
      %2341 = vmatprep.subr.mxu0 0.0
      %2342 = vmatpush1.msra.mxu0 0.0
      %2343 = vmatprep.subr.mxu0 0.0
      %2344 = vmatpush1.msra.mxu0 0.0
      %2345 = vmatprep.subr.mxu0 0.0
      %2346 = vmatpush1.msra.mxu0 0.0
      %2347 = vmatprep.subr.mxu0 0.0
      %2348 = vmatpush1.msra.mxu0 0.0
      %2349 = vmatprep.subr.mxu0 0.0
      %2350 = vmatpush1.msra.mxu0 0.0
      %2351 = vmatprep.subr.mxu0 0.0
      %2352 = vmatpush1.msra.mxu0 0.0
      %2353 = vmatprep.subr.mxu0 0.0
      %2354 = vmatpush1.msra.mxu0 0.0
      %2355 = vmatprep.subr.mxu0 0.0
      %2356 = vmatpush1.msra.mxu0 0.0
      %2357 = vmatprep.subr.mxu0 0.0
      %2358 = vmatpush1.msra.mxu0 0.0
      %2359 = vmatprep.subr.mxu0 0.0
      %2360 = vmatpush1.msra.mxu0 0.0
      %2361 = vmatprep.subr.mxu0 0.0
      %2362 = vmatpush1.msra.mxu0 0.0
      %2363 = vmatprep.subr.mxu0 0.0
      %2364 = vmatpush1.msra.mxu0 0.0
      %2365 = vmatprep.subr.mxu0 0.0
      %2366 = vmatpush1.msra.mxu0 0.0
      %2367 = vmatprep.subr.mxu0 0.0
      %2368 = vmatpush1.msra.mxu0 0.0
      %2369 = vmatprep.subr.mxu0 0.0
      %2370 = vmatpush1.msra.mxu0 0.0
      %2371 = vmatprep.subr.mxu0 0.0
      %2372 = vmatpush1.msra.mxu0 0.0
      %2373 = vmatprep.subr.mxu0 0.0
      %2374 = vmatpush1.msra.mxu0 0.0
      %2375 = vmatprep.subr.mxu0 0.0
      %2376 = vmatpush1.msra.mxu0 0.0
      %2377 = vmatprep.subr.mxu0 0.0
      %2378 = vmatpush1.msra.mxu0 0.0
      %2379 = vmatprep.subr.mxu0 0.0
      %2380 = vmatpush1.msra.mxu0 0.0
      %2381 = vmatprep.subr.mxu0 0.0
      %2382 = vmatpush1.msra.mxu0 0.0
      %2383 = vmatprep.subr.mxu0 0.0
      %2384 = vmatpush1.msra.mxu0 0.0
      %2385 = vmatprep.subr.mxu0 0.0
      %2386 = vmatpush1.msra.mxu0 0.0
      %2387 = vmatprep.subr.mxu0 0.0
      %2388 = vmatpush1.msra.mxu0 0.0
      %2389 = vmatprep.mubr.f32.mxu0 0.0
      %2390 = vmatmul.mubr.f32.gmra.mrb[0].mxu0 %v2323
      %v2391 = vpop.f32.mrb[0].mxu0
      %v2392 = vadd.f32 %v2321, %v2391
      %v2393 = vpop.f32.mrb[0].mxu0
      %2394 = vdwg.mxu0
      %v2395 = vadd.f32 %v1522, %v2392
      %v2396 = vsel %vm1304, %v2395, 0.0
      %2397 = vadd.xlane.f32.xlu0 %v2396
      %v2398 = vpop.xlane.xlu0 %2397
      %v2399 = vmul.f32 %v2398, %v1308
      %v2400 = vsub.f32 %v2395, %v2399
      %v2401 = vmul.f32 %v2400, %v2400
      %v2402 = vsel %vm1304, %v2401, 0.0
      %2403 = vadd.xlane.f32.xlu0 %v2402
      %v2404 = vpop.xlane.xlu0 %2403
      %v2405 = vmul.f32 %v2404, %v1308
      %v2406 = vadd.f32 %v2405, 1e-05
      %v2407 = vrsqrt.pop %v2406
      %v2408 = vmul.f32 %v2400, %v2407
      %v2409 = vlaneseq
      %v2410 = vshrl.u32 %v2409, 7
      %v2411 = vsub.s32 5, %v2410
      %v2412 = vrot.slane %v1524, %v2411
      %v2413 = vmul.f32 %v2408, %v2412
      %v2414 = vlaneseq
      %v2415 = vshrl.u32 %v2414, 7
      %v2416 = vsub.s32 6, %v2415
      %v2417 = vrot.slane %v1524, %v2416
      %v2418 = vadd.f32 %v2413, %v2417
      %s2419 = scalar_lea.vmem %s5, 32
      %v2420 = vld [vmem:[%s2419] sm:$0xff]
      %v2421 = vld [vmem:[%s2419 + $0x8] sm:$0xff]
      %v2422 = vld [vmem:[%s2419 + $0x10] sm:$0xff]
      %v2423 = vld [vmem:[%s2419 + $0x18] sm:$0xff]
      %v2425 = vlaneseq
      %v2426 = vshrl.u32 %v2425, 7
      %v2427 = vsub.s32 0, %v2426
      %v2428 = vrot.slane %v1527, %v2427
      %v2431 = vsel %vm435, %v2418, 0
      %2433 = vmatprep.subr.mxu0 0.0
      %2434 = vmatpush1.msra.mxu0 %v2420
      %2435 = vmatprep.subr.mxu0 0.0
      %2436 = vmatpush1.msra.mxu0 %v2421
      %2437 = vmatprep.subr.mxu0 0.0
      %2438 = vmatpush1.msra.mxu0 %v2422
      %2439 = vmatprep.subr.mxu0 0.0
      %2440 = vmatpush1.msra.mxu0 %v2423
      %2441 = vmatprep.subr.mxu0 0.0
      %2442 = vmatpush1.msra.mxu0 0.0
      %2443 = vmatprep.subr.mxu0 0.0
      %2444 = vmatpush1.msra.mxu0 0.0
      %2445 = vmatprep.subr.mxu0 0.0
      %2446 = vmatpush1.msra.mxu0 0.0
      %2447 = vmatprep.subr.mxu0 0.0
      %2448 = vmatpush1.msra.mxu0 0.0
      %2449 = vmatprep.subr.mxu0 0.0
      %2450 = vmatpush1.msra.mxu0 0.0
      %2451 = vmatprep.subr.mxu0 0.0
      %2452 = vmatpush1.msra.mxu0 0.0
      %2453 = vmatprep.subr.mxu0 0.0
      %2454 = vmatpush1.msra.mxu0 0.0
      %2455 = vmatprep.subr.mxu0 0.0
      %2456 = vmatpush1.msra.mxu0 0.0
      %2457 = vmatprep.subr.mxu0 0.0
      %2458 = vmatpush1.msra.mxu0 0.0
      %2459 = vmatprep.subr.mxu0 0.0
      %2460 = vmatpush1.msra.mxu0 0.0
      %2461 = vmatprep.subr.mxu0 0.0
      %2462 = vmatpush1.msra.mxu0 0.0
      %2463 = vmatprep.subr.mxu0 0.0
      %2464 = vmatpush1.msra.mxu0 0.0
      %2465 = vmatprep.subr.mxu0 0.0
      %2466 = vmatpush1.msra.mxu0 0.0
      %2467 = vmatprep.subr.mxu0 0.0
      %2468 = vmatpush1.msra.mxu0 0.0
      %2469 = vmatprep.subr.mxu0 0.0
      %2470 = vmatpush1.msra.mxu0 0.0
      %2471 = vmatprep.subr.mxu0 0.0
      %2472 = vmatpush1.msra.mxu0 0.0
      %2473 = vmatprep.subr.mxu0 0.0
      %2474 = vmatpush1.msra.mxu0 0.0
      %2475 = vmatprep.subr.mxu0 0.0
      %2476 = vmatpush1.msra.mxu0 0.0
      %2477 = vmatprep.subr.mxu0 0.0
      %2478 = vmatpush1.msra.mxu0 0.0
      %2479 = vmatprep.subr.mxu0 0.0
      %2480 = vmatpush1.msra.mxu0 0.0
      %2481 = vmatprep.subr.mxu0 0.0
      %2482 = vmatpush1.msra.mxu0 0.0
      %2483 = vmatprep.subr.mxu0 0.0
      %2484 = vmatpush1.msra.mxu0 0.0
      %2485 = vmatprep.subr.mxu0 0.0
      %2486 = vmatpush1.msra.mxu0 0.0
      %2487 = vmatprep.subr.mxu0 0.0
      %2488 = vmatpush1.msra.mxu0 0.0
      %2489 = vmatprep.subr.mxu0 0.0
      %2490 = vmatpush1.msra.mxu0 0.0
      %2491 = vmatprep.subr.mxu0 0.0
      %2492 = vmatpush1.msra.mxu0 0.0
      %2493 = vmatprep.subr.mxu0 0.0
      %2494 = vmatpush1.msra.mxu0 0.0
      %2495 = vmatprep.subr.mxu0 0.0
      %2496 = vmatpush1.msra.mxu0 0.0
      %2497 = vmatprep.mubr.f32.mxu0 0.0
      %2498 = vmatmul.mubr.f32.gmra.mrb[0].mxu0 %v2431
      %v2499 = vpop.f32.mrb[0].mxu0
      %v2500 = vadd.f32 %v2428, %v2499
      %v2501 = vpop.f32.mrb[0].mxu0
      %2502 = vdwg.mxu0
      %v2503 = vmax.f32 %v2500, 0.0
      %s2504 = scalar_lea.vmem %s6, 64
      %v2505 = vld [vmem:[%s2504] sm:$0xff]
      %v2506 = vld [vmem:[%s2504 + $0x8] sm:$0xff]
      %v2507 = vld [vmem:[%s2504 + $0x10] sm:$0xff]
      %v2508 = vld [vmem:[%s2504 + $0x18] sm:$0xff]
      %v2509 = vld [vmem:[%s2504 + $0x20] sm:$0xff]
      %v2510 = vld [vmem:[%s2504 + $0x28] sm:$0xff]
      %v2511 = vld [vmem:[%s2504 + $0x30] sm:$0xff]
      %v2512 = vld [vmem:[%s2504 + $0x38] sm:$0xff]
      %v2513 = vlaneseq
      %v2514 = vshrl.u32 %v2513, 7
      %v2515 = vsub.s32 4, %v2514
      %v2516 = vrot.slane %v1524, %v2515
      %v2518 = vsel %vm1425, %v2503, 0
      %2520 = vmatprep.subr.mxu0 0.0
      %2521 = vmatpush1.msra.mxu0 %v2505
      %2522 = vmatprep.subr.mxu0 0.0
      %2523 = vmatpush1.msra.mxu0 %v2506
      %2524 = vmatprep.subr.mxu0 0.0
      %2525 = vmatpush1.msra.mxu0 %v2507
      %2526 = vmatprep.subr.mxu0 0.0
      %2527 = vmatpush1.msra.mxu0 %v2508
      %2528 = vmatprep.subr.mxu0 0.0
      %2529 = vmatpush1.msra.mxu0 %v2509
      %2530 = vmatprep.subr.mxu0 0.0
      %2531 = vmatpush1.msra.mxu0 %v2510
      %2532 = vmatprep.subr.mxu0 0.0
      %2533 = vmatpush1.msra.mxu0 %v2511
      %2534 = vmatprep.subr.mxu0 0.0
      %2535 = vmatpush1.msra.mxu0 %v2512
      %2536 = vmatprep.subr.mxu0 0.0
      %2537 = vmatpush1.msra.mxu0 0.0
      %2538 = vmatprep.subr.mxu0 0.0
      %2539 = vmatpush1.msra.mxu0 0.0
      %2540 = vmatprep.subr.mxu0 0.0
      %2541 = vmatpush1.msra.mxu0 0.0
      %2542 = vmatprep.subr.mxu0 0.0
      %2543 = vmatpush1.msra.mxu0 0.0
      %2544 = vmatprep.subr.mxu0 0.0
      %2545 = vmatpush1.msra.mxu0 0.0
      %2546 = vmatprep.subr.mxu0 0.0
      %2547 = vmatpush1.msra.mxu0 0.0
      %2548 = vmatprep.subr.mxu0 0.0
      %2549 = vmatpush1.msra.mxu0 0.0
      %2550 = vmatprep.subr.mxu0 0.0
      %2551 = vmatpush1.msra.mxu0 0.0
      %2552 = vmatprep.subr.mxu0 0.0
      %2553 = vmatpush1.msra.mxu0 0.0
      %2554 = vmatprep.subr.mxu0 0.0
      %2555 = vmatpush1.msra.mxu0 0.0
      %2556 = vmatprep.subr.mxu0 0.0
      %2557 = vmatpush1.msra.mxu0 0.0
      %2558 = vmatprep.subr.mxu0 0.0
      %2559 = vmatpush1.msra.mxu0 0.0
      %2560 = vmatprep.subr.mxu0 0.0
      %2561 = vmatpush1.msra.mxu0 0.0
      %2562 = vmatprep.subr.mxu0 0.0
      %2563 = vmatpush1.msra.mxu0 0.0
      %2564 = vmatprep.subr.mxu0 0.0
      %2565 = vmatpush1.msra.mxu0 0.0
      %2566 = vmatprep.subr.mxu0 0.0
      %2567 = vmatpush1.msra.mxu0 0.0
      %2568 = vmatprep.subr.mxu0 0.0
      %2569 = vmatpush1.msra.mxu0 0.0
      %2570 = vmatprep.subr.mxu0 0.0
      %2571 = vmatpush1.msra.mxu0 0.0
      %2572 = vmatprep.subr.mxu0 0.0
      %2573 = vmatpush1.msra.mxu0 0.0
      %2574 = vmatprep.subr.mxu0 0.0
      %2575 = vmatpush1.msra.mxu0 0.0
      %2576 = vmatprep.subr.mxu0 0.0
      %2577 = vmatpush1.msra.mxu0 0.0
      %2578 = vmatprep.subr.mxu0 0.0
      %2579 = vmatpush1.msra.mxu0 0.0
      %2580 = vmatprep.subr.mxu0 0.0
      %2581 = vmatpush1.msra.mxu0 0.0
      %2582 = vmatprep.subr.mxu0 0.0
      %2583 = vmatpush1.msra.mxu0 0.0
      %2584 = vmatprep.mubr.f32.mxu0 0.0
      %2585 = vmatmul.mubr.f32.gmra.mrb[0].mxu0 %v2518
      %v2586 = vpop.f32.mrb[0].mxu0
      %v2587 = vadd.f32 %v2516, %v2586
      %v2588 = vpop.f32.mrb[0].mxu0
      %2589 = vdwg.mxu0
      %v2590 = vadd.f32 %v2418, %v2587
      %v2591 = vsel %vm1304, %v2590, 0.0
      %2592 = vadd.xlane.f32.xlu0 %v2591
      %v2593 = vpop.xlane.xlu0 %2592
      %v2594 = vmul.f32 %v2593, %v1308
      %v2595 = vsub.f32 %v2590, %v2594
      %v2596 = vmul.f32 %v2595, %v2595
      %v2597 = vsel %vm1304, %v2596, 0.0
      %2598 = vadd.xlane.f32.xlu0 %v2597
      %v2599 = vpop.xlane.xlu0 %2598
      %v2600 = vmul.f32 %v2599, %v1308
      %v2601 = vadd.f32 %v2600, 1e-05
      %v2602 = vrsqrt.pop %v2601
      %v2603 = vmul.f32 %v2595, %v2602
      %v2604 = vlaneseq
      %v2605 = vshrl.u32 %v2604, 7
      %v2606 = vsub.s32 7, %v2605
      %v2607 = vrot.slane %v1524, %v2606
      %v2608 = vmul.f32 %v2603, %v2607
      %v2609 = vlaneseq
      %v2610 = vshrl.u32 %v2609, 7
      %v2611 = vsub.s32 0, %v2610
      %v2612 = vrot.slane %v1525, %v2611
      %v2613 = vadd.f32 %v2608, %v2612
      %2614 = vst.msk [vmem:[%s327] sm:$0x3] %vm1304, %v2613
      %p2615 = scmp.lt.s32.totalorder %s20, 7
      %s2616 = scalar_select %p2615, %s20, 7
      %s2617 = smul.addr %s2616, 2
      %s2618 = scalar_lea.vmem %s9, %s2617
      // Predicated region
      $region57: #{pose_encoder_forward.1} parent=55 // pred_check
        %p2619 = pneg %p232
      $region58: #{pose_encoder_forward.1} parent=55 // pred_check_branch
        %2621 = sbr.rel (%p2619) target = $region60
      $region59: #{pose_encoder_forward.1} parent=55 // pred_region
        _
      $region60: #{pose_encoder_forward.1} parent=55 // pred_fallthru
        _
    $region56: #{pose_encoder_forward.1} parent=5 // pred_fallthru
      _
    %p2622 = scmp.le.s32.totalorder 2, %s15
    // Predicated region
    $region61: #{pose_encoder_forward.1} parent=5 // pred_check
      %p2623 = pneg %p2622
    $region62: #{pose_encoder_forward.1} parent=5 // pred_check_branch
      %2625 = sbr.rel (%p2623) target = $region64
    $region63: #{pose_encoder_forward.1} parent=5 // pred_region
      %s2626 = ssub.s32 %s15, 2
      // Predicated region
      $region65: #{pose_encoder_forward.1} parent=63 // pred_check
        %p2627 = pneg %p238
      $region66: #{pose_encoder_forward.1} parent=63 // pred_check_branch
        %2629 = sbr.rel (%p2627) target = $region68
      $region67: #{pose_encoder_forward.1} parent=63 // pred_region
        %p2630 = scmp.lt.s32.totalorder %s21, 7
        %s2631 = scalar_select %p2630, %s21, 7
        %s2632 = smul.addr %s2631, 2
        %s2633 = scalar_lea.vmem %s9, %s2632
      $region68: #{pose_encoder_forward.1} parent=63 // pred_fallthru
        _
    $region64: #{pose_encoder_forward.1} parent=5 // pred_fallthru
      _
  $region6: #{pose_encoder_forward.1} parent=0 // loop_footer
    %s19 = sadd.s32 1, %s15
  $region7: #{pose_encoder_forward.1} parent=0 // loop_footer_branch
    %14 = sbr.rel target = $region3
  $region8: #{pose_encoder_forward.1} parent=0 // loop_exit
    _

</llo_original>
